<compile_context>
chip_gen: v5e
topology: v5e:2x2
jax: 0.10.0
libtpu: 0.0.40
codegen_flags: <defaults>
</compile_context>

<pallas_src>
import jax
import jax.numpy as jnp
from jax.experimental import pallas as pl
from jax.experimental.pallas import tpu as pltpu

D_MODEL = 512 + 128          # 640, module default
NEG_SLOPE = 0.01             # nn.LeakyReLU default
OUT_LANES = 128              # lane-dense packed output width
ACTION_DIM = 3
GRIPER_DIM = 2


def _round_up(x, m):
    return (x + m - 1) // m * m


def _leaky_relu(h):
    return jnp.where(h > 0, h, NEG_SLOPE * h)


def _predict_kernel(
    x_ref,                                                   # (tile_b, D) bf16
    w1_ref, b1_ref,                                          # fused layer 1 (both heads)
    w2a_ref, b2a_ref, w3a_ref, b3a_ref, w4a_ref, b4a_ref,    # action tail
    w2g_ref, b2g_ref, w3g_ref, b3g_ref, w4g_ref, b4g_ref,    # griper tail
    out_ref,                                                 # (tile_b, 128) f32
):
    d = w2a_ref.shape[0]                                     # D_MODEL (static)
    x = x_ref[...]

    # Fused first layer of both heads: one wide MXU pass, N = 2*D = 1280.
    h1 = jnp.dot(x, w1_ref[...], preferred_element_type=jnp.float32) + b1_ref[...]
    h1 = _leaky_relu(h1).astype(jnp.bfloat16)    # f32 epilogue, single cast
    h1a = h1[:, :d]                              # lane-tile-aligned slices (640 % 128 == 0)
    h1g = h1[:, d:]

    def tail(h, w2, b2, w3, b3, w4, b4):
        h = jnp.dot(h, w2[...], preferred_element_type=jnp.float32) + b2[...]
        h = _leaky_relu(h).astype(jnp.bfloat16)
        h = jnp.dot(h, w3[...], preferred_element_type=jnp.float32) + b3[...]
        h = _leaky_relu(h).astype(jnp.bfloat16)
        # Final Linear; weights/biases pre-padded to 128 output lanes.
        # Dropout(p=0.0) is the identity -> no-op.
        return jnp.dot(h, w4[...], preferred_element_type=jnp.float32) + b4[...]

    out_a = tail(h1a, w2a_ref, b2a_ref, w3a_ref, b3a_ref, w4a_ref, b4a_ref)
    out_g = tail(h1g, w2g_ref, b2g_ref, w3g_ref, b3g_ref, w4g_ref, b4g_ref)
    # Disjoint lanes (action 0:3, griper 3:5, zeros elsewhere) -> just add.
    out_ref[...] = out_a + out_g


def _pack_params(params, w_dtype=jnp.bfloat16):
    """Cast weights to bf16, fuse layer 1 across heads, pad the final layers to
    a 128-lane-dense output (action -> lanes 0:3, griper -> lanes 3:5)."""
    f32 = jnp.float32

    def w(name):
        return params[name].astype(w_dtype)

    def b(name):
        return params[name].astype(f32)

    w1 = jnp.concatenate([params["w1a"], params["w1g"]], axis=1).astype(w_dtype)
    b1 = jnp.concatenate([params["b1a"], params["b1g"]], axis=1).astype(f32)

    def pad_final(wname, bname, lane_start):
        wf = params[wname].astype(f32)
        bf = params[bname].astype(f32)
        k, n = wf.shape
        wp = jnp.zeros((k, OUT_LANES), f32).at[:, lane_start:lane_start + n].set(wf)
        bp = jnp.zeros((1, OUT_LANES), f32).at[:, lane_start:lane_start + n].set(bf)
        return wp.astype(w_dtype), bp

    w4a, b4a = pad_final("w4a", "b4a", 0)
    w4g, b4g = pad_final("w4g", "b4g", ACTION_DIM)

    return [
        w1, b1,
        w("w2a"), b("b2a"), w("w3a"), b("b3a"), w4a, b4a,
        w("w2g"), b("b2g"), w("w3g"), b("b3g"), w4g, b4g,
    ]


def predict_forward(x, params, *, tile_b=256):
    """x: (B, D) float. params: dict of weights (in,out) and biases (1,out).

    Returns (action (B, 3), griper (B, 2)) in float32.

    tile_b: batch tile.  256 fills the v6e/v7x MXU; sweep 128 on v5e.  On v7x
    prefer tile_b <= B/2 so the "parallel" batch axis has >= 2 grid steps and
    both TensorCores get work.
    """
    B, D = x.shape
    assert D == D_MODEL, f"expected feature dim {D_MODEL}, got {D}"

    tile_b = max(8, _round_up(int(tile_b), 8))
    tile_b = min(tile_b, _round_up(B, 8))          # don't over-pad small batches
    B_pad = _round_up(B, tile_b)

    x = x.astype(jnp.bfloat16)
    if B_pad != B:
        x = jnp.pad(x, ((0, B_pad - B), (0, 0)))

    packed = _pack_params(params)

    x_spec = pl.BlockSpec((tile_b, D), lambda i: (i, 0))
    # Params are replicated (constant block index) -> fetched once by the pipeline.
    param_specs = [pl.BlockSpec(p.shape, lambda i: (0, 0)) for p in packed]
    out_spec = pl.BlockSpec((tile_b, OUT_LANES), lambda i: (i, 0))

    grid_spec = pltpu.PrefetchScalarGridSpec(
        num_scalar_prefetch=0,
        grid=(B_pad // tile_b,),
        in_specs=[x_spec] + param_specs,
        out_specs=out_spec,
    )

    out = pl.pallas_call(
        _predict_kernel,
        out_shape=jax.ShapeDtypeStruct((B_pad, OUT_LANES), jnp.float32),
        grid_spec=grid_spec,
        compiler_params=pltpu.CompilerParams(
            dimension_semantics=("parallel",),
            vmem_limit_bytes=48 * 1024 * 1024,
        ),
    )(x, *packed)

    action = out[:B, :ACTION_DIM]
    griper = out[:B, ACTION_DIM:ACTION_DIM + GRIPER_DIM]
    return action, griper


def init_params(key, d_model=D_MODEL):
    """Deterministic synthetic parameters (Kaiming-uniform-ish like nn.Linear)."""
    dims = [(d_model, d_model),
            (d_model, d_model // 2),
            (d_model // 2, d_model // 4)]
    heads = {"a": 3, "g": 2}
    params = {}
    for suffix, out_last in heads.items():
        layer_dims = dims + [(d_model // 4, out_last)]
        for li, (din, dout) in enumerate(layer_dims, start=1):
            key, kw, kb = jax.random.split(key, 3)
            bound = 1.0 / (din ** 0.5)
            params[f"w{li}{suffix}"] = jax.random.uniform(
                kw, (din, dout), jnp.float32, minval=-bound, maxval=bound)
            params[f"b{li}{suffix}"] = jax.random.uniform(
                kb, (1, dout), jnp.float32, minval=-bound, maxval=bound)
    return params


def reference_forward(x, params, *, mimic_bf16=False):
    """Pure-JAX reference.  mimic_bf16=True reproduces the kernel's numerics
    (bf16 matmul inputs, f32 accumulation / epilogue) for a tight check."""
    wdt = jnp.bfloat16 if mimic_bf16 else jnp.float32

    def head(suffix):
        h = x.astype(wdt)
        for li in range(1, 5):
            w = params[f"w{li}{suffix}"].astype(wdt)
            b = params[f"b{li}{suffix}"].astype(jnp.float32)
            h = jnp.dot(h, w, preferred_element_type=jnp.float32) + b
            if li < 4:
                h = jnp.where(h > 0, h, NEG_SLOPE * h).astype(wdt)
        return h

    return head("a"), head("g")


if __name__ == "__main__":
    key = jax.random.PRNGKey(0)
    key, kx = jax.random.split(key)

    B = 8  # small test batch
    x = jax.random.normal(kx, (B, D_MODEL), jnp.float32)
    params = init_params(key)

    action, griper = predict_forward(x, params, tile_b=256)
    action = jax.block_until_ready(action)
    griper = jax.block_until_ready(griper)

    assert action.shape == (B, ACTION_DIM) and griper.shape == (B, GRIPER_DIM)

    # Tight check vs a reference mirroring the kernel's bf16/f32 dataflow.
    ref_a16, ref_g16 = reference_forward(x, params, mimic_bf16=True)
    assert jnp.allclose(action, ref_a16, atol=2e-3, rtol=2e-3)
    assert jnp.allclose(griper, ref_g16, atol=2e-3, rtol=2e-3)

    # Loose check vs the full-f32 (PyTorch-parity) reference: only bf16
    # weight/activation rounding should separate them.
    ref_a32, ref_g32 = reference_forward(x, params)
    assert jnp.allclose(action, ref_a32, atol=5e-2, rtol=5e-2)
    assert jnp.allclose(griper, ref_g32, atol=5e-2, rtol=5e-2)

    print("KERNEL_OK")
</pallas_src>

<mosaic_0001>
module attributes {stable_mosaic.version = 11 : i64} {
  func.func @_predict_kernel(%arg0: i32, %arg1: memref<8x640xbf16, #tpu.memory_space<vmem>>, %arg2: memref<640x1280xbf16, #tpu.memory_space<vmem>>, %arg3: memref<1x1280xf32, #tpu.memory_space<vmem>>, %arg4: memref<640x320xbf16, #tpu.memory_space<vmem>>, %arg5: memref<1x320xf32, #tpu.memory_space<vmem>>, %arg6: memref<320x160xbf16, #tpu.memory_space<vmem>>, %arg7: memref<1x160xf32, #tpu.memory_space<vmem>>, %arg8: memref<160x128xbf16, #tpu.memory_space<vmem>>, %arg9: memref<1x128xf32, #tpu.memory_space<vmem>>, %arg10: memref<640x320xbf16, #tpu.memory_space<vmem>>, %arg11: memref<1x320xf32, #tpu.memory_space<vmem>>, %arg12: memref<320x160xbf16, #tpu.memory_space<vmem>>, %arg13: memref<1x160xf32, #tpu.memory_space<vmem>>, %arg14: memref<160x128xbf16, #tpu.memory_space<vmem>>, %arg15: memref<1x128xf32, #tpu.memory_space<vmem>>, %arg16: memref<8x128xf32, #tpu.memory_space<vmem>>) attributes {dimension_semantics = [#tpu.dimension_semantics<parallel>], iteration_bounds = array<i64: 1>, scalar_prefetch = 0 : i64, scratch_operands = 0 : i64, tpu.core_type = #tpu.core_type<tc>, window_params = [{transform_indices = @transform_0, window_bounds = array<i64: 8, 640>}, {pipeline_mode = #tpu.pipeline_mode<synchronous>, transform_indices = @transform_1, window_bounds = array<i64: 640, 1280>}, {pipeline_mode = #tpu.pipeline_mode<synchronous>, transform_indices = @transform_2, window_bounds = array<i64: 1, 1280>}, {pipeline_mode = #tpu.pipeline_mode<synchronous>, transform_indices = @transform_3, window_bounds = array<i64: 640, 320>}, {pipeline_mode = #tpu.pipeline_mode<synchronous>, transform_indices = @transform_4, window_bounds = array<i64: 1, 320>}, {pipeline_mode = #tpu.pipeline_mode<synchronous>, transform_indices = @transform_5, window_bounds = array<i64: 320, 160>}, {pipeline_mode = #tpu.pipeline_mode<synchronous>, transform_indices = @transform_6, window_bounds = array<i64: 1, 160>}, {pipeline_mode = #tpu.pipeline_mode<synchronous>, transform_indices = @transform_7, window_bounds = array<i64: 160, 128>}, {pipeline_mode = #tpu.pipeline_mode<synchronous>, transform_indices = @transform_8, window_bounds = array<i64: 1, 128>}, {pipeline_mode = #tpu.pipeline_mode<synchronous>, transform_indices = @transform_9, window_bounds = array<i64: 640, 320>}, {pipeline_mode = #tpu.pipeline_mode<synchronous>, transform_indices = @transform_10, window_bounds = array<i64: 1, 320>}, {pipeline_mode = #tpu.pipeline_mode<synchronous>, transform_indices = @transform_11, window_bounds = array<i64: 320, 160>}, {pipeline_mode = #tpu.pipeline_mode<synchronous>, transform_indices = @transform_12, window_bounds = array<i64: 1, 160>}, {pipeline_mode = #tpu.pipeline_mode<synchronous>, transform_indices = @transform_13, window_bounds = array<i64: 160, 128>}, {pipeline_mode = #tpu.pipeline_mode<synchronous>, transform_indices = @transform_14, window_bounds = array<i64: 1, 128>}, {transform_indices = @transform_15, window_bounds = array<i64: 8, 128>}]} {
    %c0 = arith.constant 0 : index
    %c0_0 = arith.constant 0 : index
    %0 = vector.load %arg1[%c0, %c0_0] : memref<8x640xbf16, #tpu.memory_space<vmem>>, vector<8x640xbf16>
    %c0_1 = arith.constant 0 : index
    %c0_2 = arith.constant 0 : index
    %1 = vector.load %arg2[%c0_1, %c0_2] : memref<640x1280xbf16, #tpu.memory_space<vmem>>, vector<640x1280xbf16>
    %cst = arith.constant dense<0.000000e+00> : vector<8x1280xf32>
    %2 = tpu.matmul %0, %1, %cst {dimension_numbers = #tpu.dot_dimension_numbers<[1], [0], [0], [1], [0, 0, 1, 1], [], []>} : vector<8x640xbf16>, vector<640x1280xbf16>, vector<8x1280xf32> -> vector<8x1280xf32>
    %c0_3 = arith.constant 0 : index
    %c0_4 = arith.constant 0 : index
    %3 = vector.load %arg3[%c0_3, %c0_4] : memref<1x1280xf32, #tpu.memory_space<vmem>>, vector<1x1280xf32>
    %4 = vector.broadcast %3 : vector<1x1280xf32> to vector<8x1280xf32>
    %5 = arith.addf %2, %4 : vector<8x1280xf32>
    %cst_5 = arith.constant 0.000000e+00 : f32
    %6 = vector.broadcast %cst_5 : f32 to vector<8x1280xf32>
    %7 = arith.cmpf ogt, %5, %6 : vector<8x1280xf32>
    %cst_6 = arith.constant 0.00999999977 : f32
    %8 = vector.broadcast %cst_6 : f32 to vector<8x1280xf32>
    %9 = arith.mulf %8, %5 : vector<8x1280xf32>
    %10 = arith.select %7, %5, %9 : vector<8x1280xi1>, vector<8x1280xf32>
    %11 = arith.truncf %10 : vector<8x1280xf32> to vector<8x1280xbf16>
    %12 = vector.extract_strided_slice %11 {offsets = [0, 0], sizes = [8, 640], strides = [1, 1]} : vector<8x1280xbf16> to vector<8x640xbf16>
    %13 = vector.extract_strided_slice %11 {offsets = [0, 640], sizes = [8, 640], strides = [1, 1]} : vector<8x1280xbf16> to vector<8x640xbf16>
    %c0_7 = arith.constant 0 : index
    %c0_8 = arith.constant 0 : index
    %14 = vector.load %arg4[%c0_7, %c0_8] : memref<640x320xbf16, #tpu.memory_space<vmem>>, vector<640x320xbf16>
    %cst_9 = arith.constant dense<0.000000e+00> : vector<8x320xf32>
    %15 = tpu.matmul %12, %14, %cst_9 {dimension_numbers = #tpu.dot_dimension_numbers<[1], [0], [0], [1], [0, 0, 1, 1], [], []>} : vector<8x640xbf16>, vector<640x320xbf16>, vector<8x320xf32> -> vector<8x320xf32>
    %c0_10 = arith.constant 0 : index
    %c0_11 = arith.constant 0 : index
    %16 = vector.load %arg5[%c0_10, %c0_11] : memref<1x320xf32, #tpu.memory_space<vmem>>, vector<1x320xf32>
    %17 = vector.broadcast %16 : vector<1x320xf32> to vector<8x320xf32>
    %18 = arith.addf %15, %17 : vector<8x320xf32>
    %cst_12 = arith.constant 0.000000e+00 : f32
    %19 = vector.broadcast %cst_12 : f32 to vector<8x320xf32>
    %20 = arith.cmpf ogt, %18, %19 : vector<8x320xf32>
    %cst_13 = arith.constant 0.00999999977 : f32
    %21 = vector.broadcast %cst_13 : f32 to vector<8x320xf32>
    %22 = arith.mulf %21, %18 : vector<8x320xf32>
    %23 = arith.select %20, %18, %22 : vector<8x320xi1>, vector<8x320xf32>
    %24 = arith.truncf %23 : vector<8x320xf32> to vector<8x320xbf16>
    %c0_14 = arith.constant 0 : index
    %c0_15 = arith.constant 0 : index
    %25 = vector.load %arg6[%c0_14, %c0_15] : memref<320x160xbf16, #tpu.memory_space<vmem>>, vector<320x160xbf16>
    %cst_16 = arith.constant dense<0.000000e+00> : vector<8x160xf32>
    %26 = tpu.matmul %24, %25, %cst_16 {dimension_numbers = #tpu.dot_dimension_numbers<[1], [0], [0], [1], [0, 0, 1, 1], [], []>} : vector<8x320xbf16>, vector<320x160xbf16>, vector<8x160xf32> -> vector<8x160xf32>
    %c0_17 = arith.constant 0 : index
    %c0_18 = arith.constant 0 : index
    %27 = vector.load %arg7[%c0_17, %c0_18] : memref<1x160xf32, #tpu.memory_space<vmem>>, vector<1x160xf32>
    %28 = vector.broadcast %27 : vector<1x160xf32> to vector<8x160xf32>
    %29 = arith.addf %26, %28 : vector<8x160xf32>
    %cst_19 = arith.constant 0.000000e+00 : f32
    %30 = vector.broadcast %cst_19 : f32 to vector<8x160xf32>
    %31 = arith.cmpf ogt, %29, %30 : vector<8x160xf32>
    %cst_20 = arith.constant 0.00999999977 : f32
    %32 = vector.broadcast %cst_20 : f32 to vector<8x160xf32>
    %33 = arith.mulf %32, %29 : vector<8x160xf32>
    %34 = arith.select %31, %29, %33 : vector<8x160xi1>, vector<8x160xf32>
    %35 = arith.truncf %34 : vector<8x160xf32> to vector<8x160xbf16>
    %c0_21 = arith.constant 0 : index
    %c0_22 = arith.constant 0 : index
    %36 = vector.load %arg8[%c0_21, %c0_22] : memref<160x128xbf16, #tpu.memory_space<vmem>>, vector<160x128xbf16>
    %cst_23 = arith.constant dense<0.000000e+00> : vector<8x128xf32>
    %37 = tpu.matmul %35, %36, %cst_23 {dimension_numbers = #tpu.dot_dimension_numbers<[1], [0], [0], [1], [0, 0, 1, 1], [], []>} : vector<8x160xbf16>, vector<160x128xbf16>, vector<8x128xf32> -> vector<8x128xf32>
    %c0_24 = arith.constant 0 : index
    %c0_25 = arith.constant 0 : index
    %38 = vector.load %arg9[%c0_24, %c0_25] : memref<1x128xf32, #tpu.memory_space<vmem>>, vector<1x128xf32>
    %39 = vector.broadcast %38 : vector<1x128xf32> to vector<8x128xf32>
    %40 = arith.addf %37, %39 : vector<8x128xf32>
    %c0_26 = arith.constant 0 : index
    %c0_27 = arith.constant 0 : index
    %41 = vector.load %arg10[%c0_26, %c0_27] : memref<640x320xbf16, #tpu.memory_space<vmem>>, vector<640x320xbf16>
    %cst_28 = arith.constant dense<0.000000e+00> : vector<8x320xf32>
    %42 = tpu.matmul %13, %41, %cst_28 {dimension_numbers = #tpu.dot_dimension_numbers<[1], [0], [0], [1], [0, 0, 1, 1], [], []>} : vector<8x640xbf16>, vector<640x320xbf16>, vector<8x320xf32> -> vector<8x320xf32>
    %c0_29 = arith.constant 0 : index
    %c0_30 = arith.constant 0 : index
    %43 = vector.load %arg11[%c0_29, %c0_30] : memref<1x320xf32, #tpu.memory_space<vmem>>, vector<1x320xf32>
    %44 = vector.broadcast %43 : vector<1x320xf32> to vector<8x320xf32>
    %45 = arith.addf %42, %44 : vector<8x320xf32>
    %cst_31 = arith.constant 0.000000e+00 : f32
    %46 = vector.broadcast %cst_31 : f32 to vector<8x320xf32>
    %47 = arith.cmpf ogt, %45, %46 : vector<8x320xf32>
    %cst_32 = arith.constant 0.00999999977 : f32
    %48 = vector.broadcast %cst_32 : f32 to vector<8x320xf32>
    %49 = arith.mulf %48, %45 : vector<8x320xf32>
    %50 = arith.select %47, %45, %49 : vector<8x320xi1>, vector<8x320xf32>
    %51 = arith.truncf %50 : vector<8x320xf32> to vector<8x320xbf16>
    %c0_33 = arith.constant 0 : index
    %c0_34 = arith.constant 0 : index
    %52 = vector.load %arg12[%c0_33, %c0_34] : memref<320x160xbf16, #tpu.memory_space<vmem>>, vector<320x160xbf16>
    %cst_35 = arith.constant dense<0.000000e+00> : vector<8x160xf32>
    %53 = tpu.matmul %51, %52, %cst_35 {dimension_numbers = #tpu.dot_dimension_numbers<[1], [0], [0], [1], [0, 0, 1, 1], [], []>} : vector<8x320xbf16>, vector<320x160xbf16>, vector<8x160xf32> -> vector<8x160xf32>
    %c0_36 = arith.constant 0 : index
    %c0_37 = arith.constant 0 : index
    %54 = vector.load %arg13[%c0_36, %c0_37] : memref<1x160xf32, #tpu.memory_space<vmem>>, vector<1x160xf32>
    %55 = vector.broadcast %54 : vector<1x160xf32> to vector<8x160xf32>
    %56 = arith.addf %53, %55 : vector<8x160xf32>
    %cst_38 = arith.constant 0.000000e+00 : f32
    %57 = vector.broadcast %cst_38 : f32 to vector<8x160xf32>
    %58 = arith.cmpf ogt, %56, %57 : vector<8x160xf32>
    %cst_39 = arith.constant 0.00999999977 : f32
    %59 = vector.broadcast %cst_39 : f32 to vector<8x160xf32>
    %60 = arith.mulf %59, %56 : vector<8x160xf32>
    %61 = arith.select %58, %56, %60 : vector<8x160xi1>, vector<8x160xf32>
    %62 = arith.truncf %61 : vector<8x160xf32> to vector<8x160xbf16>
    %c0_40 = arith.constant 0 : index
    %c0_41 = arith.constant 0 : index
    %63 = vector.load %arg14[%c0_40, %c0_41] : memref<160x128xbf16, #tpu.memory_space<vmem>>, vector<160x128xbf16>
    %cst_42 = arith.constant dense<0.000000e+00> : vector<8x128xf32>
    %64 = tpu.matmul %62, %63, %cst_42 {dimension_numbers = #tpu.dot_dimension_numbers<[1], [0], [0], [1], [0, 0, 1, 1], [], []>} : vector<8x160xbf16>, vector<160x128xbf16>, vector<8x128xf32> -> vector<8x128xf32>
    %c0_43 = arith.constant 0 : index
    %c0_44 = arith.constant 0 : index
    %65 = vector.load %arg15[%c0_43, %c0_44] : memref<1x128xf32, #tpu.memory_space<vmem>>, vector<1x128xf32>
    %66 = vector.broadcast %65 : vector<1x128xf32> to vector<8x128xf32>
    %67 = arith.addf %64, %66 : vector<8x128xf32>
    %68 = arith.addf %40, %67 : vector<8x128xf32>
    %c0_45 = arith.constant 0 : index
    %c0_46 = arith.constant 0 : index
    %69 = vector.load %arg16[%c0_45, %c0_46] : memref<8x128xf32, #tpu.memory_space<vmem>>, vector<8x128xf32>
    tpu.vector_store %arg16[%c0_45, %c0_46], %68 {strides = array<i32>} : memref<8x128xf32, #tpu.memory_space<vmem>>, vector<8x128xf32>,
    return
  }
  func.func @transform_0(%arg0: i32) -> (i32, i32) {
    %c0_i32 = arith.constant 0 : i32
    %c0_i32_0 = arith.constant 0 : i32
    return %arg0, %c0_i32 : i32, i32
  }
  func.func @transform_1(%arg0: i32) -> (i32, i32) {
    %c0_i32 = arith.constant 0 : i32
    %c0_i32_0 = arith.constant 0 : i32
    %c0_i32_1 = arith.constant 0 : i32
    return %c0_i32, %c0_i32_0 : i32, i32
  }
  func.func @transform_2(%arg0: i32) -> (i32, i32) {
    %c0_i32 = arith.constant 0 : i32
    %c0_i32_0 = arith.constant 0 : i32
    %c0_i32_1 = arith.constant 0 : i32
    return %c0_i32, %c0_i32_0 : i32, i32
  }
  func.func @transform_3(%arg0: i32) -> (i32, i32) {
    %c0_i32 = arith.constant 0 : i32
    %c0_i32_0 = arith.constant 0 : i32
    %c0_i32_1 = arith.constant 0 : i32
    return %c0_i32, %c0_i32_0 : i32, i32
  }
  func.func @transform_4(%arg0: i32) -> (i32, i32) {
    %c0_i32 = arith.constant 0 : i32
    %c0_i32_0 = arith.constant 0 : i32
    %c0_i32_1 = arith.constant 0 : i32
    return %c0_i32, %c0_i32_0 : i32, i32
  }
  func.func @transform_5(%arg0: i32) -> (i32, i32) {
    %c0_i32 = arith.constant 0 : i32
    %c0_i32_0 = arith.constant 0 : i32
    %c0_i32_1 = arith.constant 0 : i32
    return %c0_i32, %c0_i32_0 : i32, i32
  }
  func.func @transform_6(%arg0: i32) -> (i32, i32) {
    %c0_i32 = arith.constant 0 : i32
    %c0_i32_0 = arith.constant 0 : i32
    %c0_i32_1 = arith.constant 0 : i32
    return %c0_i32, %c0_i32_0 : i32, i32
  }
  func.func @transform_7(%arg0: i32) -> (i32, i32) {
    %c0_i32 = arith.constant 0 : i32
    %c0_i32_0 = arith.constant 0 : i32
    %c0_i32_1 = arith.constant 0 : i32
    return %c0_i32, %c0_i32_0 : i32, i32
  }
  func.func @transform_8(%arg0: i32) -> (i32, i32) {
    %c0_i32 = arith.constant 0 : i32
    %c0_i32_0 = arith.constant 0 : i32
    %c0_i32_1 = arith.constant 0 : i32
    return %c0_i32, %c0_i32_0 : i32, i32
  }
  func.func @transform_9(%arg0: i32) -> (i32, i32) {
    %c0_i32 = arith.constant 0 : i32
    %c0_i32_0 = arith.constant 0 : i32
    %c0_i32_1 = arith.constant 0 : i32
    return %c0_i32, %c0_i32_0 : i32, i32
  }
  func.func @transform_10(%arg0: i32) -> (i32, i32) {
    %c0_i32 = arith.constant 0 : i32
    %c0_i32_0 = arith.constant 0 : i32
    %c0_i32_1 = arith.constant 0 : i32
    return %c0_i32, %c0_i32_0 : i32, i32
  }
  func.func @transform_11(%arg0: i32) -> (i32, i32) {
    %c0_i32 = arith.constant 0 : i32
    %c0_i32_0 = arith.constant 0 : i32
    %c0_i32_1 = arith.constant 0 : i32
    return %c0_i32, %c0_i32_0 : i32, i32
  }
  func.func @transform_12(%arg0: i32) -> (i32, i32) {
    %c0_i32 = arith.constant 0 : i32
    %c0_i32_0 = arith.constant 0 : i32
    %c0_i32_1 = arith.constant 0 : i32
    return %c0_i32, %c0_i32_0 : i32, i32
  }
  func.func @transform_13(%arg0: i32) -> (i32, i32) {
    %c0_i32 = arith.constant 0 : i32
    %c0_i32_0 = arith.constant 0 : i32
    %c0_i32_1 = arith.constant 0 : i32
    return %c0_i32, %c0_i32_0 : i32, i32
  }
  func.func @transform_14(%arg0: i32) -> (i32, i32) {
    %c0_i32 = arith.constant 0 : i32
    %c0_i32_0 = arith.constant 0 : i32
    %c0_i32_1 = arith.constant 0 : i32
    return %c0_i32, %c0_i32_0 : i32, i32
  }
  func.func @transform_15(%arg0: i32) -> (i32, i32) {
    %c0_i32 = arith.constant 0 : i32
    %c0_i32_0 = arith.constant 0 : i32
    return %arg0, %c0_i32 : i32, i32
  }
}

</mosaic_0001>

<llo_original>
// kernel: tpu_custom_call.1
$region0: #{tpu_custom_call.1}
  #allocation0 [shape = 'u32[]', space=smem, size = 0x4, offset = 0x4, fixed_abs, tag = 'smem constant byte address 0x4 - core index']
  #allocation1 [shape = 'u32[72,128]{1,0:T(1,128)}', space=vmem, size = 0x9000, scoped, tag = 'internal scratch']
  %s0 = inlined_call_operand.vmem [shape: bf16[8,640], index: 0, kind: input, shape index: {}]
  %s1 = inlined_call_operand.vmem [shape: bf16[640,1280], index: 1, kind: input, shape index: {}]
  %s2 = inlined_call_operand.vmem [shape: f32[1,1280], index: 2, kind: input, shape index: {}]
  %s3 = inlined_call_operand.vmem [shape: bf16[640,320], index: 3, kind: input, shape index: {}]
  %s4 = inlined_call_operand.vmem [shape: f32[1,320], index: 4, kind: input, shape index: {}]
  %s5 = inlined_call_operand.vmem [shape: bf16[320,160], index: 5, kind: input, shape index: {}]
  %s6 = inlined_call_operand.vmem [shape: f32[1,160], index: 6, kind: input, shape index: {}]
  %s7 = inlined_call_operand.vmem [shape: bf16[160,128], index: 7, kind: input, shape index: {}]
  %s8 = inlined_call_operand.vmem [shape: f32[1,128], index: 8, kind: input, shape index: {}]
  %s9 = inlined_call_operand.vmem [shape: bf16[640,320], index: 9, kind: input, shape index: {}]
  %s10 = inlined_call_operand.vmem [shape: f32[1,320], index: 10, kind: input, shape index: {}]
  %s11 = inlined_call_operand.vmem [shape: bf16[320,160], index: 11, kind: input, shape index: {}]
  %s12 = inlined_call_operand.vmem [shape: f32[1,160], index: 12, kind: input, shape index: {}]
  %s13 = inlined_call_operand.vmem [shape: bf16[160,128], index: 13, kind: input, shape index: {}]
  %s14 = inlined_call_operand.vmem [shape: f32[1,128], index: 14, kind: input, shape index: {}]
  %s15 = inlined_call_operand.hbm [shape: f32[8,128], index: 15, kind: output, shape index: {}]
  %s16 = sld [smem:[#allocation0]]
  $region70: #{tpu_custom_call.1} parent=0
    _
  %s18 = ssub.s32 1, %s16
  %s19 = scalar_select 0, %s18, %s16
  $region1: #{tpu_custom_call.1} parent=0
    #allocation2 [shape = 'u8[4096]{0}', space=vmem, size = 0x1000, scoped, tag = 'output window, operand 0, single buffered']
    #allocation3 [shape = 's32[1]{0}', space=sflag, size = 0x4, scoped, tag = 'scoped memory for tpu_custom_call.1']
    %20 = vsyncpa [#allocation3], 0
    // Predicated region
    $region2: #{tpu_custom_call.1} parent=1 // pred_check
      _
    $region3: #{tpu_custom_call.1} parent=1 // pred_check_branch
      %22 = sbr.rel (0) target = $region5
    $region4: #{tpu_custom_call.1} parent=1 // pred_region
      _
    $region5: #{tpu_custom_call.1} parent=1 // pred_fallthru
      _
    // Predicated region
    $region6: #{tpu_custom_call.1} parent=1 // pred_check
      _
    $region7: #{tpu_custom_call.1} parent=1 // pred_check_branch
      %24 = sbr.rel (0) target = $region9
    $region8: #{tpu_custom_call.1} parent=1 // pred_region
      _
    $region9: #{tpu_custom_call.1} parent=1 // pred_fallthru
      _
    // Predicated region
    $region10: #{tpu_custom_call.1} parent=1 // pred_check
      _
    $region11: #{tpu_custom_call.1} parent=1 // pred_check_branch
      %26 = sbr.rel (0) target = $region13
    $region12: #{tpu_custom_call.1} parent=1 // pred_region
      _
    $region13: #{tpu_custom_call.1} parent=1 // pred_fallthru
      _
    // Predicated region
    $region14: #{tpu_custom_call.1} parent=1 // pred_check
      _
    $region15: #{tpu_custom_call.1} parent=1 // pred_check_branch
      %28 = sbr.rel (0) target = $region17
    $region16: #{tpu_custom_call.1} parent=1 // pred_region
      _
    $region17: #{tpu_custom_call.1} parent=1 // pred_fallthru
      _
    // Predicated region
    $region18: #{tpu_custom_call.1} parent=1 // pred_check
      _
    $region19: #{tpu_custom_call.1} parent=1 // pred_check_branch
      %30 = sbr.rel (0) target = $region21
    $region20: #{tpu_custom_call.1} parent=1 // pred_region
      _
    $region21: #{tpu_custom_call.1} parent=1 // pred_fallthru
      _
    // Predicated region
    $region22: #{tpu_custom_call.1} parent=1 // pred_check
      _
    $region23: #{tpu_custom_call.1} parent=1 // pred_check_branch
      %32 = sbr.rel (0) target = $region25
    $region24: #{tpu_custom_call.1} parent=1 // pred_region
      _
    $region25: #{tpu_custom_call.1} parent=1 // pred_fallthru
      _
    // Predicated region
    $region26: #{tpu_custom_call.1} parent=1 // pred_check
      _
    $region27: #{tpu_custom_call.1} parent=1 // pred_check_branch
      %34 = sbr.rel (0) target = $region29
    $region28: #{tpu_custom_call.1} parent=1 // pred_region
      _
    $region29: #{tpu_custom_call.1} parent=1 // pred_fallthru
      _
    // Predicated region
    $region30: #{tpu_custom_call.1} parent=1 // pred_check
      _
    $region31: #{tpu_custom_call.1} parent=1 // pred_check_branch
      %36 = sbr.rel (0) target = $region33
    $region32: #{tpu_custom_call.1} parent=1 // pred_region
      _
    $region33: #{tpu_custom_call.1} parent=1 // pred_fallthru
      _
    // Predicated region
    $region34: #{tpu_custom_call.1} parent=1 // pred_check
      _
    $region35: #{tpu_custom_call.1} parent=1 // pred_check_branch
      %38 = sbr.rel (0) target = $region37
    $region36: #{tpu_custom_call.1} parent=1 // pred_region
      _
    $region37: #{tpu_custom_call.1} parent=1 // pred_fallthru
      _
    // Predicated region
    $region38: #{tpu_custom_call.1} parent=1 // pred_check
      _
    $region39: #{tpu_custom_call.1} parent=1 // pred_check_branch
      %40 = sbr.rel (0) target = $region41
    $region40: #{tpu_custom_call.1} parent=1 // pred_region
      _
    $region41: #{tpu_custom_call.1} parent=1 // pred_fallthru
      _
    // Predicated region
    $region42: #{tpu_custom_call.1} parent=1 // pred_check
      _
    $region43: #{tpu_custom_call.1} parent=1 // pred_check_branch
      %42 = sbr.rel (0) target = $region45
    $region44: #{tpu_custom_call.1} parent=1 // pred_region
      _
    $region45: #{tpu_custom_call.1} parent=1 // pred_fallthru
      _
    // Predicated region
    $region46: #{tpu_custom_call.1} parent=1 // pred_check
      _
    $region47: #{tpu_custom_call.1} parent=1 // pred_check_branch
      %44 = sbr.rel (0) target = $region49
    $region48: #{tpu_custom_call.1} parent=1 // pred_region
      _
    $region49: #{tpu_custom_call.1} parent=1 // pred_fallthru
      _
    // Predicated region
    $region50: #{tpu_custom_call.1} parent=1 // pred_check
      _
    $region51: #{tpu_custom_call.1} parent=1 // pred_check_branch
      %46 = sbr.rel (0) target = $region53
    $region52: #{tpu_custom_call.1} parent=1 // pred_region
      _
    $region53: #{tpu_custom_call.1} parent=1 // pred_fallthru
      _
    // Predicated region
    $region54: #{tpu_custom_call.1} parent=1 // pred_check
      _
    $region55: #{tpu_custom_call.1} parent=1 // pred_check_branch
      %48 = sbr.rel (0) target = $region57
    $region56: #{tpu_custom_call.1} parent=1 // pred_region
      _
    $region57: #{tpu_custom_call.1} parent=1 // pred_fallthru
      _
    // Predicated region
    $region58: #{tpu_custom_call.1} parent=1 // pred_check
      _
    $region59: #{tpu_custom_call.1} parent=1 // pred_check_branch
      %50 = sbr.rel (0) target = $region61
    $region60: #{tpu_custom_call.1} parent=1 // pred_region
      _
    $region61: #{tpu_custom_call.1} parent=1 // pred_fallthru
      _
    %v52 = vld [vmem:[%s0] sm:$0xff]
    %v53 = vld [vmem:[%s0 + $0x8] sm:$0xff]
    %v54 = vld [vmem:[%s0 + $0x10] sm:$0xf]
    %v55 = vld [vmem:[%s1] sm:$0xff]
    %v56 = vld [vmem:[%s1 + $0x8] sm:$0xff]
    %v57 = vld [vmem:[%s1 + $0x10] sm:$0xff]
    %v58 = vld [vmem:[%s1 + $0x18] sm:$0xff]
    %v59 = vld [vmem:[%s1 + $0x20] sm:$0xff]
    %v60 = vld [vmem:[%s1 + $0x28] sm:$0xff]
    %v61 = vld [vmem:[%s1 + $0x30] sm:$0xff]
    %v62 = vld [vmem:[%s1 + $0x38] sm:$0xff]
    %v63 = vld [vmem:[%s1 + $0x40] sm:$0xff]
    %v64 = vld [vmem:[%s1 + $0x48] sm:$0xff]
    %v65 = vld [vmem:[%s1 + $0x50] sm:$0xff]
    %v66 = vld [vmem:[%s1 + $0x58] sm:$0xff]
    %v67 = vld [vmem:[%s1 + $0x60] sm:$0xff]
    %v68 = vld [vmem:[%s1 + $0x68] sm:$0xff]
    %v69 = vld [vmem:[%s1 + $0x70] sm:$0xff]
    %v70 = vld [vmem:[%s1 + $0x78] sm:$0xff]
    %v71 = vld [vmem:[%s1 + $0x80] sm:$0xff]
    %v72 = vld [vmem:[%s1 + $0x88] sm:$0xff]
    %v73 = vld [vmem:[%s1 + $0x90] sm:$0xff]
    %v74 = vld [vmem:[%s1 + $0x98] sm:$0xff]
    %v75 = vld [vmem:[%s1 + $0xa0] sm:$0xff]
    %v76 = vld [vmem:[%s1 + $0xa8] sm:$0xff]
    %v77 = vld [vmem:[%s1 + $0xb0] sm:$0xff]
    %v78 = vld [vmem:[%s1 + $0xb8] sm:$0xff]
    %v79 = vld [vmem:[%s1 + $0xc0] sm:$0xff]
    %v80 = vld [vmem:[%s1 + $0xc8] sm:$0xff]
    %v81 = vld [vmem:[%s1 + $0xd0] sm:$0xff]
    %v82 = vld [vmem:[%s1 + $0xd8] sm:$0xff]
    %v83 = vld [vmem:[%s1 + $0xe0] sm:$0xff]
    %v84 = vld [vmem:[%s1 + $0xe8] sm:$0xff]
    %v85 = vld [vmem:[%s1 + $0xf0] sm:$0xff]
    %v86 = vld [vmem:[%s1 + $0xf8] sm:$0xff]
    %v87 = vld [vmem:[%s1 + $0x100] sm:$0xff]
    %v88 = vld [vmem:[%s1 + $0x108] sm:$0xff]
    %v89 = vld [vmem:[%s1 + $0x110] sm:$0xff]
    %v90 = vld [vmem:[%s1 + $0x118] sm:$0xff]
    %v91 = vld [vmem:[%s1 + $0x120] sm:$0xff]
    %v92 = vld [vmem:[%s1 + $0x128] sm:$0xff]
    %v93 = vld [vmem:[%s1 + $0x130] sm:$0xff]
    %v94 = vld [vmem:[%s1 + $0x138] sm:$0xff]
    %v95 = vld [vmem:[%s1 + $0x140] sm:$0xff]
    %v96 = vld [vmem:[%s1 + $0x148] sm:$0xff]
    %v97 = vld [vmem:[%s1 + $0x150] sm:$0xff]
    %v98 = vld [vmem:[%s1 + $0x158] sm:$0xff]
    %v99 = vld [vmem:[%s1 + $0x160] sm:$0xff]
    %v100 = vld [vmem:[%s1 + $0x168] sm:$0xff]
    %v101 = vld [vmem:[%s1 + $0x170] sm:$0xff]
    %v102 = vld [vmem:[%s1 + $0x178] sm:$0xff]
    %v103 = vld [vmem:[%s1 + $0x180] sm:$0xff]
    %v104 = vld [vmem:[%s1 + $0x188] sm:$0xff]
    %v105 = vld [vmem:[%s1 + $0x190] sm:$0xff]
    %v106 = vld [vmem:[%s1 + $0x198] sm:$0xff]
    %v107 = vld [vmem:[%s1 + $0x1a0] sm:$0xff]
    %v108 = vld [vmem:[%s1 + $0x1a8] sm:$0xff]
    %v109 = vld [vmem:[%s1 + $0x1b0] sm:$0xff]
    %v110 = vld [vmem:[%s1 + $0x1b8] sm:$0xff]
    %v111 = vld [vmem:[%s1 + $0x1c0] sm:$0xff]
    %v112 = vld [vmem:[%s1 + $0x1c8] sm:$0xff]
    %v113 = vld [vmem:[%s1 + $0x1d0] sm:$0xff]
    %v114 = vld [vmem:[%s1 + $0x1d8] sm:$0xff]
    %v115 = vld [vmem:[%s1 + $0x1e0] sm:$0xff]
    %v116 = vld [vmem:[%s1 + $0x1e8] sm:$0xff]
    %v117 = vld [vmem:[%s1 + $0x1f0] sm:$0xff]
    %v118 = vld [vmem:[%s1 + $0x1f8] sm:$0xff]
    %v119 = vld [vmem:[%s1 + $0x200] sm:$0xff]
    %v120 = vld [vmem:[%s1 + $0x208] sm:$0xff]
    %v121 = vld [vmem:[%s1 + $0x210] sm:$0xff]
    %v122 = vld [vmem:[%s1 + $0x218] sm:$0xff]
    %v123 = vld [vmem:[%s1 + $0x220] sm:$0xff]
    %v124 = vld [vmem:[%s1 + $0x228] sm:$0xff]
    %v125 = vld [vmem:[%s1 + $0x230] sm:$0xff]
    %v126 = vld [vmem:[%s1 + $0x238] sm:$0xff]
    %v127 = vld [vmem:[%s1 + $0x240] sm:$0xff]
    %v128 = vld [vmem:[%s1 + $0x248] sm:$0xff]
    %v129 = vld [vmem:[%s1 + $0x250] sm:$0xff]
    %v130 = vld [vmem:[%s1 + $0x258] sm:$0xff]
    %v131 = vld [vmem:[%s1 + $0x260] sm:$0xff]
    %v132 = vld [vmem:[%s1 + $0x268] sm:$0xff]
    %v133 = vld [vmem:[%s1 + $0x270] sm:$0xff]
    %v134 = vld [vmem:[%s1 + $0x278] sm:$0xff]
    %v135 = vld [vmem:[%s1 + $0x280] sm:$0xff]
    %v136 = vld [vmem:[%s1 + $0x288] sm:$0xff]
    %v137 = vld [vmem:[%s1 + $0x290] sm:$0xff]
    %v138 = vld [vmem:[%s1 + $0x298] sm:$0xff]
    %v139 = vld [vmem:[%s1 + $0x2a0] sm:$0xff]
    %v140 = vld [vmem:[%s1 + $0x2a8] sm:$0xff]
    %v141 = vld [vmem:[%s1 + $0x2b0] sm:$0xff]
    %v142 = vld [vmem:[%s1 + $0x2b8] sm:$0xff]
    %v143 = vld [vmem:[%s1 + $0x2c0] sm:$0xff]
    %v144 = vld [vmem:[%s1 + $0x2c8] sm:$0xff]
    %v145 = vld [vmem:[%s1 + $0x2d0] sm:$0xff]
    %v146 = vld [vmem:[%s1 + $0x2d8] sm:$0xff]
    %v147 = vld [vmem:[%s1 + $0x2e0] sm:$0xff]
    %v148 = vld [vmem:[%s1 + $0x2e8] sm:$0xff]
    %v149 = vld [vmem:[%s1 + $0x2f0] sm:$0xff]
    %v150 = vld [vmem:[%s1 + $0x2f8] sm:$0xff]
    %v151 = vld [vmem:[%s1 + $0x300] sm:$0xff]
    %v152 = vld [vmem:[%s1 + $0x308] sm:$0xff]
    %v153 = vld [vmem:[%s1 + $0x310] sm:$0xff]
    %v154 = vld [vmem:[%s1 + $0x318] sm:$0xff]
    %v155 = vld [vmem:[%s1 + $0x320] sm:$0xff]
    %v156 = vld [vmem:[%s1 + $0x328] sm:$0xff]
    %v157 = vld [vmem:[%s1 + $0x330] sm:$0xff]
    %v158 = vld [vmem:[%s1 + $0x338] sm:$0xff]
    %v159 = vld [vmem:[%s1 + $0x340] sm:$0xff]
    %v160 = vld [vmem:[%s1 + $0x348] sm:$0xff]
    %v161 = vld [vmem:[%s1 + $0x350] sm:$0xff]
    %v162 = vld [vmem:[%s1 + $0x358] sm:$0xff]
    %v163 = vld [vmem:[%s1 + $0x360] sm:$0xff]
    %v164 = vld [vmem:[%s1 + $0x368] sm:$0xff]
    %v165 = vld [vmem:[%s1 + $0x370] sm:$0xff]
    %v166 = vld [vmem:[%s1 + $0x378] sm:$0xff]
    %v167 = vld [vmem:[%s1 + $0x380] sm:$0xff]
    %v168 = vld [vmem:[%s1 + $0x388] sm:$0xff]
    %v169 = vld [vmem:[%s1 + $0x390] sm:$0xff]
    %v170 = vld [vmem:[%s1 + $0x398] sm:$0xff]
    %v171 = vld [vmem:[%s1 + $0x3a0] sm:$0xff]
    %v172 = vld [vmem:[%s1 + $0x3a8] sm:$0xff]
    %v173 = vld [vmem:[%s1 + $0x3b0] sm:$0xff]
    %v174 = vld [vmem:[%s1 + $0x3b8] sm:$0xff]
    %v175 = vld [vmem:[%s1 + $0x3c0] sm:$0xff]
    %v176 = vld [vmem:[%s1 + $0x3c8] sm:$0xff]
    %v177 = vld [vmem:[%s1 + $0x3d0] sm:$0xff]
    %v178 = vld [vmem:[%s1 + $0x3d8] sm:$0xff]
    %v179 = vld [vmem:[%s1 + $0x3e0] sm:$0xff]
    %v180 = vld [vmem:[%s1 + $0x3e8] sm:$0xff]
    %v181 = vld [vmem:[%s1 + $0x3f0] sm:$0xff]
    %v182 = vld [vmem:[%s1 + $0x3f8] sm:$0xff]
    %v183 = vld [vmem:[%s1 + $0x400] sm:$0xff]
    %v184 = vld [vmem:[%s1 + $0x408] sm:$0xff]
    %v185 = vld [vmem:[%s1 + $0x410] sm:$0xff]
    %v186 = vld [vmem:[%s1 + $0x418] sm:$0xff]
    %v187 = vld [vmem:[%s1 + $0x420] sm:$0xff]
    %v188 = vld [vmem:[%s1 + $0x428] sm:$0xff]
    %v189 = vld [vmem:[%s1 + $0x430] sm:$0xff]
    %v190 = vld [vmem:[%s1 + $0x438] sm:$0xff]
    %v191 = vld [vmem:[%s1 + $0x440] sm:$0xff]
    %v192 = vld [vmem:[%s1 + $0x448] sm:$0xff]
    %v193 = vld [vmem:[%s1 + $0x450] sm:$0xff]
    %v194 = vld [vmem:[%s1 + $0x458] sm:$0xff]
    %v195 = vld [vmem:[%s1 + $0x460] sm:$0xff]
    %v196 = vld [vmem:[%s1 + $0x468] sm:$0xff]
    %v197 = vld [vmem:[%s1 + $0x470] sm:$0xff]
    %v198 = vld [vmem:[%s1 + $0x478] sm:$0xff]
    %v199 = vld [vmem:[%s1 + $0x480] sm:$0xff]
    %v200 = vld [vmem:[%s1 + $0x488] sm:$0xff]
    %v201 = vld [vmem:[%s1 + $0x490] sm:$0xff]
    %v202 = vld [vmem:[%s1 + $0x498] sm:$0xff]
    %v203 = vld [vmem:[%s1 + $0x4a0] sm:$0xff]
    %v204 = vld [vmem:[%s1 + $0x4a8] sm:$0xff]
    %v205 = vld [vmem:[%s1 + $0x4b0] sm:$0xff]
    %v206 = vld [vmem:[%s1 + $0x4b8] sm:$0xff]
    %v207 = vld [vmem:[%s1 + $0x4c0] sm:$0xff]
    %v208 = vld [vmem:[%s1 + $0x4c8] sm:$0xff]
    %v209 = vld [vmem:[%s1 + $0x4d0] sm:$0xff]
    %v210 = vld [vmem:[%s1 + $0x4d8] sm:$0xff]
    %v211 = vld [vmem:[%s1 + $0x4e0] sm:$0xff]
    %v212 = vld [vmem:[%s1 + $0x4e8] sm:$0xff]
    %v213 = vld [vmem:[%s1 + $0x4f0] sm:$0xff]
    %v214 = vld [vmem:[%s1 + $0x4f8] sm:$0xff]
    %v215 = vld [vmem:[%s1 + $0x500] sm:$0xff]
    %v216 = vld [vmem:[%s1 + $0x508] sm:$0xff]
    %v217 = vld [vmem:[%s1 + $0x510] sm:$0xff]
    %v218 = vld [vmem:[%s1 + $0x518] sm:$0xff]
    %v219 = vld [vmem:[%s1 + $0x520] sm:$0xff]
    %v220 = vld [vmem:[%s1 + $0x528] sm:$0xff]
    %v221 = vld [vmem:[%s1 + $0x530] sm:$0xff]
    %v222 = vld [vmem:[%s1 + $0x538] sm:$0xff]
    %v223 = vld [vmem:[%s1 + $0x540] sm:$0xff]
    %v224 = vld [vmem:[%s1 + $0x548] sm:$0xff]
    %v225 = vld [vmem:[%s1 + $0x550] sm:$0xff]
    %v226 = vld [vmem:[%s1 + $0x558] sm:$0xff]
    %v227 = vld [vmem:[%s1 + $0x560] sm:$0xff]
    %v228 = vld [vmem:[%s1 + $0x568] sm:$0xff]
    %v229 = vld [vmem:[%s1 + $0x570] sm:$0xff]
    %v230 = vld [vmem:[%s1 + $0x578] sm:$0xff]
    %v231 = vld [vmem:[%s1 + $0x580] sm:$0xff]
    %v232 = vld [vmem:[%s1 + $0x588] sm:$0xff]
    %v233 = vld [vmem:[%s1 + $0x590] sm:$0xff]
    %v234 = vld [vmem:[%s1 + $0x598] sm:$0xff]
    %v235 = vld [vmem:[%s1 + $0x5a0] sm:$0xff]
    %v236 = vld [vmem:[%s1 + $0x5a8] sm:$0xff]
    %v237 = vld [vmem:[%s1 + $0x5b0] sm:$0xff]
    %v238 = vld [vmem:[%s1 + $0x5b8] sm:$0xff]
    %v239 = vld [vmem:[%s1 + $0x5c0] sm:$0xff]
    %v240 = vld [vmem:[%s1 + $0x5c8] sm:$0xff]
    %v241 = vld [vmem:[%s1 + $0x5d0] sm:$0xff]
    %v242 = vld [vmem:[%s1 + $0x5d8] sm:$0xff]
    %v243 = vld [vmem:[%s1 + $0x5e0] sm:$0xff]
    %v244 = vld [vmem:[%s1 + $0x5e8] sm:$0xff]
    %v245 = vld [vmem:[%s1 + $0x5f0] sm:$0xff]
    %v246 = vld [vmem:[%s1 + $0x5f8] sm:$0xff]
    %v247 = vld [vmem:[%s1 + $0x600] sm:$0xff]
    %v248 = vld [vmem:[%s1 + $0x608] sm:$0xff]
    %v249 = vld [vmem:[%s1 + $0x610] sm:$0xff]
    %v250 = vld [vmem:[%s1 + $0x618] sm:$0xff]
    %v251 = vld [vmem:[%s1 + $0x620] sm:$0xff]
    %v252 = vld [vmem:[%s1 + $0x628] sm:$0xff]
    %v253 = vld [vmem:[%s1 + $0x630] sm:$0xff]
    %v254 = vld [vmem:[%s1 + $0x638] sm:$0xff]
    %v255 = vld [vmem:[%s1 + $0x640] sm:$0xff]
    %v256 = vld [vmem:[%s1 + $0x648] sm:$0xff]
    %v257 = vld [vmem:[%s1 + $0x650] sm:$0xff]
    %v258 = vld [vmem:[%s1 + $0x658] sm:$0xff]
    %v259 = vld [vmem:[%s1 + $0x660] sm:$0xff]
    %v260 = vld [vmem:[%s1 + $0x668] sm:$0xff]
    %v261 = vld [vmem:[%s1 + $0x670] sm:$0xff]
    %v262 = vld [vmem:[%s1 + $0x678] sm:$0xff]
    %v263 = vld [vmem:[%s1 + $0x680] sm:$0xff]
    %v264 = vld [vmem:[%s1 + $0x688] sm:$0xff]
    %v265 = vld [vmem:[%s1 + $0x690] sm:$0xff]
    %v266 = vld [vmem:[%s1 + $0x698] sm:$0xff]
    %v267 = vld [vmem:[%s1 + $0x6a0] sm:$0xff]
    %v268 = vld [vmem:[%s1 + $0x6a8] sm:$0xff]
    %v269 = vld [vmem:[%s1 + $0x6b0] sm:$0xff]
    %v270 = vld [vmem:[%s1 + $0x6b8] sm:$0xff]
    %v271 = vld [vmem:[%s1 + $0x6c0] sm:$0xff]
    %v272 = vld [vmem:[%s1 + $0x6c8] sm:$0xff]
    %v273 = vld [vmem:[%s1 + $0x6d0] sm:$0xff]
    %v274 = vld [vmem:[%s1 + $0x6d8] sm:$0xff]
    %v275 = vld [vmem:[%s1 + $0x6e0] sm:$0xff]
    %v276 = vld [vmem:[%s1 + $0x6e8] sm:$0xff]
    %v277 = vld [vmem:[%s1 + $0x6f0] sm:$0xff]
    %v278 = vld [vmem:[%s1 + $0x6f8] sm:$0xff]
    %v279 = vld [vmem:[%s1 + $0x700] sm:$0xff]
    %v280 = vld [vmem:[%s1 + $0x708] sm:$0xff]
    %v281 = vld [vmem:[%s1 + $0x710] sm:$0xff]
    %v282 = vld [vmem:[%s1 + $0x718] sm:$0xff]
    %v283 = vld [vmem:[%s1 + $0x720] sm:$0xff]
    %v284 = vld [vmem:[%s1 + $0x728] sm:$0xff]
    %v285 = vld [vmem:[%s1 + $0x730] sm:$0xff]
    %v286 = vld [vmem:[%s1 + $0x738] sm:$0xff]
    %v287 = vld [vmem:[%s1 + $0x740] sm:$0xff]
    %v288 = vld [vmem:[%s1 + $0x748] sm:$0xff]
    %v289 = vld [vmem:[%s1 + $0x750] sm:$0xff]
    %v290 = vld [vmem:[%s1 + $0x758] sm:$0xff]
    %v291 = vld [vmem:[%s1 + $0x760] sm:$0xff]
    %v292 = vld [vmem:[%s1 + $0x768] sm:$0xff]
    %v293 = vld [vmem:[%s1 + $0x770] sm:$0xff]
    %v294 = vld [vmem:[%s1 + $0x778] sm:$0xff]
    %v295 = vld [vmem:[%s1 + $0x780] sm:$0xff]
    %v296 = vld [vmem:[%s1 + $0x788] sm:$0xff]
    %v297 = vld [vmem:[%s1 + $0x790] sm:$0xff]
    %v298 = vld [vmem:[%s1 + $0x798] sm:$0xff]
    %v299 = vld [vmem:[%s1 + $0x7a0] sm:$0xff]
    %v300 = vld [vmem:[%s1 + $0x7a8] sm:$0xff]
    %v301 = vld [vmem:[%s1 + $0x7b0] sm:$0xff]
    %v302 = vld [vmem:[%s1 + $0x7b8] sm:$0xff]
    %v303 = vld [vmem:[%s1 + $0x7c0] sm:$0xff]
    %v304 = vld [vmem:[%s1 + $0x7c8] sm:$0xff]
    %v305 = vld [vmem:[%s1 + $0x7d0] sm:$0xff]
    %v306 = vld [vmem:[%s1 + $0x7d8] sm:$0xff]
    %v307 = vld [vmem:[%s1 + $0x7e0] sm:$0xff]
    %v308 = vld [vmem:[%s1 + $0x7e8] sm:$0xff]
    %v309 = vld [vmem:[%s1 + $0x7f0] sm:$0xff]
    %v310 = vld [vmem:[%s1 + $0x7f8] sm:$0xff]
    %v311 = vld [vmem:[%s1 + $0x800] sm:$0xff]
    %v312 = vld [vmem:[%s1 + $0x808] sm:$0xff]
    %v313 = vld [vmem:[%s1 + $0x810] sm:$0xff]
    %v314 = vld [vmem:[%s1 + $0x818] sm:$0xff]
    %v315 = vld [vmem:[%s1 + $0x820] sm:$0xff]
    %v316 = vld [vmem:[%s1 + $0x828] sm:$0xff]
    %v317 = vld [vmem:[%s1 + $0x830] sm:$0xff]
    %v318 = vld [vmem:[%s1 + $0x838] sm:$0xff]
    %v319 = vld [vmem:[%s1 + $0x840] sm:$0xff]
    %v320 = vld [vmem:[%s1 + $0x848] sm:$0xff]
    %v321 = vld [vmem:[%s1 + $0x850] sm:$0xff]
    %v322 = vld [vmem:[%s1 + $0x858] sm:$0xff]
    %v323 = vld [vmem:[%s1 + $0x860] sm:$0xff]
    %v324 = vld [vmem:[%s1 + $0x868] sm:$0xff]
    %v325 = vld [vmem:[%s1 + $0x870] sm:$0xff]
    %v326 = vld [vmem:[%s1 + $0x878] sm:$0xff]
    %v327 = vld [vmem:[%s1 + $0x880] sm:$0xff]
    %v328 = vld [vmem:[%s1 + $0x888] sm:$0xff]
    %v329 = vld [vmem:[%s1 + $0x890] sm:$0xff]
    %v330 = vld [vmem:[%s1 + $0x898] sm:$0xff]
    %v331 = vld [vmem:[%s1 + $0x8a0] sm:$0xff]
    %v332 = vld [vmem:[%s1 + $0x8a8] sm:$0xff]
    %v333 = vld [vmem:[%s1 + $0x8b0] sm:$0xff]
    %v334 = vld [vmem:[%s1 + $0x8b8] sm:$0xff]
    %v335 = vld [vmem:[%s1 + $0x8c0] sm:$0xff]
    %v336 = vld [vmem:[%s1 + $0x8c8] sm:$0xff]
    %v337 = vld [vmem:[%s1 + $0x8d0] sm:$0xff]
    %v338 = vld [vmem:[%s1 + $0x8d8] sm:$0xff]
    %v339 = vld [vmem:[%s1 + $0x8e0] sm:$0xff]
    %v340 = vld [vmem:[%s1 + $0x8e8] sm:$0xff]
    %v341 = vld [vmem:[%s1 + $0x8f0] sm:$0xff]
    %v342 = vld [vmem:[%s1 + $0x8f8] sm:$0xff]
    %v343 = vld [vmem:[%s1 + $0x900] sm:$0xff]
    %v344 = vld [vmem:[%s1 + $0x908] sm:$0xff]
    %v345 = vld [vmem:[%s1 + $0x910] sm:$0xff]
    %v346 = vld [vmem:[%s1 + $0x918] sm:$0xff]
    %v347 = vld [vmem:[%s1 + $0x920] sm:$0xff]
    %v348 = vld [vmem:[%s1 + $0x928] sm:$0xff]
    %v349 = vld [vmem:[%s1 + $0x930] sm:$0xff]
    %v350 = vld [vmem:[%s1 + $0x938] sm:$0xff]
    %v351 = vld [vmem:[%s1 + $0x940] sm:$0xff]
    %v352 = vld [vmem:[%s1 + $0x948] sm:$0xff]
    %v353 = vld [vmem:[%s1 + $0x950] sm:$0xff]
    %v354 = vld [vmem:[%s1 + $0x958] sm:$0xff]
    %v355 = vld [vmem:[%s1 + $0x960] sm:$0xff]
    %v356 = vld [vmem:[%s1 + $0x968] sm:$0xff]
    %v357 = vld [vmem:[%s1 + $0x970] sm:$0xff]
    %v358 = vld [vmem:[%s1 + $0x978] sm:$0xff]
    %v359 = vld [vmem:[%s1 + $0x980] sm:$0xff]
    %v360 = vld [vmem:[%s1 + $0x988] sm:$0xff]
    %v361 = vld [vmem:[%s1 + $0x990] sm:$0xff]
    %v362 = vld [vmem:[%s1 + $0x998] sm:$0xff]
    %v363 = vld [vmem:[%s1 + $0x9a0] sm:$0xff]
    %v364 = vld [vmem:[%s1 + $0x9a8] sm:$0xff]
    %v365 = vld [vmem:[%s1 + $0x9b0] sm:$0xff]
    %v366 = vld [vmem:[%s1 + $0x9b8] sm:$0xff]
    %v367 = vld [vmem:[%s1 + $0x9c0] sm:$0xff]
    %v368 = vld [vmem:[%s1 + $0x9c8] sm:$0xff]
    %v369 = vld [vmem:[%s1 + $0x9d0] sm:$0xff]
    %v370 = vld [vmem:[%s1 + $0x9d8] sm:$0xff]
    %v371 = vld [vmem:[%s1 + $0x9e0] sm:$0xff]
    %v372 = vld [vmem:[%s1 + $0x9e8] sm:$0xff]
    %v373 = vld [vmem:[%s1 + $0x9f0] sm:$0xff]
    %v374 = vld [vmem:[%s1 + $0x9f8] sm:$0xff]
    %v375 = vld [vmem:[%s1 + $0xa00] sm:$0xff]
    %v376 = vld [vmem:[%s1 + $0xa08] sm:$0xff]
    %v377 = vld [vmem:[%s1 + $0xa10] sm:$0xff]
    %v378 = vld [vmem:[%s1 + $0xa18] sm:$0xff]
    %v379 = vld [vmem:[%s1 + $0xa20] sm:$0xff]
    %v380 = vld [vmem:[%s1 + $0xa28] sm:$0xff]
    %v381 = vld [vmem:[%s1 + $0xa30] sm:$0xff]
    %v382 = vld [vmem:[%s1 + $0xa38] sm:$0xff]
    %v383 = vld [vmem:[%s1 + $0xa40] sm:$0xff]
    %v384 = vld [vmem:[%s1 + $0xa48] sm:$0xff]
    %v385 = vld [vmem:[%s1 + $0xa50] sm:$0xff]
    %v386 = vld [vmem:[%s1 + $0xa58] sm:$0xff]
    %v387 = vld [vmem:[%s1 + $0xa60] sm:$0xff]
    %v388 = vld [vmem:[%s1 + $0xa68] sm:$0xff]
    %v389 = vld [vmem:[%s1 + $0xa70] sm:$0xff]
    %v390 = vld [vmem:[%s1 + $0xa78] sm:$0xff]
    %v391 = vld [vmem:[%s1 + $0xa80] sm:$0xff]
    %v392 = vld [vmem:[%s1 + $0xa88] sm:$0xff]
    %v393 = vld [vmem:[%s1 + $0xa90] sm:$0xff]
    %v394 = vld [vmem:[%s1 + $0xa98] sm:$0xff]
    %v395 = vld [vmem:[%s1 + $0xaa0] sm:$0xff]
    %v396 = vld [vmem:[%s1 + $0xaa8] sm:$0xff]
    %v397 = vld [vmem:[%s1 + $0xab0] sm:$0xff]
    %v398 = vld [vmem:[%s1 + $0xab8] sm:$0xff]
    %v399 = vld [vmem:[%s1 + $0xac0] sm:$0xff]
    %v400 = vld [vmem:[%s1 + $0xac8] sm:$0xff]
    %v401 = vld [vmem:[%s1 + $0xad0] sm:$0xff]
    %v402 = vld [vmem:[%s1 + $0xad8] sm:$0xff]
    %v403 = vld [vmem:[%s1 + $0xae0] sm:$0xff]
    %v404 = vld [vmem:[%s1 + $0xae8] sm:$0xff]
    %v405 = vld [vmem:[%s1 + $0xaf0] sm:$0xff]
    %v406 = vld [vmem:[%s1 + $0xaf8] sm:$0xff]
    %v407 = vld [vmem:[%s1 + $0xb00] sm:$0xff]
    %v408 = vld [vmem:[%s1 + $0xb08] sm:$0xff]
    %v409 = vld [vmem:[%s1 + $0xb10] sm:$0xff]
    %v410 = vld [vmem:[%s1 + $0xb18] sm:$0xff]
    %v411 = vld [vmem:[%s1 + $0xb20] sm:$0xff]
    %v412 = vld [vmem:[%s1 + $0xb28] sm:$0xff]
    %v413 = vld [vmem:[%s1 + $0xb30] sm:$0xff]
    %v414 = vld [vmem:[%s1 + $0xb38] sm:$0xff]
    %v415 = vld [vmem:[%s1 + $0xb40] sm:$0xff]
    %v416 = vld [vmem:[%s1 + $0xb48] sm:$0xff]
    %v417 = vld [vmem:[%s1 + $0xb50] sm:$0xff]
    %v418 = vld [vmem:[%s1 + $0xb58] sm:$0xff]
    %v419 = vld [vmem:[%s1 + $0xb60] sm:$0xff]
    %v420 = vld [vmem:[%s1 + $0xb68] sm:$0xff]
    %v421 = vld [vmem:[%s1 + $0xb70] sm:$0xff]
    %v422 = vld [vmem:[%s1 + $0xb78] sm:$0xff]
    %v423 = vld [vmem:[%s1 + $0xb80] sm:$0xff]
    %v424 = vld [vmem:[%s1 + $0xb88] sm:$0xff]
    %v425 = vld [vmem:[%s1 + $0xb90] sm:$0xff]
    %v426 = vld [vmem:[%s1 + $0xb98] sm:$0xff]
    %v427 = vld [vmem:[%s1 + $0xba0] sm:$0xff]
    %v428 = vld [vmem:[%s1 + $0xba8] sm:$0xff]
    %v429 = vld [vmem:[%s1 + $0xbb0] sm:$0xff]
    %v430 = vld [vmem:[%s1 + $0xbb8] sm:$0xff]
    %v431 = vld [vmem:[%s1 + $0xbc0] sm:$0xff]
    %v432 = vld [vmem:[%s1 + $0xbc8] sm:$0xff]
    %v433 = vld [vmem:[%s1 + $0xbd0] sm:$0xff]
    %v434 = vld [vmem:[%s1 + $0xbd8] sm:$0xff]
    %v435 = vld [vmem:[%s1 + $0xbe0] sm:$0xff]
    %v436 = vld [vmem:[%s1 + $0xbe8] sm:$0xff]
    %v437 = vld [vmem:[%s1 + $0xbf0] sm:$0xff]
    %v438 = vld [vmem:[%s1 + $0xbf8] sm:$0xff]
    %v439 = vld [vmem:[%s1 + $0xc00] sm:$0xff]
    %v440 = vld [vmem:[%s1 + $0xc08] sm:$0xff]
    %v441 = vld [vmem:[%s1 + $0xc10] sm:$0xff]
    %v442 = vld [vmem:[%s1 + $0xc18] sm:$0xff]
    %v443 = vld [vmem:[%s1 + $0xc20] sm:$0xff]
    %v444 = vld [vmem:[%s1 + $0xc28] sm:$0xff]
    %v445 = vld [vmem:[%s1 + $0xc30] sm:$0xff]
    %v446 = vld [vmem:[%s1 + $0xc38] sm:$0xff]
    %v447 = vld [vmem:[%s1 + $0xc40] sm:$0xff]
    %v448 = vld [vmem:[%s1 + $0xc48] sm:$0xff]
    %v449 = vld [vmem:[%s1 + $0xc50] sm:$0xff]
    %v450 = vld [vmem:[%s1 + $0xc58] sm:$0xff]
    %v451 = vld [vmem:[%s1 + $0xc60] sm:$0xff]
    %v452 = vld [vmem:[%s1 + $0xc68] sm:$0xff]
    %v453 = vld [vmem:[%s1 + $0xc70] sm:$0xff]
    %v454 = vld [vmem:[%s1 + $0xc78] sm:$0xff]
    %v455 = vld [vmem:[%s2] sm:$0xff]
    %v456 = vld [vmem:[%s2 + $0x8] sm:$0x3]
    %v459 = vperm.slane %v455, 0
    %v460 = vperm.slane %v455, 1
    %v461 = vperm.slane %v455, 2
    %v462 = vperm.slane %v455, 3
    %v463 = vperm.slane %v455, 4
    %v464 = vperm.slane %v455, 5
    %v465 = vperm.slane %v455, 6
    %v466 = vperm.slane %v455, 7
    %v467 = vperm.slane %v456, 0
    %v468 = vperm.slane %v456, 1
    %v482 = vunpack.c.l.b16 %v52
    %v483 = vunpack.c.h.b16 %v52
    %v484 = vunpack.c.l.b16 %v53
    %v485 = vunpack.c.h.b16 %v53
    %v486 = vunpack.c.l.b16 %v54
    %v487 = vpack.c.b16 %v482, %v482
    %v488 = vpack.c.b16 %v483, %v483
    %v489 = vpack.c.b16 %v484, %v484
    %v490 = vpack.c.b16 %v485, %v485
    %v491 = vpack.c.b16 %v486, %v486
    %v897 = vunpack.c.l.b16 %v55
    %v898 = vunpack.c.h.b16 %v55
    %v899 = vunpack.c.l.b16 %v56
    %v900 = vunpack.c.h.b16 %v56
    %v901 = vunpack.c.l.b16 %v57
    %v902 = vunpack.c.h.b16 %v57
    %v903 = vunpack.c.l.b16 %v58
    %v904 = vunpack.c.h.b16 %v58
    %v905 = vunpack.c.l.b16 %v59
    %v906 = vunpack.c.h.b16 %v59
    %v907 = vunpack.c.l.b16 %v60
    %v908 = vunpack.c.h.b16 %v60
    %v909 = vunpack.c.l.b16 %v61
    %v910 = vunpack.c.h.b16 %v61
    %v911 = vunpack.c.l.b16 %v62
    %v912 = vunpack.c.h.b16 %v62
    %v913 = vunpack.c.l.b16 %v63
    %v914 = vunpack.c.h.b16 %v63
    %v915 = vunpack.c.l.b16 %v64
    %v916 = vunpack.c.h.b16 %v64
    %v917 = vunpack.c.l.b16 %v65
    %v918 = vunpack.c.h.b16 %v65
    %v919 = vunpack.c.l.b16 %v66
    %v920 = vunpack.c.h.b16 %v66
    %v921 = vunpack.c.l.b16 %v67
    %v922 = vunpack.c.h.b16 %v67
    %v923 = vunpack.c.l.b16 %v68
    %v924 = vunpack.c.h.b16 %v68
    %v925 = vunpack.c.l.b16 %v69
    %v926 = vunpack.c.h.b16 %v69
    %v927 = vunpack.c.l.b16 %v70
    %v928 = vunpack.c.h.b16 %v70
    %v929 = vunpack.c.l.b16 %v71
    %v930 = vunpack.c.h.b16 %v71
    %v931 = vunpack.c.l.b16 %v72
    %v932 = vunpack.c.h.b16 %v72
    %v933 = vunpack.c.l.b16 %v73
    %v934 = vunpack.c.h.b16 %v73
    %v935 = vunpack.c.l.b16 %v74
    %v936 = vunpack.c.h.b16 %v74
    %v937 = vunpack.c.l.b16 %v75
    %v938 = vunpack.c.h.b16 %v75
    %v939 = vunpack.c.l.b16 %v76
    %v940 = vunpack.c.h.b16 %v76
    %v941 = vunpack.c.l.b16 %v77
    %v942 = vunpack.c.h.b16 %v77
    %v943 = vunpack.c.l.b16 %v78
    %v944 = vunpack.c.h.b16 %v78
    %v945 = vunpack.c.l.b16 %v79
    %v946 = vunpack.c.h.b16 %v79
    %v947 = vunpack.c.l.b16 %v80
    %v948 = vunpack.c.h.b16 %v80
    %v949 = vunpack.c.l.b16 %v81
    %v950 = vunpack.c.h.b16 %v81
    %v951 = vunpack.c.l.b16 %v82
    %v952 = vunpack.c.h.b16 %v82
    %v953 = vunpack.c.l.b16 %v83
    %v954 = vunpack.c.h.b16 %v83
    %v955 = vunpack.c.l.b16 %v84
    %v956 = vunpack.c.h.b16 %v84
    %v957 = vunpack.c.l.b16 %v85
    %v958 = vunpack.c.h.b16 %v85
    %v959 = vunpack.c.l.b16 %v86
    %v960 = vunpack.c.h.b16 %v86
    %v961 = vunpack.c.l.b16 %v87
    %v962 = vunpack.c.h.b16 %v87
    %v963 = vunpack.c.l.b16 %v88
    %v964 = vunpack.c.h.b16 %v88
    %v965 = vunpack.c.l.b16 %v89
    %v966 = vunpack.c.h.b16 %v89
    %v967 = vunpack.c.l.b16 %v90
    %v968 = vunpack.c.h.b16 %v90
    %v969 = vunpack.c.l.b16 %v91
    %v970 = vunpack.c.h.b16 %v91
    %v971 = vunpack.c.l.b16 %v92
    %v972 = vunpack.c.h.b16 %v92
    %v973 = vunpack.c.l.b16 %v93
    %v974 = vunpack.c.h.b16 %v93
    %v975 = vunpack.c.l.b16 %v94
    %v976 = vunpack.c.h.b16 %v94
    %v977 = vunpack.c.l.b16 %v95
    %v978 = vunpack.c.h.b16 %v95
    %v979 = vunpack.c.l.b16 %v96
    %v980 = vunpack.c.h.b16 %v96
    %v981 = vunpack.c.l.b16 %v97
    %v982 = vunpack.c.h.b16 %v97
    %v983 = vunpack.c.l.b16 %v98
    %v984 = vunpack.c.h.b16 %v98
    %v985 = vunpack.c.l.b16 %v99
    %v986 = vunpack.c.h.b16 %v99
    %v987 = vunpack.c.l.b16 %v100
    %v988 = vunpack.c.h.b16 %v100
    %v989 = vunpack.c.l.b16 %v101
    %v990 = vunpack.c.h.b16 %v101
    %v991 = vunpack.c.l.b16 %v102
    %v992 = vunpack.c.h.b16 %v102
    %v993 = vunpack.c.l.b16 %v103
    %v994 = vunpack.c.h.b16 %v103
    %v995 = vunpack.c.l.b16 %v104
    %v996 = vunpack.c.h.b16 %v104
    %v997 = vunpack.c.l.b16 %v105
    %v998 = vunpack.c.h.b16 %v105
    %v999 = vunpack.c.l.b16 %v106
    %v1000 = vunpack.c.h.b16 %v106
    %v1001 = vunpack.c.l.b16 %v107
    %v1002 = vunpack.c.h.b16 %v107
    %v1003 = vunpack.c.l.b16 %v108
    %v1004 = vunpack.c.h.b16 %v108
    %v1005 = vunpack.c.l.b16 %v109
    %v1006 = vunpack.c.h.b16 %v109
    %v1007 = vunpack.c.l.b16 %v110
    %v1008 = vunpack.c.h.b16 %v110
    %v1009 = vunpack.c.l.b16 %v111
    %v1010 = vunpack.c.h.b16 %v111
    %v1011 = vunpack.c.l.b16 %v112
    %v1012 = vunpack.c.h.b16 %v112
    %v1013 = vunpack.c.l.b16 %v113
    %v1014 = vunpack.c.h.b16 %v113
    %v1015 = vunpack.c.l.b16 %v114
    %v1016 = vunpack.c.h.b16 %v114
    %v1017 = vunpack.c.l.b16 %v115
    %v1018 = vunpack.c.h.b16 %v115
    %v1019 = vunpack.c.l.b16 %v116
    %v1020 = vunpack.c.h.b16 %v116
    %v1021 = vunpack.c.l.b16 %v117
    %v1022 = vunpack.c.h.b16 %v117
    %v1023 = vunpack.c.l.b16 %v118
    %v1024 = vunpack.c.h.b16 %v118
    %v1025 = vunpack.c.l.b16 %v119
    %v1026 = vunpack.c.h.b16 %v119
    %v1027 = vunpack.c.l.b16 %v120
    %v1028 = vunpack.c.h.b16 %v120
    %v1029 = vunpack.c.l.b16 %v121
    %v1030 = vunpack.c.h.b16 %v121
    %v1031 = vunpack.c.l.b16 %v122
    %v1032 = vunpack.c.h.b16 %v122
    %v1033 = vunpack.c.l.b16 %v123
    %v1034 = vunpack.c.h.b16 %v123
    %v1035 = vunpack.c.l.b16 %v124
    %v1036 = vunpack.c.h.b16 %v124
    %v1037 = vunpack.c.l.b16 %v125
    %v1038 = vunpack.c.h.b16 %v125
    %v1039 = vunpack.c.l.b16 %v126
    %v1040 = vunpack.c.h.b16 %v126
    %v1041 = vunpack.c.l.b16 %v127
    %v1042 = vunpack.c.h.b16 %v127
    %v1043 = vunpack.c.l.b16 %v128
    %v1044 = vunpack.c.h.b16 %v128
    %v1045 = vunpack.c.l.b16 %v129
    %v1046 = vunpack.c.h.b16 %v129
    %v1047 = vunpack.c.l.b16 %v130
    %v1048 = vunpack.c.h.b16 %v130
    %v1049 = vunpack.c.l.b16 %v131
    %v1050 = vunpack.c.h.b16 %v131
    %v1051 = vunpack.c.l.b16 %v132
    %v1052 = vunpack.c.h.b16 %v132
    %v1053 = vunpack.c.l.b16 %v133
    %v1054 = vunpack.c.h.b16 %v133
    %v1055 = vunpack.c.l.b16 %v134
    %v1056 = vunpack.c.h.b16 %v134
    %v1057 = vunpack.c.l.b16 %v135
    %v1058 = vunpack.c.h.b16 %v135
    %v1059 = vunpack.c.l.b16 %v136
    %v1060 = vunpack.c.h.b16 %v136
    %v1061 = vunpack.c.l.b16 %v137
    %v1062 = vunpack.c.h.b16 %v137
    %v1063 = vunpack.c.l.b16 %v138
    %v1064 = vunpack.c.h.b16 %v138
    %v1065 = vunpack.c.l.b16 %v139
    %v1066 = vunpack.c.h.b16 %v139
    %v1067 = vunpack.c.l.b16 %v140
    %v1068 = vunpack.c.h.b16 %v140
    %v1069 = vunpack.c.l.b16 %v141
    %v1070 = vunpack.c.h.b16 %v141
    %v1071 = vunpack.c.l.b16 %v142
    %v1072 = vunpack.c.h.b16 %v142
    %v1073 = vunpack.c.l.b16 %v143
    %v1074 = vunpack.c.h.b16 %v143
    %v1075 = vunpack.c.l.b16 %v144
    %v1076 = vunpack.c.h.b16 %v144
    %v1077 = vunpack.c.l.b16 %v145
    %v1078 = vunpack.c.h.b16 %v145
    %v1079 = vunpack.c.l.b16 %v146
    %v1080 = vunpack.c.h.b16 %v146
    %v1081 = vunpack.c.l.b16 %v147
    %v1082 = vunpack.c.h.b16 %v147
    %v1083 = vunpack.c.l.b16 %v148
    %v1084 = vunpack.c.h.b16 %v148
    %v1085 = vunpack.c.l.b16 %v149
    %v1086 = vunpack.c.h.b16 %v149
    %v1087 = vunpack.c.l.b16 %v150
    %v1088 = vunpack.c.h.b16 %v150
    %v1089 = vunpack.c.l.b16 %v151
    %v1090 = vunpack.c.h.b16 %v151
    %v1091 = vunpack.c.l.b16 %v152
    %v1092 = vunpack.c.h.b16 %v152
    %v1093 = vunpack.c.l.b16 %v153
    %v1094 = vunpack.c.h.b16 %v153
    %v1095 = vunpack.c.l.b16 %v154
    %v1096 = vunpack.c.h.b16 %v154
    %v1097 = vunpack.c.l.b16 %v155
    %v1098 = vunpack.c.h.b16 %v155
    %v1099 = vunpack.c.l.b16 %v156
    %v1100 = vunpack.c.h.b16 %v156
    %v1101 = vunpack.c.l.b16 %v157
    %v1102 = vunpack.c.h.b16 %v157
    %v1103 = vunpack.c.l.b16 %v158
    %v1104 = vunpack.c.h.b16 %v158
    %v1105 = vunpack.c.l.b16 %v159
    %v1106 = vunpack.c.h.b16 %v159
    %v1107 = vunpack.c.l.b16 %v160
    %v1108 = vunpack.c.h.b16 %v160
    %v1109 = vunpack.c.l.b16 %v161
    %v1110 = vunpack.c.h.b16 %v161
    %v1111 = vunpack.c.l.b16 %v162
    %v1112 = vunpack.c.h.b16 %v162
    %v1113 = vunpack.c.l.b16 %v163
    %v1114 = vunpack.c.h.b16 %v163
    %v1115 = vunpack.c.l.b16 %v164
    %v1116 = vunpack.c.h.b16 %v164
    %v1117 = vunpack.c.l.b16 %v165
    %v1118 = vunpack.c.h.b16 %v165
    %v1119 = vunpack.c.l.b16 %v166
    %v1120 = vunpack.c.h.b16 %v166
    %v1121 = vunpack.c.l.b16 %v167
    %v1122 = vunpack.c.h.b16 %v167
    %v1123 = vunpack.c.l.b16 %v168
    %v1124 = vunpack.c.h.b16 %v168
    %v1125 = vunpack.c.l.b16 %v169
    %v1126 = vunpack.c.h.b16 %v169
    %v1127 = vunpack.c.l.b16 %v170
    %v1128 = vunpack.c.h.b16 %v170
    %v1129 = vunpack.c.l.b16 %v171
    %v1130 = vunpack.c.h.b16 %v171
    %v1131 = vunpack.c.l.b16 %v172
    %v1132 = vunpack.c.h.b16 %v172
    %v1133 = vunpack.c.l.b16 %v173
    %v1134 = vunpack.c.h.b16 %v173
    %v1135 = vunpack.c.l.b16 %v174
    %v1136 = vunpack.c.h.b16 %v174
    %v1137 = vunpack.c.l.b16 %v175
    %v1138 = vunpack.c.h.b16 %v175
    %v1139 = vunpack.c.l.b16 %v176
    %v1140 = vunpack.c.h.b16 %v176
    %v1141 = vunpack.c.l.b16 %v177
    %v1142 = vunpack.c.h.b16 %v177
    %v1143 = vunpack.c.l.b16 %v178
    %v1144 = vunpack.c.h.b16 %v178
    %v1145 = vunpack.c.l.b16 %v179
    %v1146 = vunpack.c.h.b16 %v179
    %v1147 = vunpack.c.l.b16 %v180
    %v1148 = vunpack.c.h.b16 %v180
    %v1149 = vunpack.c.l.b16 %v181
    %v1150 = vunpack.c.h.b16 %v181
    %v1151 = vunpack.c.l.b16 %v182
    %v1152 = vunpack.c.h.b16 %v182
    %v1153 = vunpack.c.l.b16 %v183
    %v1154 = vunpack.c.h.b16 %v183
    %v1155 = vunpack.c.l.b16 %v184
    %v1156 = vunpack.c.h.b16 %v184
    %v1157 = vunpack.c.l.b16 %v185
    %v1158 = vunpack.c.h.b16 %v185
    %v1159 = vunpack.c.l.b16 %v186
    %v1160 = vunpack.c.h.b16 %v186
    %v1161 = vunpack.c.l.b16 %v187
    %v1162 = vunpack.c.h.b16 %v187
    %v1163 = vunpack.c.l.b16 %v188
    %v1164 = vunpack.c.h.b16 %v188
    %v1165 = vunpack.c.l.b16 %v189
    %v1166 = vunpack.c.h.b16 %v189
    %v1167 = vunpack.c.l.b16 %v190
    %v1168 = vunpack.c.h.b16 %v190
    %v1169 = vunpack.c.l.b16 %v191
    %v1170 = vunpack.c.h.b16 %v191
    %v1171 = vunpack.c.l.b16 %v192
    %v1172 = vunpack.c.h.b16 %v192
    %v1173 = vunpack.c.l.b16 %v193
    %v1174 = vunpack.c.h.b16 %v193
    %v1175 = vunpack.c.l.b16 %v194
    %v1176 = vunpack.c.h.b16 %v194
    %v1177 = vunpack.c.l.b16 %v195
    %v1178 = vunpack.c.h.b16 %v195
    %v1179 = vunpack.c.l.b16 %v196
    %v1180 = vunpack.c.h.b16 %v196
    %v1181 = vunpack.c.l.b16 %v197
    %v1182 = vunpack.c.h.b16 %v197
    %v1183 = vunpack.c.l.b16 %v198
    %v1184 = vunpack.c.h.b16 %v198
    %v1185 = vunpack.c.l.b16 %v199
    %v1186 = vunpack.c.h.b16 %v199
    %v1187 = vunpack.c.l.b16 %v200
    %v1188 = vunpack.c.h.b16 %v200
    %v1189 = vunpack.c.l.b16 %v201
    %v1190 = vunpack.c.h.b16 %v201
    %v1191 = vunpack.c.l.b16 %v202
    %v1192 = vunpack.c.h.b16 %v202
    %v1193 = vunpack.c.l.b16 %v203
    %v1194 = vunpack.c.h.b16 %v203
    %v1195 = vunpack.c.l.b16 %v204
    %v1196 = vunpack.c.h.b16 %v204
    %v1197 = vunpack.c.l.b16 %v205
    %v1198 = vunpack.c.h.b16 %v205
    %v1199 = vunpack.c.l.b16 %v206
    %v1200 = vunpack.c.h.b16 %v206
    %v1201 = vunpack.c.l.b16 %v207
    %v1202 = vunpack.c.h.b16 %v207
    %v1203 = vunpack.c.l.b16 %v208
    %v1204 = vunpack.c.h.b16 %v208
    %v1205 = vunpack.c.l.b16 %v209
    %v1206 = vunpack.c.h.b16 %v209
    %v1207 = vunpack.c.l.b16 %v210
    %v1208 = vunpack.c.h.b16 %v210
    %v1209 = vunpack.c.l.b16 %v211
    %v1210 = vunpack.c.h.b16 %v211
    %v1211 = vunpack.c.l.b16 %v212
    %v1212 = vunpack.c.h.b16 %v212
    %v1213 = vunpack.c.l.b16 %v213
    %v1214 = vunpack.c.h.b16 %v213
    %v1215 = vunpack.c.l.b16 %v214
    %v1216 = vunpack.c.h.b16 %v214
    %v1217 = vunpack.c.l.b16 %v215
    %v1218 = vunpack.c.h.b16 %v215
    %v1219 = vunpack.c.l.b16 %v216
    %v1220 = vunpack.c.h.b16 %v216
    %v1221 = vunpack.c.l.b16 %v217
    %v1222 = vunpack.c.h.b16 %v217
    %v1223 = vunpack.c.l.b16 %v218
    %v1224 = vunpack.c.h.b16 %v218
    %v1225 = vunpack.c.l.b16 %v219
    %v1226 = vunpack.c.h.b16 %v219
    %v1227 = vunpack.c.l.b16 %v220
    %v1228 = vunpack.c.h.b16 %v220
    %v1229 = vunpack.c.l.b16 %v221
    %v1230 = vunpack.c.h.b16 %v221
    %v1231 = vunpack.c.l.b16 %v222
    %v1232 = vunpack.c.h.b16 %v222
    %v1233 = vunpack.c.l.b16 %v223
    %v1234 = vunpack.c.h.b16 %v223
    %v1235 = vunpack.c.l.b16 %v224
    %v1236 = vunpack.c.h.b16 %v224
    %v1237 = vunpack.c.l.b16 %v225
    %v1238 = vunpack.c.h.b16 %v225
    %v1239 = vunpack.c.l.b16 %v226
    %v1240 = vunpack.c.h.b16 %v226
    %v1241 = vunpack.c.l.b16 %v227
    %v1242 = vunpack.c.h.b16 %v227
    %v1243 = vunpack.c.l.b16 %v228
    %v1244 = vunpack.c.h.b16 %v228
    %v1245 = vunpack.c.l.b16 %v229
    %v1246 = vunpack.c.h.b16 %v229
    %v1247 = vunpack.c.l.b16 %v230
    %v1248 = vunpack.c.h.b16 %v230
    %v1249 = vunpack.c.l.b16 %v231
    %v1250 = vunpack.c.h.b16 %v231
    %v1251 = vunpack.c.l.b16 %v232
    %v1252 = vunpack.c.h.b16 %v232
    %v1253 = vunpack.c.l.b16 %v233
    %v1254 = vunpack.c.h.b16 %v233
    %v1255 = vunpack.c.l.b16 %v234
    %v1256 = vunpack.c.h.b16 %v234
    %v1257 = vunpack.c.l.b16 %v235
    %v1258 = vunpack.c.h.b16 %v235
    %v1259 = vunpack.c.l.b16 %v236
    %v1260 = vunpack.c.h.b16 %v236
    %v1261 = vunpack.c.l.b16 %v237
    %v1262 = vunpack.c.h.b16 %v237
    %v1263 = vunpack.c.l.b16 %v238
    %v1264 = vunpack.c.h.b16 %v238
    %v1265 = vunpack.c.l.b16 %v239
    %v1266 = vunpack.c.h.b16 %v239
    %v1267 = vunpack.c.l.b16 %v240
    %v1268 = vunpack.c.h.b16 %v240
    %v1269 = vunpack.c.l.b16 %v241
    %v1270 = vunpack.c.h.b16 %v241
    %v1271 = vunpack.c.l.b16 %v242
    %v1272 = vunpack.c.h.b16 %v242
    %v1273 = vunpack.c.l.b16 %v243
    %v1274 = vunpack.c.h.b16 %v243
    %v1275 = vunpack.c.l.b16 %v244
    %v1276 = vunpack.c.h.b16 %v244
    %v1277 = vunpack.c.l.b16 %v245
    %v1278 = vunpack.c.h.b16 %v245
    %v1279 = vunpack.c.l.b16 %v246
    %v1280 = vunpack.c.h.b16 %v246
    %v1281 = vunpack.c.l.b16 %v247
    %v1282 = vunpack.c.h.b16 %v247
    %v1283 = vunpack.c.l.b16 %v248
    %v1284 = vunpack.c.h.b16 %v248
    %v1285 = vunpack.c.l.b16 %v249
    %v1286 = vunpack.c.h.b16 %v249
    %v1287 = vunpack.c.l.b16 %v250
    %v1288 = vunpack.c.h.b16 %v250
    %v1289 = vunpack.c.l.b16 %v251
    %v1290 = vunpack.c.h.b16 %v251
    %v1291 = vunpack.c.l.b16 %v252
    %v1292 = vunpack.c.h.b16 %v252
    %v1293 = vunpack.c.l.b16 %v253
    %v1294 = vunpack.c.h.b16 %v253
    %v1295 = vunpack.c.l.b16 %v254
    %v1296 = vunpack.c.h.b16 %v254
    %v1297 = vunpack.c.l.b16 %v255
    %v1298 = vunpack.c.h.b16 %v255
    %v1299 = vunpack.c.l.b16 %v256
    %v1300 = vunpack.c.h.b16 %v256
    %v1301 = vunpack.c.l.b16 %v257
    %v1302 = vunpack.c.h.b16 %v257
    %v1303 = vunpack.c.l.b16 %v258
    %v1304 = vunpack.c.h.b16 %v258
    %v1305 = vunpack.c.l.b16 %v259
    %v1306 = vunpack.c.h.b16 %v259
    %v1307 = vunpack.c.l.b16 %v260
    %v1308 = vunpack.c.h.b16 %v260
    %v1309 = vunpack.c.l.b16 %v261
    %v1310 = vunpack.c.h.b16 %v261
    %v1311 = vunpack.c.l.b16 %v262
    %v1312 = vunpack.c.h.b16 %v262
    %v1313 = vunpack.c.l.b16 %v263
    %v1314 = vunpack.c.h.b16 %v263
    %v1315 = vunpack.c.l.b16 %v264
    %v1316 = vunpack.c.h.b16 %v264
    %v1317 = vunpack.c.l.b16 %v265
    %v1318 = vunpack.c.h.b16 %v265
    %v1319 = vunpack.c.l.b16 %v266
    %v1320 = vunpack.c.h.b16 %v266
    %v1321 = vunpack.c.l.b16 %v267
    %v1322 = vunpack.c.h.b16 %v267
    %v1323 = vunpack.c.l.b16 %v268
    %v1324 = vunpack.c.h.b16 %v268
    %v1325 = vunpack.c.l.b16 %v269
    %v1326 = vunpack.c.h.b16 %v269
    %v1327 = vunpack.c.l.b16 %v270
    %v1328 = vunpack.c.h.b16 %v270
    %v1329 = vunpack.c.l.b16 %v271
    %v1330 = vunpack.c.h.b16 %v271
    %v1331 = vunpack.c.l.b16 %v272
    %v1332 = vunpack.c.h.b16 %v272
    %v1333 = vunpack.c.l.b16 %v273
    %v1334 = vunpack.c.h.b16 %v273
    %v1335 = vunpack.c.l.b16 %v274
    %v1336 = vunpack.c.h.b16 %v274
    %v1337 = vunpack.c.l.b16 %v275
    %v1338 = vunpack.c.h.b16 %v275
    %v1339 = vunpack.c.l.b16 %v276
    %v1340 = vunpack.c.h.b16 %v276
    %v1341 = vunpack.c.l.b16 %v277
    %v1342 = vunpack.c.h.b16 %v277
    %v1343 = vunpack.c.l.b16 %v278
    %v1344 = vunpack.c.h.b16 %v278
    %v1345 = vunpack.c.l.b16 %v279
    %v1346 = vunpack.c.h.b16 %v279
    %v1347 = vunpack.c.l.b16 %v280
    %v1348 = vunpack.c.h.b16 %v280
    %v1349 = vunpack.c.l.b16 %v281
    %v1350 = vunpack.c.h.b16 %v281
    %v1351 = vunpack.c.l.b16 %v282
    %v1352 = vunpack.c.h.b16 %v282
    %v1353 = vunpack.c.l.b16 %v283
    %v1354 = vunpack.c.h.b16 %v283
    %v1355 = vunpack.c.l.b16 %v284
    %v1356 = vunpack.c.h.b16 %v284
    %v1357 = vunpack.c.l.b16 %v285
    %v1358 = vunpack.c.h.b16 %v285
    %v1359 = vunpack.c.l.b16 %v286
    %v1360 = vunpack.c.h.b16 %v286
    %v1361 = vunpack.c.l.b16 %v287
    %v1362 = vunpack.c.h.b16 %v287
    %v1363 = vunpack.c.l.b16 %v288
    %v1364 = vunpack.c.h.b16 %v288
    %v1365 = vunpack.c.l.b16 %v289
    %v1366 = vunpack.c.h.b16 %v289
    %v1367 = vunpack.c.l.b16 %v290
    %v1368 = vunpack.c.h.b16 %v290
    %v1369 = vunpack.c.l.b16 %v291
    %v1370 = vunpack.c.h.b16 %v291
    %v1371 = vunpack.c.l.b16 %v292
    %v1372 = vunpack.c.h.b16 %v292
    %v1373 = vunpack.c.l.b16 %v293
    %v1374 = vunpack.c.h.b16 %v293
    %v1375 = vunpack.c.l.b16 %v294
    %v1376 = vunpack.c.h.b16 %v294
    %v1377 = vunpack.c.l.b16 %v295
    %v1378 = vunpack.c.h.b16 %v295
    %v1379 = vunpack.c.l.b16 %v296
    %v1380 = vunpack.c.h.b16 %v296
    %v1381 = vunpack.c.l.b16 %v297
    %v1382 = vunpack.c.h.b16 %v297
    %v1383 = vunpack.c.l.b16 %v298
    %v1384 = vunpack.c.h.b16 %v298
    %v1385 = vunpack.c.l.b16 %v299
    %v1386 = vunpack.c.h.b16 %v299
    %v1387 = vunpack.c.l.b16 %v300
    %v1388 = vunpack.c.h.b16 %v300
    %v1389 = vunpack.c.l.b16 %v301
    %v1390 = vunpack.c.h.b16 %v301
    %v1391 = vunpack.c.l.b16 %v302
    %v1392 = vunpack.c.h.b16 %v302
    %v1393 = vunpack.c.l.b16 %v303
    %v1394 = vunpack.c.h.b16 %v303
    %v1395 = vunpack.c.l.b16 %v304
    %v1396 = vunpack.c.h.b16 %v304
    %v1397 = vunpack.c.l.b16 %v305
    %v1398 = vunpack.c.h.b16 %v305
    %v1399 = vunpack.c.l.b16 %v306
    %v1400 = vunpack.c.h.b16 %v306
    %v1401 = vunpack.c.l.b16 %v307
    %v1402 = vunpack.c.h.b16 %v307
    %v1403 = vunpack.c.l.b16 %v308
    %v1404 = vunpack.c.h.b16 %v308
    %v1405 = vunpack.c.l.b16 %v309
    %v1406 = vunpack.c.h.b16 %v309
    %v1407 = vunpack.c.l.b16 %v310
    %v1408 = vunpack.c.h.b16 %v310
    %v1409 = vunpack.c.l.b16 %v311
    %v1410 = vunpack.c.h.b16 %v311
    %v1411 = vunpack.c.l.b16 %v312
    %v1412 = vunpack.c.h.b16 %v312
    %v1413 = vunpack.c.l.b16 %v313
    %v1414 = vunpack.c.h.b16 %v313
    %v1415 = vunpack.c.l.b16 %v314
    %v1416 = vunpack.c.h.b16 %v314
    %v1417 = vunpack.c.l.b16 %v315
    %v1418 = vunpack.c.h.b16 %v315
    %v1419 = vunpack.c.l.b16 %v316
    %v1420 = vunpack.c.h.b16 %v316
    %v1421 = vunpack.c.l.b16 %v317
    %v1422 = vunpack.c.h.b16 %v317
    %v1423 = vunpack.c.l.b16 %v318
    %v1424 = vunpack.c.h.b16 %v318
    %v1425 = vunpack.c.l.b16 %v319
    %v1426 = vunpack.c.h.b16 %v319
    %v1427 = vunpack.c.l.b16 %v320
    %v1428 = vunpack.c.h.b16 %v320
    %v1429 = vunpack.c.l.b16 %v321
    %v1430 = vunpack.c.h.b16 %v321
    %v1431 = vunpack.c.l.b16 %v322
    %v1432 = vunpack.c.h.b16 %v322
    %v1433 = vunpack.c.l.b16 %v323
    %v1434 = vunpack.c.h.b16 %v323
    %v1435 = vunpack.c.l.b16 %v324
    %v1436 = vunpack.c.h.b16 %v324
    %v1437 = vunpack.c.l.b16 %v325
    %v1438 = vunpack.c.h.b16 %v325
    %v1439 = vunpack.c.l.b16 %v326
    %v1440 = vunpack.c.h.b16 %v326
    %v1441 = vunpack.c.l.b16 %v327
    %v1442 = vunpack.c.h.b16 %v327
    %v1443 = vunpack.c.l.b16 %v328
    %v1444 = vunpack.c.h.b16 %v328
    %v1445 = vunpack.c.l.b16 %v329
    %v1446 = vunpack.c.h.b16 %v329
    %v1447 = vunpack.c.l.b16 %v330
    %v1448 = vunpack.c.h.b16 %v330
    %v1449 = vunpack.c.l.b16 %v331
    %v1450 = vunpack.c.h.b16 %v331
    %v1451 = vunpack.c.l.b16 %v332
    %v1452 = vunpack.c.h.b16 %v332
    %v1453 = vunpack.c.l.b16 %v333
    %v1454 = vunpack.c.h.b16 %v333
    %v1455 = vunpack.c.l.b16 %v334
    %v1456 = vunpack.c.h.b16 %v334
    %v1457 = vunpack.c.l.b16 %v335
    %v1458 = vunpack.c.h.b16 %v335
    %v1459 = vunpack.c.l.b16 %v336
    %v1460 = vunpack.c.h.b16 %v336
    %v1461 = vunpack.c.l.b16 %v337
    %v1462 = vunpack.c.h.b16 %v337
    %v1463 = vunpack.c.l.b16 %v338
    %v1464 = vunpack.c.h.b16 %v338
    %v1465 = vunpack.c.l.b16 %v339
    %v1466 = vunpack.c.h.b16 %v339
    %v1467 = vunpack.c.l.b16 %v340
    %v1468 = vunpack.c.h.b16 %v340
    %v1469 = vunpack.c.l.b16 %v341
    %v1470 = vunpack.c.h.b16 %v341
    %v1471 = vunpack.c.l.b16 %v342
    %v1472 = vunpack.c.h.b16 %v342
    %v1473 = vunpack.c.l.b16 %v343
    %v1474 = vunpack.c.h.b16 %v343
    %v1475 = vunpack.c.l.b16 %v344
    %v1476 = vunpack.c.h.b16 %v344
    %v1477 = vunpack.c.l.b16 %v345
    %v1478 = vunpack.c.h.b16 %v345
    %v1479 = vunpack.c.l.b16 %v346
    %v1480 = vunpack.c.h.b16 %v346
    %v1481 = vunpack.c.l.b16 %v347
    %v1482 = vunpack.c.h.b16 %v347
    %v1483 = vunpack.c.l.b16 %v348
    %v1484 = vunpack.c.h.b16 %v348
    %v1485 = vunpack.c.l.b16 %v349
    %v1486 = vunpack.c.h.b16 %v349
    %v1487 = vunpack.c.l.b16 %v350
    %v1488 = vunpack.c.h.b16 %v350
    %v1489 = vunpack.c.l.b16 %v351
    %v1490 = vunpack.c.h.b16 %v351
    %v1491 = vunpack.c.l.b16 %v352
    %v1492 = vunpack.c.h.b16 %v352
    %v1493 = vunpack.c.l.b16 %v353
    %v1494 = vunpack.c.h.b16 %v353
    %v1495 = vunpack.c.l.b16 %v354
    %v1496 = vunpack.c.h.b16 %v354
    %v1497 = vunpack.c.l.b16 %v355
    %v1498 = vunpack.c.h.b16 %v355
    %v1499 = vunpack.c.l.b16 %v356
    %v1500 = vunpack.c.h.b16 %v356
    %v1501 = vunpack.c.l.b16 %v357
    %v1502 = vunpack.c.h.b16 %v357
    %v1503 = vunpack.c.l.b16 %v358
    %v1504 = vunpack.c.h.b16 %v358
    %v1505 = vunpack.c.l.b16 %v359
    %v1506 = vunpack.c.h.b16 %v359
    %v1507 = vunpack.c.l.b16 %v360
    %v1508 = vunpack.c.h.b16 %v360
    %v1509 = vunpack.c.l.b16 %v361
    %v1510 = vunpack.c.h.b16 %v361
    %v1511 = vunpack.c.l.b16 %v362
    %v1512 = vunpack.c.h.b16 %v362
    %v1513 = vunpack.c.l.b16 %v363
    %v1514 = vunpack.c.h.b16 %v363
    %v1515 = vunpack.c.l.b16 %v364
    %v1516 = vunpack.c.h.b16 %v364
    %v1517 = vunpack.c.l.b16 %v365
    %v1518 = vunpack.c.h.b16 %v365
    %v1519 = vunpack.c.l.b16 %v366
    %v1520 = vunpack.c.h.b16 %v366
    %v1521 = vunpack.c.l.b16 %v367
    %v1522 = vunpack.c.h.b16 %v367
    %v1523 = vunpack.c.l.b16 %v368
    %v1524 = vunpack.c.h.b16 %v368
    %v1525 = vunpack.c.l.b16 %v369
    %v1526 = vunpack.c.h.b16 %v369
    %v1527 = vunpack.c.l.b16 %v370
    %v1528 = vunpack.c.h.b16 %v370
    %v1529 = vunpack.c.l.b16 %v371
    %v1530 = vunpack.c.h.b16 %v371
    %v1531 = vunpack.c.l.b16 %v372
    %v1532 = vunpack.c.h.b16 %v372
    %v1533 = vunpack.c.l.b16 %v373
    %v1534 = vunpack.c.h.b16 %v373
    %v1535 = vunpack.c.l.b16 %v374
    %v1536 = vunpack.c.h.b16 %v374
    %v1537 = vunpack.c.l.b16 %v375
    %v1538 = vunpack.c.h.b16 %v375
    %v1539 = vunpack.c.l.b16 %v376
    %v1540 = vunpack.c.h.b16 %v376
    %v1541 = vunpack.c.l.b16 %v377
    %v1542 = vunpack.c.h.b16 %v377
    %v1543 = vunpack.c.l.b16 %v378
    %v1544 = vunpack.c.h.b16 %v378
    %v1545 = vunpack.c.l.b16 %v379
    %v1546 = vunpack.c.h.b16 %v379
    %v1547 = vunpack.c.l.b16 %v380
    %v1548 = vunpack.c.h.b16 %v380
    %v1549 = vunpack.c.l.b16 %v381
    %v1550 = vunpack.c.h.b16 %v381
    %v1551 = vunpack.c.l.b16 %v382
    %v1552 = vunpack.c.h.b16 %v382
    %v1553 = vunpack.c.l.b16 %v383
    %v1554 = vunpack.c.h.b16 %v383
    %v1555 = vunpack.c.l.b16 %v384
    %v1556 = vunpack.c.h.b16 %v384
    %v1557 = vunpack.c.l.b16 %v385
    %v1558 = vunpack.c.h.b16 %v385
    %v1559 = vunpack.c.l.b16 %v386
    %v1560 = vunpack.c.h.b16 %v386
    %v1561 = vunpack.c.l.b16 %v387
    %v1562 = vunpack.c.h.b16 %v387
    %v1563 = vunpack.c.l.b16 %v388
    %v1564 = vunpack.c.h.b16 %v388
    %v1565 = vunpack.c.l.b16 %v389
    %v1566 = vunpack.c.h.b16 %v389
    %v1567 = vunpack.c.l.b16 %v390
    %v1568 = vunpack.c.h.b16 %v390
    %v1569 = vunpack.c.l.b16 %v391
    %v1570 = vunpack.c.h.b16 %v391
    %v1571 = vunpack.c.l.b16 %v392
    %v1572 = vunpack.c.h.b16 %v392
    %v1573 = vunpack.c.l.b16 %v393
    %v1574 = vunpack.c.h.b16 %v393
    %v1575 = vunpack.c.l.b16 %v394
    %v1576 = vunpack.c.h.b16 %v394
    %v1577 = vunpack.c.l.b16 %v395
    %v1578 = vunpack.c.h.b16 %v395
    %v1579 = vunpack.c.l.b16 %v396
    %v1580 = vunpack.c.h.b16 %v396
    %v1581 = vunpack.c.l.b16 %v397
    %v1582 = vunpack.c.h.b16 %v397
    %v1583 = vunpack.c.l.b16 %v398
    %v1584 = vunpack.c.h.b16 %v398
    %v1585 = vunpack.c.l.b16 %v399
    %v1586 = vunpack.c.h.b16 %v399
    %v1587 = vunpack.c.l.b16 %v400
    %v1588 = vunpack.c.h.b16 %v400
    %v1589 = vunpack.c.l.b16 %v401
    %v1590 = vunpack.c.h.b16 %v401
    %v1591 = vunpack.c.l.b16 %v402
    %v1592 = vunpack.c.h.b16 %v402
    %v1593 = vunpack.c.l.b16 %v403
    %v1594 = vunpack.c.h.b16 %v403
    %v1595 = vunpack.c.l.b16 %v404
    %v1596 = vunpack.c.h.b16 %v404
    %v1597 = vunpack.c.l.b16 %v405
    %v1598 = vunpack.c.h.b16 %v405
    %v1599 = vunpack.c.l.b16 %v406
    %v1600 = vunpack.c.h.b16 %v406
    %v1601 = vunpack.c.l.b16 %v407
    %v1602 = vunpack.c.h.b16 %v407
    %v1603 = vunpack.c.l.b16 %v408
    %v1604 = vunpack.c.h.b16 %v408
    %v1605 = vunpack.c.l.b16 %v409
    %v1606 = vunpack.c.h.b16 %v409
    %v1607 = vunpack.c.l.b16 %v410
    %v1608 = vunpack.c.h.b16 %v410
    %v1609 = vunpack.c.l.b16 %v411
    %v1610 = vunpack.c.h.b16 %v411
    %v1611 = vunpack.c.l.b16 %v412
    %v1612 = vunpack.c.h.b16 %v412
    %v1613 = vunpack.c.l.b16 %v413
    %v1614 = vunpack.c.h.b16 %v413
    %v1615 = vunpack.c.l.b16 %v414
    %v1616 = vunpack.c.h.b16 %v414
    %v1617 = vunpack.c.l.b16 %v415
    %v1618 = vunpack.c.h.b16 %v415
    %v1619 = vunpack.c.l.b16 %v416
    %v1620 = vunpack.c.h.b16 %v416
    %v1621 = vunpack.c.l.b16 %v417
    %v1622 = vunpack.c.h.b16 %v417
    %v1623 = vunpack.c.l.b16 %v418
    %v1624 = vunpack.c.h.b16 %v418
    %v1625 = vunpack.c.l.b16 %v419
    %v1626 = vunpack.c.h.b16 %v419
    %v1627 = vunpack.c.l.b16 %v420
    %v1628 = vunpack.c.h.b16 %v420
    %v1629 = vunpack.c.l.b16 %v421
    %v1630 = vunpack.c.h.b16 %v421
    %v1631 = vunpack.c.l.b16 %v422
    %v1632 = vunpack.c.h.b16 %v422
    %v1633 = vunpack.c.l.b16 %v423
    %v1634 = vunpack.c.h.b16 %v423
    %v1635 = vunpack.c.l.b16 %v424
    %v1636 = vunpack.c.h.b16 %v424
    %v1637 = vunpack.c.l.b16 %v425
    %v1638 = vunpack.c.h.b16 %v425
    %v1639 = vunpack.c.l.b16 %v426
    %v1640 = vunpack.c.h.b16 %v426
    %v1641 = vunpack.c.l.b16 %v427
    %v1642 = vunpack.c.h.b16 %v427
    %v1643 = vunpack.c.l.b16 %v428
    %v1644 = vunpack.c.h.b16 %v428
    %v1645 = vunpack.c.l.b16 %v429
    %v1646 = vunpack.c.h.b16 %v429
    %v1647 = vunpack.c.l.b16 %v430
    %v1648 = vunpack.c.h.b16 %v430
    %v1649 = vunpack.c.l.b16 %v431
    %v1650 = vunpack.c.h.b16 %v431
    %v1651 = vunpack.c.l.b16 %v432
    %v1652 = vunpack.c.h.b16 %v432
    %v1653 = vunpack.c.l.b16 %v433
    %v1654 = vunpack.c.h.b16 %v433
    %v1655 = vunpack.c.l.b16 %v434
    %v1656 = vunpack.c.h.b16 %v434
    %v1657 = vunpack.c.l.b16 %v435
    %v1658 = vunpack.c.h.b16 %v435
    %v1659 = vunpack.c.l.b16 %v436
    %v1660 = vunpack.c.h.b16 %v436
    %v1661 = vunpack.c.l.b16 %v437
    %v1662 = vunpack.c.h.b16 %v437
    %v1663 = vunpack.c.l.b16 %v438
    %v1664 = vunpack.c.h.b16 %v438
    %v1665 = vunpack.c.l.b16 %v439
    %v1666 = vunpack.c.h.b16 %v439
    %v1667 = vunpack.c.l.b16 %v440
    %v1668 = vunpack.c.h.b16 %v440
    %v1669 = vunpack.c.l.b16 %v441
    %v1670 = vunpack.c.h.b16 %v441
    %v1671 = vunpack.c.l.b16 %v442
    %v1672 = vunpack.c.h.b16 %v442
    %v1673 = vunpack.c.l.b16 %v443
    %v1674 = vunpack.c.h.b16 %v443
    %v1675 = vunpack.c.l.b16 %v444
    %v1676 = vunpack.c.h.b16 %v444
    %v1677 = vunpack.c.l.b16 %v445
    %v1678 = vunpack.c.h.b16 %v445
    %v1679 = vunpack.c.l.b16 %v446
    %v1680 = vunpack.c.h.b16 %v446
    %v1681 = vunpack.c.l.b16 %v447
    %v1682 = vunpack.c.h.b16 %v447
    %v1683 = vunpack.c.l.b16 %v448
    %v1684 = vunpack.c.h.b16 %v448
    %v1685 = vunpack.c.l.b16 %v449
    %v1686 = vunpack.c.h.b16 %v449
    %v1687 = vunpack.c.l.b16 %v450
    %v1688 = vunpack.c.h.b16 %v450
    %v1689 = vunpack.c.l.b16 %v451
    %v1690 = vunpack.c.h.b16 %v451
    %v1691 = vunpack.c.l.b16 %v452
    %v1692 = vunpack.c.h.b16 %v452
    %v1693 = vunpack.c.l.b16 %v453
    %v1694 = vunpack.c.h.b16 %v453
    %v1695 = vunpack.c.l.b16 %v454
    %v1696 = vunpack.c.h.b16 %v454
    %v1697 = vpack.c.b16 %v907, %v897
    %v1698 = vpack.c.b16 %v908, %v898
    %v1699 = vpack.c.b16 %v909, %v899
    %v1700 = vpack.c.b16 %v910, %v900
    %v1701 = vpack.c.b16 %v911, %v901
    %v1702 = vpack.c.b16 %v912, %v902
    %v1703 = vpack.c.b16 %v913, %v903
    %v1704 = vpack.c.b16 %v914, %v904
    %v1705 = vpack.c.b16 %v915, %v905
    %v1706 = vpack.c.b16 %v916, %v906
    %v1707 = vpack.c.b16 %v927, %v917
    %v1708 = vpack.c.b16 %v928, %v918
    %v1709 = vpack.c.b16 %v929, %v919
    %v1710 = vpack.c.b16 %v930, %v920
    %v1711 = vpack.c.b16 %v931, %v921
    %v1712 = vpack.c.b16 %v932, %v922
    %v1713 = vpack.c.b16 %v933, %v923
    %v1714 = vpack.c.b16 %v934, %v924
    %v1715 = vpack.c.b16 %v935, %v925
    %v1716 = vpack.c.b16 %v936, %v926
    %v1717 = vpack.c.b16 %v947, %v937
    %v1718 = vpack.c.b16 %v948, %v938
    %v1719 = vpack.c.b16 %v949, %v939
    %v1720 = vpack.c.b16 %v950, %v940
    %v1721 = vpack.c.b16 %v951, %v941
    %v1722 = vpack.c.b16 %v952, %v942
    %v1723 = vpack.c.b16 %v953, %v943
    %v1724 = vpack.c.b16 %v954, %v944
    %v1725 = vpack.c.b16 %v955, %v945
    %v1726 = vpack.c.b16 %v956, %v946
    %v1727 = vpack.c.b16 %v967, %v957
    %v1728 = vpack.c.b16 %v968, %v958
    %v1729 = vpack.c.b16 %v969, %v959
    %v1730 = vpack.c.b16 %v970, %v960
    %v1731 = vpack.c.b16 %v971, %v961
    %v1732 = vpack.c.b16 %v972, %v962
    %v1733 = vpack.c.b16 %v973, %v963
    %v1734 = vpack.c.b16 %v974, %v964
    %v1735 = vpack.c.b16 %v975, %v965
    %v1736 = vpack.c.b16 %v976, %v966
    %v1737 = vpack.c.b16 %v987, %v977
    %v1738 = vpack.c.b16 %v988, %v978
    %v1739 = vpack.c.b16 %v989, %v979
    %v1740 = vpack.c.b16 %v990, %v980
    %v1741 = vpack.c.b16 %v991, %v981
    %v1742 = vpack.c.b16 %v992, %v982
    %v1743 = vpack.c.b16 %v993, %v983
    %v1744 = vpack.c.b16 %v994, %v984
    %v1745 = vpack.c.b16 %v995, %v985
    %v1746 = vpack.c.b16 %v996, %v986
    %v1747 = vpack.c.b16 %v1007, %v997
    %v1748 = vpack.c.b16 %v1008, %v998
    %v1749 = vpack.c.b16 %v1009, %v999
    %v1750 = vpack.c.b16 %v1010, %v1000
    %v1751 = vpack.c.b16 %v1011, %v1001
    %v1752 = vpack.c.b16 %v1012, %v1002
    %v1753 = vpack.c.b16 %v1013, %v1003
    %v1754 = vpack.c.b16 %v1014, %v1004
    %v1755 = vpack.c.b16 %v1015, %v1005
    %v1756 = vpack.c.b16 %v1016, %v1006
    %v1757 = vpack.c.b16 %v1027, %v1017
    %v1758 = vpack.c.b16 %v1028, %v1018
    %v1759 = vpack.c.b16 %v1029, %v1019
    %v1760 = vpack.c.b16 %v1030, %v1020
    %v1761 = vpack.c.b16 %v1031, %v1021
    %v1762 = vpack.c.b16 %v1032, %v1022
    %v1763 = vpack.c.b16 %v1033, %v1023
    %v1764 = vpack.c.b16 %v1034, %v1024
    %v1765 = vpack.c.b16 %v1035, %v1025
    %v1766 = vpack.c.b16 %v1036, %v1026
    %v1767 = vpack.c.b16 %v1047, %v1037
    %v1768 = vpack.c.b16 %v1048, %v1038
    %v1769 = vpack.c.b16 %v1049, %v1039
    %v1770 = vpack.c.b16 %v1050, %v1040
    %v1771 = vpack.c.b16 %v1051, %v1041
    %v1772 = vpack.c.b16 %v1052, %v1042
    %v1773 = vpack.c.b16 %v1053, %v1043
    %v1774 = vpack.c.b16 %v1054, %v1044
    %v1775 = vpack.c.b16 %v1055, %v1045
    %v1776 = vpack.c.b16 %v1056, %v1046
    %v1777 = vpack.c.b16 %v1067, %v1057
    %v1778 = vpack.c.b16 %v1068, %v1058
    %v1779 = vpack.c.b16 %v1069, %v1059
    %v1780 = vpack.c.b16 %v1070, %v1060
    %v1781 = vpack.c.b16 %v1071, %v1061
    %v1782 = vpack.c.b16 %v1072, %v1062
    %v1783 = vpack.c.b16 %v1073, %v1063
    %v1784 = vpack.c.b16 %v1074, %v1064
    %v1785 = vpack.c.b16 %v1075, %v1065
    %v1786 = vpack.c.b16 %v1076, %v1066
    %v1787 = vpack.c.b16 %v1087, %v1077
    %v1788 = vpack.c.b16 %v1088, %v1078
    %v1789 = vpack.c.b16 %v1089, %v1079
    %v1790 = vpack.c.b16 %v1090, %v1080
    %v1791 = vpack.c.b16 %v1091, %v1081
    %v1792 = vpack.c.b16 %v1092, %v1082
    %v1793 = vpack.c.b16 %v1093, %v1083
    %v1794 = vpack.c.b16 %v1094, %v1084
    %v1795 = vpack.c.b16 %v1095, %v1085
    %v1796 = vpack.c.b16 %v1096, %v1086
    %v1797 = vpack.c.b16 %v1107, %v1097
    %v1798 = vpack.c.b16 %v1108, %v1098
    %v1799 = vpack.c.b16 %v1109, %v1099
    %v1800 = vpack.c.b16 %v1110, %v1100
    %v1801 = vpack.c.b16 %v1111, %v1101
    %v1802 = vpack.c.b16 %v1112, %v1102
    %v1803 = vpack.c.b16 %v1113, %v1103
    %v1804 = vpack.c.b16 %v1114, %v1104
    %v1805 = vpack.c.b16 %v1115, %v1105
    %v1806 = vpack.c.b16 %v1116, %v1106
    %v1807 = vpack.c.b16 %v1127, %v1117
    %v1808 = vpack.c.b16 %v1128, %v1118
    %v1809 = vpack.c.b16 %v1129, %v1119
    %v1810 = vpack.c.b16 %v1130, %v1120
    %v1811 = vpack.c.b16 %v1131, %v1121
    %v1812 = vpack.c.b16 %v1132, %v1122
    %v1813 = vpack.c.b16 %v1133, %v1123
    %v1814 = vpack.c.b16 %v1134, %v1124
    %v1815 = vpack.c.b16 %v1135, %v1125
    %v1816 = vpack.c.b16 %v1136, %v1126
    %v1817 = vpack.c.b16 %v1147, %v1137
    %v1818 = vpack.c.b16 %v1148, %v1138
    %v1819 = vpack.c.b16 %v1149, %v1139
    %v1820 = vpack.c.b16 %v1150, %v1140
    %v1821 = vpack.c.b16 %v1151, %v1141
    %v1822 = vpack.c.b16 %v1152, %v1142
    %v1823 = vpack.c.b16 %v1153, %v1143
    %v1824 = vpack.c.b16 %v1154, %v1144
    %v1825 = vpack.c.b16 %v1155, %v1145
    %v1826 = vpack.c.b16 %v1156, %v1146
    %v1827 = vpack.c.b16 %v1167, %v1157
    %v1828 = vpack.c.b16 %v1168, %v1158
    %v1829 = vpack.c.b16 %v1169, %v1159
    %v1830 = vpack.c.b16 %v1170, %v1160
    %v1831 = vpack.c.b16 %v1171, %v1161
    %v1832 = vpack.c.b16 %v1172, %v1162
    %v1833 = vpack.c.b16 %v1173, %v1163
    %v1834 = vpack.c.b16 %v1174, %v1164
    %v1835 = vpack.c.b16 %v1175, %v1165
    %v1836 = vpack.c.b16 %v1176, %v1166
    %v1837 = vpack.c.b16 %v1187, %v1177
    %v1838 = vpack.c.b16 %v1188, %v1178
    %v1839 = vpack.c.b16 %v1189, %v1179
    %v1840 = vpack.c.b16 %v1190, %v1180
    %v1841 = vpack.c.b16 %v1191, %v1181
    %v1842 = vpack.c.b16 %v1192, %v1182
    %v1843 = vpack.c.b16 %v1193, %v1183
    %v1844 = vpack.c.b16 %v1194, %v1184
    %v1845 = vpack.c.b16 %v1195, %v1185
    %v1846 = vpack.c.b16 %v1196, %v1186
    %v1847 = vpack.c.b16 %v1207, %v1197
    %v1848 = vpack.c.b16 %v1208, %v1198
    %v1849 = vpack.c.b16 %v1209, %v1199
    %v1850 = vpack.c.b16 %v1210, %v1200
    %v1851 = vpack.c.b16 %v1211, %v1201
    %v1852 = vpack.c.b16 %v1212, %v1202
    %v1853 = vpack.c.b16 %v1213, %v1203
    %v1854 = vpack.c.b16 %v1214, %v1204
    %v1855 = vpack.c.b16 %v1215, %v1205
    %v1856 = vpack.c.b16 %v1216, %v1206
    %v1857 = vpack.c.b16 %v1227, %v1217
    %v1858 = vpack.c.b16 %v1228, %v1218
    %v1859 = vpack.c.b16 %v1229, %v1219
    %v1860 = vpack.c.b16 %v1230, %v1220
    %v1861 = vpack.c.b16 %v1231, %v1221
    %v1862 = vpack.c.b16 %v1232, %v1222
    %v1863 = vpack.c.b16 %v1233, %v1223
    %v1864 = vpack.c.b16 %v1234, %v1224
    %v1865 = vpack.c.b16 %v1235, %v1225
    %v1866 = vpack.c.b16 %v1236, %v1226
    %v1867 = vpack.c.b16 %v1247, %v1237
    %v1868 = vpack.c.b16 %v1248, %v1238
    %v1869 = vpack.c.b16 %v1249, %v1239
    %v1870 = vpack.c.b16 %v1250, %v1240
    %v1871 = vpack.c.b16 %v1251, %v1241
    %v1872 = vpack.c.b16 %v1252, %v1242
    %v1873 = vpack.c.b16 %v1253, %v1243
    %v1874 = vpack.c.b16 %v1254, %v1244
    %v1875 = vpack.c.b16 %v1255, %v1245
    %v1876 = vpack.c.b16 %v1256, %v1246
    %v1877 = vpack.c.b16 %v1267, %v1257
    %v1878 = vpack.c.b16 %v1268, %v1258
    %v1879 = vpack.c.b16 %v1269, %v1259
    %v1880 = vpack.c.b16 %v1270, %v1260
    %v1881 = vpack.c.b16 %v1271, %v1261
    %v1882 = vpack.c.b16 %v1272, %v1262
    %v1883 = vpack.c.b16 %v1273, %v1263
    %v1884 = vpack.c.b16 %v1274, %v1264
    %v1885 = vpack.c.b16 %v1275, %v1265
    %v1886 = vpack.c.b16 %v1276, %v1266
    %v1887 = vpack.c.b16 %v1287, %v1277
    %v1888 = vpack.c.b16 %v1288, %v1278
    %v1889 = vpack.c.b16 %v1289, %v1279
    %v1890 = vpack.c.b16 %v1290, %v1280
    %v1891 = vpack.c.b16 %v1291, %v1281
    %v1892 = vpack.c.b16 %v1292, %v1282
    %v1893 = vpack.c.b16 %v1293, %v1283
    %v1894 = vpack.c.b16 %v1294, %v1284
    %v1895 = vpack.c.b16 %v1295, %v1285
    %v1896 = vpack.c.b16 %v1296, %v1286
    %v1897 = vpack.c.b16 %v1307, %v1297
    %v1898 = vpack.c.b16 %v1308, %v1298
    %v1899 = vpack.c.b16 %v1309, %v1299
    %v1900 = vpack.c.b16 %v1310, %v1300
    %v1901 = vpack.c.b16 %v1311, %v1301
    %v1902 = vpack.c.b16 %v1312, %v1302
    %v1903 = vpack.c.b16 %v1313, %v1303
    %v1904 = vpack.c.b16 %v1314, %v1304
    %v1905 = vpack.c.b16 %v1315, %v1305
    %v1906 = vpack.c.b16 %v1316, %v1306
    %v1907 = vpack.c.b16 %v1327, %v1317
    %v1908 = vpack.c.b16 %v1328, %v1318
    %v1909 = vpack.c.b16 %v1329, %v1319
    %v1910 = vpack.c.b16 %v1330, %v1320
    %v1911 = vpack.c.b16 %v1331, %v1321
    %v1912 = vpack.c.b16 %v1332, %v1322
    %v1913 = vpack.c.b16 %v1333, %v1323
    %v1914 = vpack.c.b16 %v1334, %v1324
    %v1915 = vpack.c.b16 %v1335, %v1325
    %v1916 = vpack.c.b16 %v1336, %v1326
    %v1917 = vpack.c.b16 %v1347, %v1337
    %v1918 = vpack.c.b16 %v1348, %v1338
    %v1919 = vpack.c.b16 %v1349, %v1339
    %v1920 = vpack.c.b16 %v1350, %v1340
    %v1921 = vpack.c.b16 %v1351, %v1341
    %v1922 = vpack.c.b16 %v1352, %v1342
    %v1923 = vpack.c.b16 %v1353, %v1343
    %v1924 = vpack.c.b16 %v1354, %v1344
    %v1925 = vpack.c.b16 %v1355, %v1345
    %v1926 = vpack.c.b16 %v1356, %v1346
    %v1927 = vpack.c.b16 %v1367, %v1357
    %v1928 = vpack.c.b16 %v1368, %v1358
    %v1929 = vpack.c.b16 %v1369, %v1359
    %v1930 = vpack.c.b16 %v1370, %v1360
    %v1931 = vpack.c.b16 %v1371, %v1361
    %v1932 = vpack.c.b16 %v1372, %v1362
    %v1933 = vpack.c.b16 %v1373, %v1363
    %v1934 = vpack.c.b16 %v1374, %v1364
    %v1935 = vpack.c.b16 %v1375, %v1365
    %v1936 = vpack.c.b16 %v1376, %v1366
    %v1937 = vpack.c.b16 %v1387, %v1377
    %v1938 = vpack.c.b16 %v1388, %v1378
    %v1939 = vpack.c.b16 %v1389, %v1379
    %v1940 = vpack.c.b16 %v1390, %v1380
    %v1941 = vpack.c.b16 %v1391, %v1381
    %v1942 = vpack.c.b16 %v1392, %v1382
    %v1943 = vpack.c.b16 %v1393, %v1383
    %v1944 = vpack.c.b16 %v1394, %v1384
    %v1945 = vpack.c.b16 %v1395, %v1385
    %v1946 = vpack.c.b16 %v1396, %v1386
    %v1947 = vpack.c.b16 %v1407, %v1397
    %v1948 = vpack.c.b16 %v1408, %v1398
    %v1949 = vpack.c.b16 %v1409, %v1399
    %v1950 = vpack.c.b16 %v1410, %v1400
    %v1951 = vpack.c.b16 %v1411, %v1401
    %v1952 = vpack.c.b16 %v1412, %v1402
    %v1953 = vpack.c.b16 %v1413, %v1403
    %v1954 = vpack.c.b16 %v1414, %v1404
    %v1955 = vpack.c.b16 %v1415, %v1405
    %v1956 = vpack.c.b16 %v1416, %v1406
    %v1957 = vpack.c.b16 %v1427, %v1417
    %v1958 = vpack.c.b16 %v1428, %v1418
    %v1959 = vpack.c.b16 %v1429, %v1419
    %v1960 = vpack.c.b16 %v1430, %v1420
    %v1961 = vpack.c.b16 %v1431, %v1421
    %v1962 = vpack.c.b16 %v1432, %v1422
    %v1963 = vpack.c.b16 %v1433, %v1423
    %v1964 = vpack.c.b16 %v1434, %v1424
    %v1965 = vpack.c.b16 %v1435, %v1425
    %v1966 = vpack.c.b16 %v1436, %v1426
    %v1967 = vpack.c.b16 %v1447, %v1437
    %v1968 = vpack.c.b16 %v1448, %v1438
    %v1969 = vpack.c.b16 %v1449, %v1439
    %v1970 = vpack.c.b16 %v1450, %v1440
    %v1971 = vpack.c.b16 %v1451, %v1441
    %v1972 = vpack.c.b16 %v1452, %v1442
    %v1973 = vpack.c.b16 %v1453, %v1443
    %v1974 = vpack.c.b16 %v1454, %v1444
    %v1975 = vpack.c.b16 %v1455, %v1445
    %v1976 = vpack.c.b16 %v1456, %v1446
    %v1977 = vpack.c.b16 %v1467, %v1457
    %v1978 = vpack.c.b16 %v1468, %v1458
    %v1979 = vpack.c.b16 %v1469, %v1459
    %v1980 = vpack.c.b16 %v1470, %v1460
    %v1981 = vpack.c.b16 %v1471, %v1461
    %v1982 = vpack.c.b16 %v1472, %v1462
    %v1983 = vpack.c.b16 %v1473, %v1463
    %v1984 = vpack.c.b16 %v1474, %v1464
    %v1985 = vpack.c.b16 %v1475, %v1465
    %v1986 = vpack.c.b16 %v1476, %v1466
    %v1987 = vpack.c.b16 %v1487, %v1477
    %v1988 = vpack.c.b16 %v1488, %v1478
    %v1989 = vpack.c.b16 %v1489, %v1479
    %v1990 = vpack.c.b16 %v1490, %v1480
    %v1991 = vpack.c.b16 %v1491, %v1481
    %v1992 = vpack.c.b16 %v1492, %v1482
    %v1993 = vpack.c.b16 %v1493, %v1483
    %v1994 = vpack.c.b16 %v1494, %v1484
    %v1995 = vpack.c.b16 %v1495, %v1485
    %v1996 = vpack.c.b16 %v1496, %v1486
    %v1997 = vpack.c.b16 %v1507, %v1497
    %v1998 = vpack.c.b16 %v1508, %v1498
    %v1999 = vpack.c.b16 %v1509, %v1499
    %v2000 = vpack.c.b16 %v1510, %v1500
    %v2001 = vpack.c.b16 %v1511, %v1501
    %v2002 = vpack.c.b16 %v1512, %v1502
    %v2003 = vpack.c.b16 %v1513, %v1503
    %v2004 = vpack.c.b16 %v1514, %v1504
    %v2005 = vpack.c.b16 %v1515, %v1505
    %v2006 = vpack.c.b16 %v1516, %v1506
    %v2007 = vpack.c.b16 %v1527, %v1517
    %v2008 = vpack.c.b16 %v1528, %v1518
    %v2009 = vpack.c.b16 %v1529, %v1519
    %v2010 = vpack.c.b16 %v1530, %v1520
    %v2011 = vpack.c.b16 %v1531, %v1521
    %v2012 = vpack.c.b16 %v1532, %v1522
    %v2013 = vpack.c.b16 %v1533, %v1523
    %v2014 = vpack.c.b16 %v1534, %v1524
    %v2015 = vpack.c.b16 %v1535, %v1525
    %v2016 = vpack.c.b16 %v1536, %v1526
    %v2017 = vpack.c.b16 %v1547, %v1537
    %v2018 = vpack.c.b16 %v1548, %v1538
    %v2019 = vpack.c.b16 %v1549, %v1539
    %v2020 = vpack.c.b16 %v1550, %v1540
    %v2021 = vpack.c.b16 %v1551, %v1541
    %v2022 = vpack.c.b16 %v1552, %v1542
    %v2023 = vpack.c.b16 %v1553, %v1543
    %v2024 = vpack.c.b16 %v1554, %v1544
    %v2025 = vpack.c.b16 %v1555, %v1545
    %v2026 = vpack.c.b16 %v1556, %v1546
    %v2027 = vpack.c.b16 %v1567, %v1557
    %v2028 = vpack.c.b16 %v1568, %v1558
    %v2029 = vpack.c.b16 %v1569, %v1559
    %v2030 = vpack.c.b16 %v1570, %v1560
    %v2031 = vpack.c.b16 %v1571, %v1561
    %v2032 = vpack.c.b16 %v1572, %v1562
    %v2033 = vpack.c.b16 %v1573, %v1563
    %v2034 = vpack.c.b16 %v1574, %v1564
    %v2035 = vpack.c.b16 %v1575, %v1565
    %v2036 = vpack.c.b16 %v1576, %v1566
    %v2037 = vpack.c.b16 %v1587, %v1577
    %v2038 = vpack.c.b16 %v1588, %v1578
    %v2039 = vpack.c.b16 %v1589, %v1579
    %v2040 = vpack.c.b16 %v1590, %v1580
    %v2041 = vpack.c.b16 %v1591, %v1581
    %v2042 = vpack.c.b16 %v1592, %v1582
    %v2043 = vpack.c.b16 %v1593, %v1583
    %v2044 = vpack.c.b16 %v1594, %v1584
    %v2045 = vpack.c.b16 %v1595, %v1585
    %v2046 = vpack.c.b16 %v1596, %v1586
    %v2047 = vpack.c.b16 %v1607, %v1597
    %v2048 = vpack.c.b16 %v1608, %v1598
    %v2049 = vpack.c.b16 %v1609, %v1599
    %v2050 = vpack.c.b16 %v1610, %v1600
    %v2051 = vpack.c.b16 %v1611, %v1601
    %v2052 = vpack.c.b16 %v1612, %v1602
    %v2053 = vpack.c.b16 %v1613, %v1603
    %v2054 = vpack.c.b16 %v1614, %v1604
    %v2055 = vpack.c.b16 %v1615, %v1605
    %v2056 = vpack.c.b16 %v1616, %v1606
    %v2057 = vpack.c.b16 %v1627, %v1617
    %v2058 = vpack.c.b16 %v1628, %v1618
    %v2059 = vpack.c.b16 %v1629, %v1619
    %v2060 = vpack.c.b16 %v1630, %v1620
    %v2061 = vpack.c.b16 %v1631, %v1621
    %v2062 = vpack.c.b16 %v1632, %v1622
    %v2063 = vpack.c.b16 %v1633, %v1623
    %v2064 = vpack.c.b16 %v1634, %v1624
    %v2065 = vpack.c.b16 %v1635, %v1625
    %v2066 = vpack.c.b16 %v1636, %v1626
    %v2067 = vpack.c.b16 %v1647, %v1637
    %v2068 = vpack.c.b16 %v1648, %v1638
    %v2069 = vpack.c.b16 %v1649, %v1639
    %v2070 = vpack.c.b16 %v1650, %v1640
    %v2071 = vpack.c.b16 %v1651, %v1641
    %v2072 = vpack.c.b16 %v1652, %v1642
    %v2073 = vpack.c.b16 %v1653, %v1643
    %v2074 = vpack.c.b16 %v1654, %v1644
    %v2075 = vpack.c.b16 %v1655, %v1645
    %v2076 = vpack.c.b16 %v1656, %v1646
    %v2077 = vpack.c.b16 %v1667, %v1657
    %v2078 = vpack.c.b16 %v1668, %v1658
    %v2079 = vpack.c.b16 %v1669, %v1659
    %v2080 = vpack.c.b16 %v1670, %v1660
    %v2081 = vpack.c.b16 %v1671, %v1661
    %v2082 = vpack.c.b16 %v1672, %v1662
    %v2083 = vpack.c.b16 %v1673, %v1663
    %v2084 = vpack.c.b16 %v1674, %v1664
    %v2085 = vpack.c.b16 %v1675, %v1665
    %v2086 = vpack.c.b16 %v1676, %v1666
    %v2087 = vpack.c.b16 %v1687, %v1677
    %v2088 = vpack.c.b16 %v1688, %v1678
    %v2089 = vpack.c.b16 %v1689, %v1679
    %v2090 = vpack.c.b16 %v1690, %v1680
    %v2091 = vpack.c.b16 %v1691, %v1681
    %v2092 = vpack.c.b16 %v1692, %v1682
    %v2093 = vpack.c.b16 %v1693, %v1683
    %v2094 = vpack.c.b16 %v1694, %v1684
    %v2095 = vpack.c.b16 %v1695, %v1685
    %v2096 = vpack.c.b16 %v1696, %v1686
    %2497 = vmatpush.bf16.msra.mxu0 %v1767
    %2498 = vmatpush.bf16.msra.mxu0 %v1757
    %2499 = vmatpush.bf16.msra.mxu0 %v1747
    %2500 = vmatpush.bf16.msra.mxu0 %v1737
    %2501 = vmatpush.bf16.msra.mxu0 %v1727
    %2502 = vmatpush.bf16.msra.mxu0 %v1717
    %2503 = vmatpush.bf16.msra.mxu0 %v1707
    %2504 = vmatpush.bf16.msra.mxu0 %v1697
    %2505 = vmatmul.bf16.gmra.mxu0 %v487
    %v2506 = vpop.f32.mrf.mxu0
    %v2507 = vadd.f32 %v459, %v2506
    %v2508 = vpop.f32.mrf.mxu0
    %2509 = vdwg.mxu0
    %2510 = vmatpush.bf16.msra.mxu0 %v1847
    %2511 = vmatpush.bf16.msra.mxu0 %v1837
    %2512 = vmatpush.bf16.msra.mxu0 %v1827
    %2513 = vmatpush.bf16.msra.mxu0 %v1817
    %2514 = vmatpush.bf16.msra.mxu0 %v1807
    %2515 = vmatpush.bf16.msra.mxu0 %v1797
    %2516 = vmatpush.bf16.msra.mxu0 %v1787
    %2517 = vmatpush.bf16.msra.mxu0 %v1777
    %2518 = vmatmul.bf16.gmra.mxu0 %v488
    %v2519 = vpop.f32.mrf.mxu0
    %v2520 = vadd.f32 %v2507, %v2519
    %v2521 = vpop.f32.mrf.mxu0
    %2522 = vdwg.mxu0
    %2523 = vmatpush.bf16.msra.mxu0 %v1927
    %2524 = vmatpush.bf16.msra.mxu0 %v1917
    %2525 = vmatpush.bf16.msra.mxu0 %v1907
    %2526 = vmatpush.bf16.msra.mxu0 %v1897
    %2527 = vmatpush.bf16.msra.mxu0 %v1887
    %2528 = vmatpush.bf16.msra.mxu0 %v1877
    %2529 = vmatpush.bf16.msra.mxu0 %v1867
    %2530 = vmatpush.bf16.msra.mxu0 %v1857
    %2531 = vmatmul.bf16.gmra.mxu0 %v489
    %v2532 = vpop.f32.mrf.mxu0
    %v2533 = vadd.f32 %v2520, %v2532
    %v2534 = vpop.f32.mrf.mxu0
    %2535 = vdwg.mxu0
    %2536 = vmatpush.bf16.msra.mxu0 %v2007
    %2537 = vmatpush.bf16.msra.mxu0 %v1997
    %2538 = vmatpush.bf16.msra.mxu0 %v1987
    %2539 = vmatpush.bf16.msra.mxu0 %v1977
    %2540 = vmatpush.bf16.msra.mxu0 %v1967
    %2541 = vmatpush.bf16.msra.mxu0 %v1957
    %2542 = vmatpush.bf16.msra.mxu0 %v1947
    %2543 = vmatpush.bf16.msra.mxu0 %v1937
    %2544 = vmatmul.bf16.gmra.mxu0 %v490
    %v2545 = vpop.f32.mrf.mxu0
    %v2546 = vadd.f32 %v2533, %v2545
    %v2547 = vpop.f32.mrf.mxu0
    %2548 = vdwg.mxu0
    %2549 = vmatpush.bf16.msra.mxu0 %v2087
    %2550 = vmatpush.bf16.msra.mxu0 %v2077
    %2551 = vmatpush.bf16.msra.mxu0 %v2067
    %2552 = vmatpush.bf16.msra.mxu0 %v2057
    %2553 = vmatpush.bf16.msra.mxu0 %v2047
    %2554 = vmatpush.bf16.msra.mxu0 %v2037
    %2555 = vmatpush.bf16.msra.mxu0 %v2027
    %2556 = vmatpush.bf16.msra.mxu0 %v2017
    %2557 = vmatmul.bf16.gmra.mxu0 %v491
    %v2558 = vpop.f32.mrf.mxu0
    %v2559 = vadd.f32 %v2546, %v2558
    %v2560 = vpop.f32.mrf.mxu0
    %2561 = vdwg.mxu0
    %2562 = vmatpush.bf16.msra.mxu0 %v1768
    %2563 = vmatpush.bf16.msra.mxu0 %v1758
    %2564 = vmatpush.bf16.msra.mxu0 %v1748
    %2565 = vmatpush.bf16.msra.mxu0 %v1738
    %2566 = vmatpush.bf16.msra.mxu0 %v1728
    %2567 = vmatpush.bf16.msra.mxu0 %v1718
    %2568 = vmatpush.bf16.msra.mxu0 %v1708
    %2569 = vmatpush.bf16.msra.mxu0 %v1698
    %2570 = vmatmul.bf16.gmra.mxu0 %v487
    %v2571 = vpop.f32.mrf.mxu0
    %v2572 = vadd.f32 %v460, %v2571
    %v2573 = vpop.f32.mrf.mxu0
    %2574 = vdwg.mxu0
    %2575 = vmatpush.bf16.msra.mxu0 %v1848
    %2576 = vmatpush.bf16.msra.mxu0 %v1838
    %2577 = vmatpush.bf16.msra.mxu0 %v1828
    %2578 = vmatpush.bf16.msra.mxu0 %v1818
    %2579 = vmatpush.bf16.msra.mxu0 %v1808
    %2580 = vmatpush.bf16.msra.mxu0 %v1798
    %2581 = vmatpush.bf16.msra.mxu0 %v1788
    %2582 = vmatpush.bf16.msra.mxu0 %v1778
    %2583 = vmatmul.bf16.gmra.mxu0 %v488
    %v2584 = vpop.f32.mrf.mxu0
    %v2585 = vadd.f32 %v2572, %v2584
    %v2586 = vpop.f32.mrf.mxu0
    %2587 = vdwg.mxu0
    %2588 = vmatpush.bf16.msra.mxu0 %v1928
    %2589 = vmatpush.bf16.msra.mxu0 %v1918
    %2590 = vmatpush.bf16.msra.mxu0 %v1908
    %2591 = vmatpush.bf16.msra.mxu0 %v1898
    %2592 = vmatpush.bf16.msra.mxu0 %v1888
    %2593 = vmatpush.bf16.msra.mxu0 %v1878
    %2594 = vmatpush.bf16.msra.mxu0 %v1868
    %2595 = vmatpush.bf16.msra.mxu0 %v1858
    %2596 = vmatmul.bf16.gmra.mxu0 %v489
    %v2597 = vpop.f32.mrf.mxu0
    %v2598 = vadd.f32 %v2585, %v2597
    %v2599 = vpop.f32.mrf.mxu0
    %2600 = vdwg.mxu0
    %2601 = vmatpush.bf16.msra.mxu0 %v2008
    %2602 = vmatpush.bf16.msra.mxu0 %v1998
    %2603 = vmatpush.bf16.msra.mxu0 %v1988
    %2604 = vmatpush.bf16.msra.mxu0 %v1978
    %2605 = vmatpush.bf16.msra.mxu0 %v1968
    %2606 = vmatpush.bf16.msra.mxu0 %v1958
    %2607 = vmatpush.bf16.msra.mxu0 %v1948
    %2608 = vmatpush.bf16.msra.mxu0 %v1938
    %2609 = vmatmul.bf16.gmra.mxu0 %v490
    %v2610 = vpop.f32.mrf.mxu0
    %v2611 = vadd.f32 %v2598, %v2610
    %v2612 = vpop.f32.mrf.mxu0
    %2613 = vdwg.mxu0
    %2614 = vmatpush.bf16.msra.mxu0 %v2088
    %2615 = vmatpush.bf16.msra.mxu0 %v2078
    %2616 = vmatpush.bf16.msra.mxu0 %v2068
    %2617 = vmatpush.bf16.msra.mxu0 %v2058
    %2618 = vmatpush.bf16.msra.mxu0 %v2048
    %2619 = vmatpush.bf16.msra.mxu0 %v2038
    %2620 = vmatpush.bf16.msra.mxu0 %v2028
    %2621 = vmatpush.bf16.msra.mxu0 %v2018
    %2622 = vmatmul.bf16.gmra.mxu0 %v491
    %v2623 = vpop.f32.mrf.mxu0
    %v2624 = vadd.f32 %v2611, %v2623
    %v2625 = vpop.f32.mrf.mxu0
    %2626 = vdwg.mxu0
    %2627 = vmatpush.bf16.msra.mxu0 %v1769
    %2628 = vmatpush.bf16.msra.mxu0 %v1759
    %2629 = vmatpush.bf16.msra.mxu0 %v1749
    %2630 = vmatpush.bf16.msra.mxu0 %v1739
    %2631 = vmatpush.bf16.msra.mxu0 %v1729
    %2632 = vmatpush.bf16.msra.mxu0 %v1719
    %2633 = vmatpush.bf16.msra.mxu0 %v1709
    %2634 = vmatpush.bf16.msra.mxu0 %v1699
    %2635 = vmatmul.bf16.gmra.mxu0 %v487
    %v2636 = vpop.f32.mrf.mxu0
    %v2637 = vadd.f32 %v461, %v2636
    %v2638 = vpop.f32.mrf.mxu0
    %2639 = vdwg.mxu0
    %2640 = vmatpush.bf16.msra.mxu0 %v1849
    %2641 = vmatpush.bf16.msra.mxu0 %v1839
    %2642 = vmatpush.bf16.msra.mxu0 %v1829
    %2643 = vmatpush.bf16.msra.mxu0 %v1819
    %2644 = vmatpush.bf16.msra.mxu0 %v1809
    %2645 = vmatpush.bf16.msra.mxu0 %v1799
    %2646 = vmatpush.bf16.msra.mxu0 %v1789
    %2647 = vmatpush.bf16.msra.mxu0 %v1779
    %2648 = vmatmul.bf16.gmra.mxu0 %v488
    %v2649 = vpop.f32.mrf.mxu0
    %v2650 = vadd.f32 %v2637, %v2649
    %v2651 = vpop.f32.mrf.mxu0
    %2652 = vdwg.mxu0
    %2653 = vmatpush.bf16.msra.mxu0 %v1929
    %2654 = vmatpush.bf16.msra.mxu0 %v1919
    %2655 = vmatpush.bf16.msra.mxu0 %v1909
    %2656 = vmatpush.bf16.msra.mxu0 %v1899
    %2657 = vmatpush.bf16.msra.mxu0 %v1889
    %2658 = vmatpush.bf16.msra.mxu0 %v1879
    %2659 = vmatpush.bf16.msra.mxu0 %v1869
    %2660 = vmatpush.bf16.msra.mxu0 %v1859
    %2661 = vmatmul.bf16.gmra.mxu0 %v489
    %v2662 = vpop.f32.mrf.mxu0
    %v2663 = vadd.f32 %v2650, %v2662
    %v2664 = vpop.f32.mrf.mxu0
    %2665 = vdwg.mxu0
    %2666 = vmatpush.bf16.msra.mxu0 %v2009
    %2667 = vmatpush.bf16.msra.mxu0 %v1999
    %2668 = vmatpush.bf16.msra.mxu0 %v1989
    %2669 = vmatpush.bf16.msra.mxu0 %v1979
    %2670 = vmatpush.bf16.msra.mxu0 %v1969
    %2671 = vmatpush.bf16.msra.mxu0 %v1959
    %2672 = vmatpush.bf16.msra.mxu0 %v1949
    %2673 = vmatpush.bf16.msra.mxu0 %v1939
    %2674 = vmatmul.bf16.gmra.mxu0 %v490
    %v2675 = vpop.f32.mrf.mxu0
    %v2676 = vadd.f32 %v2663, %v2675
    %v2677 = vpop.f32.mrf.mxu0
    %2678 = vdwg.mxu0
    %2679 = vmatpush.bf16.msra.mxu0 %v2089
    %2680 = vmatpush.bf16.msra.mxu0 %v2079
    %2681 = vmatpush.bf16.msra.mxu0 %v2069
    %2682 = vmatpush.bf16.msra.mxu0 %v2059
    %2683 = vmatpush.bf16.msra.mxu0 %v2049
    %2684 = vmatpush.bf16.msra.mxu0 %v2039
    %2685 = vmatpush.bf16.msra.mxu0 %v2029
    %2686 = vmatpush.bf16.msra.mxu0 %v2019
    %2687 = vmatmul.bf16.gmra.mxu0 %v491
    %v2688 = vpop.f32.mrf.mxu0
    %v2689 = vadd.f32 %v2676, %v2688
    %v2690 = vpop.f32.mrf.mxu0
    %2691 = vdwg.mxu0
    %2692 = vmatpush.bf16.msra.mxu0 %v1770
    %2693 = vmatpush.bf16.msra.mxu0 %v1760
    %2694 = vmatpush.bf16.msra.mxu0 %v1750
    %2695 = vmatpush.bf16.msra.mxu0 %v1740
    %2696 = vmatpush.bf16.msra.mxu0 %v1730
    %2697 = vmatpush.bf16.msra.mxu0 %v1720
    %2698 = vmatpush.bf16.msra.mxu0 %v1710
    %2699 = vmatpush.bf16.msra.mxu0 %v1700
    %2700 = vmatmul.bf16.gmra.mxu0 %v487
    %v2701 = vpop.f32.mrf.mxu0
    %v2702 = vadd.f32 %v462, %v2701
    %v2703 = vpop.f32.mrf.mxu0
    %2704 = vdwg.mxu0
    %2705 = vmatpush.bf16.msra.mxu0 %v1850
    %2706 = vmatpush.bf16.msra.mxu0 %v1840
    %2707 = vmatpush.bf16.msra.mxu0 %v1830
    %2708 = vmatpush.bf16.msra.mxu0 %v1820
    %2709 = vmatpush.bf16.msra.mxu0 %v1810
    %2710 = vmatpush.bf16.msra.mxu0 %v1800
    %2711 = vmatpush.bf16.msra.mxu0 %v1790
    %2712 = vmatpush.bf16.msra.mxu0 %v1780
    %2713 = vmatmul.bf16.gmra.mxu0 %v488
    %v2714 = vpop.f32.mrf.mxu0
    %v2715 = vadd.f32 %v2702, %v2714
    %v2716 = vpop.f32.mrf.mxu0
    %2717 = vdwg.mxu0
    %2718 = vmatpush.bf16.msra.mxu0 %v1930
    %2719 = vmatpush.bf16.msra.mxu0 %v1920
    %2720 = vmatpush.bf16.msra.mxu0 %v1910
    %2721 = vmatpush.bf16.msra.mxu0 %v1900
    %2722 = vmatpush.bf16.msra.mxu0 %v1890
    %2723 = vmatpush.bf16.msra.mxu0 %v1880
    %2724 = vmatpush.bf16.msra.mxu0 %v1870
    %2725 = vmatpush.bf16.msra.mxu0 %v1860
    %2726 = vmatmul.bf16.gmra.mxu0 %v489
    %v2727 = vpop.f32.mrf.mxu0
    %v2728 = vadd.f32 %v2715, %v2727
    %v2729 = vpop.f32.mrf.mxu0
    %2730 = vdwg.mxu0
    %2731 = vmatpush.bf16.msra.mxu0 %v2010
    %2732 = vmatpush.bf16.msra.mxu0 %v2000
    %2733 = vmatpush.bf16.msra.mxu0 %v1990
    %2734 = vmatpush.bf16.msra.mxu0 %v1980
    %2735 = vmatpush.bf16.msra.mxu0 %v1970
    %2736 = vmatpush.bf16.msra.mxu0 %v1960
    %2737 = vmatpush.bf16.msra.mxu0 %v1950
    %2738 = vmatpush.bf16.msra.mxu0 %v1940
    %2739 = vmatmul.bf16.gmra.mxu0 %v490
    %v2740 = vpop.f32.mrf.mxu0
    %v2741 = vadd.f32 %v2728, %v2740
    %v2742 = vpop.f32.mrf.mxu0
    %2743 = vdwg.mxu0
    %2744 = vmatpush.bf16.msra.mxu0 %v2090
    %2745 = vmatpush.bf16.msra.mxu0 %v2080
    %2746 = vmatpush.bf16.msra.mxu0 %v2070
    %2747 = vmatpush.bf16.msra.mxu0 %v2060
    %2748 = vmatpush.bf16.msra.mxu0 %v2050
    %2749 = vmatpush.bf16.msra.mxu0 %v2040
    %2750 = vmatpush.bf16.msra.mxu0 %v2030
    %2751 = vmatpush.bf16.msra.mxu0 %v2020
    %2752 = vmatmul.bf16.gmra.mxu0 %v491
    %v2753 = vpop.f32.mrf.mxu0
    %v2754 = vadd.f32 %v2741, %v2753
    %v2755 = vpop.f32.mrf.mxu0
    %2756 = vdwg.mxu0
    %2757 = vmatpush.bf16.msra.mxu0 %v1771
    %2758 = vmatpush.bf16.msra.mxu0 %v1761
    %2759 = vmatpush.bf16.msra.mxu0 %v1751
    %2760 = vmatpush.bf16.msra.mxu0 %v1741
    %2761 = vmatpush.bf16.msra.mxu0 %v1731
    %2762 = vmatpush.bf16.msra.mxu0 %v1721
    %2763 = vmatpush.bf16.msra.mxu0 %v1711
    %2764 = vmatpush.bf16.msra.mxu0 %v1701
    %2765 = vmatmul.bf16.gmra.mxu0 %v487
    %v2766 = vpop.f32.mrf.mxu0
    %v2767 = vadd.f32 %v463, %v2766
    %v2768 = vpop.f32.mrf.mxu0
    %2769 = vdwg.mxu0
    %2770 = vmatpush.bf16.msra.mxu0 %v1851
    %2771 = vmatpush.bf16.msra.mxu0 %v1841
    %2772 = vmatpush.bf16.msra.mxu0 %v1831
    %2773 = vmatpush.bf16.msra.mxu0 %v1821
    %2774 = vmatpush.bf16.msra.mxu0 %v1811
    %2775 = vmatpush.bf16.msra.mxu0 %v1801
    %2776 = vmatpush.bf16.msra.mxu0 %v1791
    %2777 = vmatpush.bf16.msra.mxu0 %v1781
    %2778 = vmatmul.bf16.gmra.mxu0 %v488
    %v2779 = vpop.f32.mrf.mxu0
    %v2780 = vadd.f32 %v2767, %v2779
    %v2781 = vpop.f32.mrf.mxu0
    %2782 = vdwg.mxu0
    %2783 = vmatpush.bf16.msra.mxu0 %v1931
    %2784 = vmatpush.bf16.msra.mxu0 %v1921
    %2785 = vmatpush.bf16.msra.mxu0 %v1911
    %2786 = vmatpush.bf16.msra.mxu0 %v1901
    %2787 = vmatpush.bf16.msra.mxu0 %v1891
    %2788 = vmatpush.bf16.msra.mxu0 %v1881
    %2789 = vmatpush.bf16.msra.mxu0 %v1871
    %2790 = vmatpush.bf16.msra.mxu0 %v1861
    %2791 = vmatmul.bf16.gmra.mxu0 %v489
    %v2792 = vpop.f32.mrf.mxu0
    %v2793 = vadd.f32 %v2780, %v2792
    %v2794 = vpop.f32.mrf.mxu0
    %2795 = vdwg.mxu0
    %2796 = vmatpush.bf16.msra.mxu0 %v2011
    %2797 = vmatpush.bf16.msra.mxu0 %v2001
    %2798 = vmatpush.bf16.msra.mxu0 %v1991
    %2799 = vmatpush.bf16.msra.mxu0 %v1981
    %2800 = vmatpush.bf16.msra.mxu0 %v1971
    %2801 = vmatpush.bf16.msra.mxu0 %v1961
    %2802 = vmatpush.bf16.msra.mxu0 %v1951
    %2803 = vmatpush.bf16.msra.mxu0 %v1941
    %2804 = vmatmul.bf16.gmra.mxu0 %v490
    %v2805 = vpop.f32.mrf.mxu0
    %v2806 = vadd.f32 %v2793, %v2805
    %v2807 = vpop.f32.mrf.mxu0
    %2808 = vdwg.mxu0
    %2809 = vmatpush.bf16.msra.mxu0 %v2091
    %2810 = vmatpush.bf16.msra.mxu0 %v2081
    %2811 = vmatpush.bf16.msra.mxu0 %v2071
    %2812 = vmatpush.bf16.msra.mxu0 %v2061
    %2813 = vmatpush.bf16.msra.mxu0 %v2051
    %2814 = vmatpush.bf16.msra.mxu0 %v2041
    %2815 = vmatpush.bf16.msra.mxu0 %v2031
    %2816 = vmatpush.bf16.msra.mxu0 %v2021
    %2817 = vmatmul.bf16.gmra.mxu0 %v491
    %v2818 = vpop.f32.mrf.mxu0
    %v2819 = vadd.f32 %v2806, %v2818
    %v2820 = vpop.f32.mrf.mxu0
    %2821 = vdwg.mxu0
    %2822 = vmatpush.bf16.msra.mxu0 %v1772
    %2823 = vmatpush.bf16.msra.mxu0 %v1762
    %2824 = vmatpush.bf16.msra.mxu0 %v1752
    %2825 = vmatpush.bf16.msra.mxu0 %v1742
    %2826 = vmatpush.bf16.msra.mxu0 %v1732
    %2827 = vmatpush.bf16.msra.mxu0 %v1722
    %2828 = vmatpush.bf16.msra.mxu0 %v1712
    %2829 = vmatpush.bf16.msra.mxu0 %v1702
    %2830 = vmatmul.bf16.gmra.mxu0 %v487
    %v2831 = vpop.f32.mrf.mxu0
    %v2832 = vadd.f32 %v464, %v2831
    %v2833 = vpop.f32.mrf.mxu0
    %2834 = vdwg.mxu0
    %2835 = vmatpush.bf16.msra.mxu0 %v1852
    %2836 = vmatpush.bf16.msra.mxu0 %v1842
    %2837 = vmatpush.bf16.msra.mxu0 %v1832
    %2838 = vmatpush.bf16.msra.mxu0 %v1822
    %2839 = vmatpush.bf16.msra.mxu0 %v1812
    %2840 = vmatpush.bf16.msra.mxu0 %v1802
    %2841 = vmatpush.bf16.msra.mxu0 %v1792
    %2842 = vmatpush.bf16.msra.mxu0 %v1782
    %2843 = vmatmul.bf16.gmra.mxu0 %v488
    %v2844 = vpop.f32.mrf.mxu0
    %v2845 = vadd.f32 %v2832, %v2844
    %v2846 = vpop.f32.mrf.mxu0
    %2847 = vdwg.mxu0
    %2848 = vmatpush.bf16.msra.mxu0 %v1932
    %2849 = vmatpush.bf16.msra.mxu0 %v1922
    %2850 = vmatpush.bf16.msra.mxu0 %v1912
    %2851 = vmatpush.bf16.msra.mxu0 %v1902
    %2852 = vmatpush.bf16.msra.mxu0 %v1892
    %2853 = vmatpush.bf16.msra.mxu0 %v1882
    %2854 = vmatpush.bf16.msra.mxu0 %v1872
    %2855 = vmatpush.bf16.msra.mxu0 %v1862
    %2856 = vmatmul.bf16.gmra.mxu0 %v489
    %v2857 = vpop.f32.mrf.mxu0
    %v2858 = vadd.f32 %v2845, %v2857
    %v2859 = vpop.f32.mrf.mxu0
    %2860 = vdwg.mxu0
    %2861 = vmatpush.bf16.msra.mxu0 %v2012
    %2862 = vmatpush.bf16.msra.mxu0 %v2002
    %2863 = vmatpush.bf16.msra.mxu0 %v1992
    %2864 = vmatpush.bf16.msra.mxu0 %v1982
    %2865 = vmatpush.bf16.msra.mxu0 %v1972
    %2866 = vmatpush.bf16.msra.mxu0 %v1962
    %2867 = vmatpush.bf16.msra.mxu0 %v1952
    %2868 = vmatpush.bf16.msra.mxu0 %v1942
    %2869 = vmatmul.bf16.gmra.mxu0 %v490
    %v2870 = vpop.f32.mrf.mxu0
    %v2871 = vadd.f32 %v2858, %v2870
    %v2872 = vpop.f32.mrf.mxu0
    %2873 = vdwg.mxu0
    %2874 = vmatpush.bf16.msra.mxu0 %v2092
    %2875 = vmatpush.bf16.msra.mxu0 %v2082
    %2876 = vmatpush.bf16.msra.mxu0 %v2072
    %2877 = vmatpush.bf16.msra.mxu0 %v2062
    %2878 = vmatpush.bf16.msra.mxu0 %v2052
    %2879 = vmatpush.bf16.msra.mxu0 %v2042
    %2880 = vmatpush.bf16.msra.mxu0 %v2032
    %2881 = vmatpush.bf16.msra.mxu0 %v2022
    %2882 = vmatmul.bf16.gmra.mxu0 %v491
    %v2883 = vpop.f32.mrf.mxu0
    %v2884 = vadd.f32 %v2871, %v2883
    %v2885 = vpop.f32.mrf.mxu0
    %2886 = vdwg.mxu0
    %2887 = vmatpush.bf16.msra.mxu0 %v1773
    %2888 = vmatpush.bf16.msra.mxu0 %v1763
    %2889 = vmatpush.bf16.msra.mxu0 %v1753
    %2890 = vmatpush.bf16.msra.mxu0 %v1743
    %2891 = vmatpush.bf16.msra.mxu0 %v1733
    %2892 = vmatpush.bf16.msra.mxu0 %v1723
    %2893 = vmatpush.bf16.msra.mxu0 %v1713
    %2894 = vmatpush.bf16.msra.mxu0 %v1703
    %2895 = vmatmul.bf16.gmra.mxu0 %v487
    %v2896 = vpop.f32.mrf.mxu0
    %v2897 = vadd.f32 %v465, %v2896
    %v2898 = vpop.f32.mrf.mxu0
    %2899 = vdwg.mxu0
    %2900 = vmatpush.bf16.msra.mxu0 %v1853
    %2901 = vmatpush.bf16.msra.mxu0 %v1843
    %2902 = vmatpush.bf16.msra.mxu0 %v1833
    %2903 = vmatpush.bf16.msra.mxu0 %v1823
    %2904 = vmatpush.bf16.msra.mxu0 %v1813
    %2905 = vmatpush.bf16.msra.mxu0 %v1803
    %2906 = vmatpush.bf16.msra.mxu0 %v1793
    %2907 = vmatpush.bf16.msra.mxu0 %v1783
    %2908 = vmatmul.bf16.gmra.mxu0 %v488
    %v2909 = vpop.f32.mrf.mxu0
    %v2910 = vadd.f32 %v2897, %v2909
    %v2911 = vpop.f32.mrf.mxu0
    %2912 = vdwg.mxu0
    %2913 = vmatpush.bf16.msra.mxu0 %v1933
    %2914 = vmatpush.bf16.msra.mxu0 %v1923
    %2915 = vmatpush.bf16.msra.mxu0 %v1913
    %2916 = vmatpush.bf16.msra.mxu0 %v1903
    %2917 = vmatpush.bf16.msra.mxu0 %v1893
    %2918 = vmatpush.bf16.msra.mxu0 %v1883
    %2919 = vmatpush.bf16.msra.mxu0 %v1873
    %2920 = vmatpush.bf16.msra.mxu0 %v1863
    %2921 = vmatmul.bf16.gmra.mxu0 %v489
    %v2922 = vpop.f32.mrf.mxu0
    %v2923 = vadd.f32 %v2910, %v2922
    %v2924 = vpop.f32.mrf.mxu0
    %2925 = vdwg.mxu0
    %2926 = vmatpush.bf16.msra.mxu0 %v2013
    %2927 = vmatpush.bf16.msra.mxu0 %v2003
    %2928 = vmatpush.bf16.msra.mxu0 %v1993
    %2929 = vmatpush.bf16.msra.mxu0 %v1983
    %2930 = vmatpush.bf16.msra.mxu0 %v1973
    %2931 = vmatpush.bf16.msra.mxu0 %v1963
    %2932 = vmatpush.bf16.msra.mxu0 %v1953
    %2933 = vmatpush.bf16.msra.mxu0 %v1943
    %2934 = vmatmul.bf16.gmra.mxu0 %v490
    %v2935 = vpop.f32.mrf.mxu0
    %v2936 = vadd.f32 %v2923, %v2935
    %v2937 = vpop.f32.mrf.mxu0
    %2938 = vdwg.mxu0
    %2939 = vmatpush.bf16.msra.mxu0 %v2093
    %2940 = vmatpush.bf16.msra.mxu0 %v2083
    %2941 = vmatpush.bf16.msra.mxu0 %v2073
    %2942 = vmatpush.bf16.msra.mxu0 %v2063
    %2943 = vmatpush.bf16.msra.mxu0 %v2053
    %2944 = vmatpush.bf16.msra.mxu0 %v2043
    %2945 = vmatpush.bf16.msra.mxu0 %v2033
    %2946 = vmatpush.bf16.msra.mxu0 %v2023
    %2947 = vmatmul.bf16.gmra.mxu0 %v491
    %v2948 = vpop.f32.mrf.mxu0
    %v2949 = vadd.f32 %v2936, %v2948
    %v2950 = vpop.f32.mrf.mxu0
    %2951 = vdwg.mxu0
    %2952 = vmatpush.bf16.msra.mxu0 %v1774
    %2953 = vmatpush.bf16.msra.mxu0 %v1764
    %2954 = vmatpush.bf16.msra.mxu0 %v1754
    %2955 = vmatpush.bf16.msra.mxu0 %v1744
    %2956 = vmatpush.bf16.msra.mxu0 %v1734
    %2957 = vmatpush.bf16.msra.mxu0 %v1724
    %2958 = vmatpush.bf16.msra.mxu0 %v1714
    %2959 = vmatpush.bf16.msra.mxu0 %v1704
    %2960 = vmatmul.bf16.gmra.mxu0 %v487
    %v2961 = vpop.f32.mrf.mxu0
    %v2962 = vadd.f32 %v466, %v2961
    %v2963 = vpop.f32.mrf.mxu0
    %2964 = vdwg.mxu0
    %2965 = vmatpush.bf16.msra.mxu0 %v1854
    %2966 = vmatpush.bf16.msra.mxu0 %v1844
    %2967 = vmatpush.bf16.msra.mxu0 %v1834
    %2968 = vmatpush.bf16.msra.mxu0 %v1824
    %2969 = vmatpush.bf16.msra.mxu0 %v1814
    %2970 = vmatpush.bf16.msra.mxu0 %v1804
    %2971 = vmatpush.bf16.msra.mxu0 %v1794
    %2972 = vmatpush.bf16.msra.mxu0 %v1784
    %2973 = vmatmul.bf16.gmra.mxu0 %v488
    %v2974 = vpop.f32.mrf.mxu0
    %v2975 = vadd.f32 %v2962, %v2974
    %v2976 = vpop.f32.mrf.mxu0
    %2977 = vdwg.mxu0
    %2978 = vmatpush.bf16.msra.mxu0 %v1934
    %2979 = vmatpush.bf16.msra.mxu0 %v1924
    %2980 = vmatpush.bf16.msra.mxu0 %v1914
    %2981 = vmatpush.bf16.msra.mxu0 %v1904
    %2982 = vmatpush.bf16.msra.mxu0 %v1894
    %2983 = vmatpush.bf16.msra.mxu0 %v1884
    %2984 = vmatpush.bf16.msra.mxu0 %v1874
    %2985 = vmatpush.bf16.msra.mxu0 %v1864
    %2986 = vmatmul.bf16.gmra.mxu0 %v489
    %v2987 = vpop.f32.mrf.mxu0
    %v2988 = vadd.f32 %v2975, %v2987
    %v2989 = vpop.f32.mrf.mxu0
    %2990 = vdwg.mxu0
    %2991 = vmatpush.bf16.msra.mxu0 %v2014
    %2992 = vmatpush.bf16.msra.mxu0 %v2004
    %2993 = vmatpush.bf16.msra.mxu0 %v1994
    %2994 = vmatpush.bf16.msra.mxu0 %v1984
    %2995 = vmatpush.bf16.msra.mxu0 %v1974
    %2996 = vmatpush.bf16.msra.mxu0 %v1964
    %2997 = vmatpush.bf16.msra.mxu0 %v1954
    %2998 = vmatpush.bf16.msra.mxu0 %v1944
    %2999 = vmatmul.bf16.gmra.mxu0 %v490
    %v3000 = vpop.f32.mrf.mxu0
    %v3001 = vadd.f32 %v2988, %v3000
    %v3002 = vpop.f32.mrf.mxu0
    %3003 = vdwg.mxu0
    %3004 = vmatpush.bf16.msra.mxu0 %v2094
    %3005 = vmatpush.bf16.msra.mxu0 %v2084
    %3006 = vmatpush.bf16.msra.mxu0 %v2074
    %3007 = vmatpush.bf16.msra.mxu0 %v2064
    %3008 = vmatpush.bf16.msra.mxu0 %v2054
    %3009 = vmatpush.bf16.msra.mxu0 %v2044
    %3010 = vmatpush.bf16.msra.mxu0 %v2034
    %3011 = vmatpush.bf16.msra.mxu0 %v2024
    %3012 = vmatmul.bf16.gmra.mxu0 %v491
    %v3013 = vpop.f32.mrf.mxu0
    %v3014 = vadd.f32 %v3001, %v3013
    %v3015 = vpop.f32.mrf.mxu0
    %3016 = vdwg.mxu0
    %3017 = vmatpush.bf16.msra.mxu0 %v1775
    %3018 = vmatpush.bf16.msra.mxu0 %v1765
    %3019 = vmatpush.bf16.msra.mxu0 %v1755
    %3020 = vmatpush.bf16.msra.mxu0 %v1745
    %3021 = vmatpush.bf16.msra.mxu0 %v1735
    %3022 = vmatpush.bf16.msra.mxu0 %v1725
    %3023 = vmatpush.bf16.msra.mxu0 %v1715
    %3024 = vmatpush.bf16.msra.mxu0 %v1705
    %3025 = vmatmul.bf16.gmra.mxu0 %v487
    %v3026 = vpop.f32.mrf.mxu0
    %v3027 = vadd.f32 %v467, %v3026
    %v3028 = vpop.f32.mrf.mxu0
    %3029 = vdwg.mxu0
    %3030 = vmatpush.bf16.msra.mxu0 %v1855
    %3031 = vmatpush.bf16.msra.mxu0 %v1845
    %3032 = vmatpush.bf16.msra.mxu0 %v1835
    %3033 = vmatpush.bf16.msra.mxu0 %v1825
    %3034 = vmatpush.bf16.msra.mxu0 %v1815
    %3035 = vmatpush.bf16.msra.mxu0 %v1805
    %3036 = vmatpush.bf16.msra.mxu0 %v1795
    %3037 = vmatpush.bf16.msra.mxu0 %v1785
    %3038 = vmatmul.bf16.gmra.mxu0 %v488
    %v3039 = vpop.f32.mrf.mxu0
    %v3040 = vadd.f32 %v3027, %v3039
    %v3041 = vpop.f32.mrf.mxu0
    %3042 = vdwg.mxu0
    %3043 = vmatpush.bf16.msra.mxu0 %v1935
    %3044 = vmatpush.bf16.msra.mxu0 %v1925
    %3045 = vmatpush.bf16.msra.mxu0 %v1915
    %3046 = vmatpush.bf16.msra.mxu0 %v1905
    %3047 = vmatpush.bf16.msra.mxu0 %v1895
    %3048 = vmatpush.bf16.msra.mxu0 %v1885
    %3049 = vmatpush.bf16.msra.mxu0 %v1875
    %3050 = vmatpush.bf16.msra.mxu0 %v1865
    %3051 = vmatmul.bf16.gmra.mxu0 %v489
    %v3052 = vpop.f32.mrf.mxu0
    %v3053 = vadd.f32 %v3040, %v3052
    %v3054 = vpop.f32.mrf.mxu0
    %3055 = vdwg.mxu0
    %3056 = vmatpush.bf16.msra.mxu0 %v2015
    %3057 = vmatpush.bf16.msra.mxu0 %v2005
    %3058 = vmatpush.bf16.msra.mxu0 %v1995
    %3059 = vmatpush.bf16.msra.mxu0 %v1985
    %3060 = vmatpush.bf16.msra.mxu0 %v1975
    %3061 = vmatpush.bf16.msra.mxu0 %v1965
    %3062 = vmatpush.bf16.msra.mxu0 %v1955
    %3063 = vmatpush.bf16.msra.mxu0 %v1945
    %3064 = vmatmul.bf16.gmra.mxu0 %v490
    %v3065 = vpop.f32.mrf.mxu0
    %v3066 = vadd.f32 %v3053, %v3065
    %v3067 = vpop.f32.mrf.mxu0
    %3068 = vdwg.mxu0
    %3069 = vmatpush.bf16.msra.mxu0 %v2095
    %3070 = vmatpush.bf16.msra.mxu0 %v2085
    %3071 = vmatpush.bf16.msra.mxu0 %v2075
    %3072 = vmatpush.bf16.msra.mxu0 %v2065
    %3073 = vmatpush.bf16.msra.mxu0 %v2055
    %3074 = vmatpush.bf16.msra.mxu0 %v2045
    %3075 = vmatpush.bf16.msra.mxu0 %v2035
    %3076 = vmatpush.bf16.msra.mxu0 %v2025
    %3077 = vmatmul.bf16.gmra.mxu0 %v491
    %v3078 = vpop.f32.mrf.mxu0
    %v3079 = vadd.f32 %v3066, %v3078
    %v3080 = vpop.f32.mrf.mxu0
    %3081 = vdwg.mxu0
    %3082 = vmatpush.bf16.msra.mxu0 %v1776
    %3083 = vmatpush.bf16.msra.mxu0 %v1766
    %3084 = vmatpush.bf16.msra.mxu0 %v1756
    %3085 = vmatpush.bf16.msra.mxu0 %v1746
    %3086 = vmatpush.bf16.msra.mxu0 %v1736
    %3087 = vmatpush.bf16.msra.mxu0 %v1726
    %3088 = vmatpush.bf16.msra.mxu0 %v1716
    %3089 = vmatpush.bf16.msra.mxu0 %v1706
    %3090 = vmatmul.bf16.gmra.mxu0 %v487
    %v3091 = vpop.f32.mrf.mxu0
    %v3092 = vadd.f32 %v468, %v3091
    %v3093 = vpop.f32.mrf.mxu0
    %3094 = vdwg.mxu0
    %3095 = vmatpush.bf16.msra.mxu0 %v1856
    %3096 = vmatpush.bf16.msra.mxu0 %v1846
    %3097 = vmatpush.bf16.msra.mxu0 %v1836
    %3098 = vmatpush.bf16.msra.mxu0 %v1826
    %3099 = vmatpush.bf16.msra.mxu0 %v1816
    %3100 = vmatpush.bf16.msra.mxu0 %v1806
    %3101 = vmatpush.bf16.msra.mxu0 %v1796
    %3102 = vmatpush.bf16.msra.mxu0 %v1786
    %3103 = vmatmul.bf16.gmra.mxu0 %v488
    %v3104 = vpop.f32.mrf.mxu0
    %v3105 = vadd.f32 %v3092, %v3104
    %v3106 = vpop.f32.mrf.mxu0
    %3107 = vdwg.mxu0
    %3108 = vmatpush.bf16.msra.mxu0 %v1936
    %3109 = vmatpush.bf16.msra.mxu0 %v1926
    %3110 = vmatpush.bf16.msra.mxu0 %v1916
    %3111 = vmatpush.bf16.msra.mxu0 %v1906
    %3112 = vmatpush.bf16.msra.mxu0 %v1896
    %3113 = vmatpush.bf16.msra.mxu0 %v1886
    %3114 = vmatpush.bf16.msra.mxu0 %v1876
    %3115 = vmatpush.bf16.msra.mxu0 %v1866
    %3116 = vmatmul.bf16.gmra.mxu0 %v489
    %v3117 = vpop.f32.mrf.mxu0
    %v3118 = vadd.f32 %v3105, %v3117
    %v3119 = vpop.f32.mrf.mxu0
    %3120 = vdwg.mxu0
    %3121 = vmatpush.bf16.msra.mxu0 %v2016
    %3122 = vmatpush.bf16.msra.mxu0 %v2006
    %3123 = vmatpush.bf16.msra.mxu0 %v1996
    %3124 = vmatpush.bf16.msra.mxu0 %v1986
    %3125 = vmatpush.bf16.msra.mxu0 %v1976
    %3126 = vmatpush.bf16.msra.mxu0 %v1966
    %3127 = vmatpush.bf16.msra.mxu0 %v1956
    %3128 = vmatpush.bf16.msra.mxu0 %v1946
    %3129 = vmatmul.bf16.gmra.mxu0 %v490
    %v3130 = vpop.f32.mrf.mxu0
    %v3131 = vadd.f32 %v3118, %v3130
    %v3132 = vpop.f32.mrf.mxu0
    %3133 = vdwg.mxu0
    %3134 = vmatpush.bf16.msra.mxu0 %v2096
    %3135 = vmatpush.bf16.msra.mxu0 %v2086
    %3136 = vmatpush.bf16.msra.mxu0 %v2076
    %3137 = vmatpush.bf16.msra.mxu0 %v2066
    %3138 = vmatpush.bf16.msra.mxu0 %v2056
    %3139 = vmatpush.bf16.msra.mxu0 %v2046
    %3140 = vmatpush.bf16.msra.mxu0 %v2036
    %3141 = vmatpush.bf16.msra.mxu0 %v2026
    %3142 = vmatmul.bf16.gmra.mxu0 %v491
    %v3143 = vpop.f32.mrf.mxu0
    %v3144 = vadd.f32 %v3131, %v3143
    %v3145 = vpop.f32.mrf.mxu0
    %3146 = vdwg.mxu0
    %vm3147 = vcmp.gt.f32.partialorder %v2559, 0.0
    %vm3148 = vcmp.gt.f32.partialorder %v2624, 0.0
    %vm3149 = vcmp.gt.f32.partialorder %v2689, 0.0
    %vm3150 = vcmp.gt.f32.partialorder %v2754, 0.0
    %vm3151 = vcmp.gt.f32.partialorder %v2819, 0.0
    %vm3152 = vcmp.gt.f32.partialorder %v2884, 0.0
    %vm3153 = vcmp.gt.f32.partialorder %v2949, 0.0
    %vm3154 = vcmp.gt.f32.partialorder %v3014, 0.0
    %vm3155 = vcmp.gt.f32.partialorder %v3079, 0.0
    %vm3156 = vcmp.gt.f32.partialorder %v3144, 0.0
    %v3157 = vmul.f32 %v2559, 0.01
    %v3158 = vmul.f32 %v2624, 0.01
    %v3159 = vmul.f32 %v2689, 0.01
    %v3160 = vmul.f32 %v2754, 0.01
    %v3161 = vmul.f32 %v2819, 0.01
    %v3162 = vmul.f32 %v2884, 0.01
    %v3163 = vmul.f32 %v2949, 0.01
    %v3164 = vmul.f32 %v3014, 0.01
    %v3165 = vmul.f32 %v3079, 0.01
    %v3166 = vmul.f32 %v3144, 0.01
    %v3167 = vsel %vm3147, %v2559, %v3157
    %v3168 = vsel %vm3148, %v2624, %v3158
    %v3169 = vsel %vm3149, %v2689, %v3159
    %v3170 = vsel %vm3150, %v2754, %v3160
    %v3171 = vsel %vm3151, %v2819, %v3161
    %v3172 = vsel %vm3152, %v2884, %v3162
    %v3173 = vsel %vm3153, %v2949, %v3163
    %v3174 = vsel %vm3154, %v3014, %v3164
    %v3175 = vsel %vm3155, %v3079, %v3165
    %v3176 = vsel %vm3156, %v3144, %v3166
    %v3177 = vpack.c.bf16 %v3168, %v3167
    %v3178 = vpack.c.bf16 %v3170, %v3169
    %v3179 = vpack.c.bf16 %v3172, %v3171
    %v3180 = vpack.c.bf16 %v3174, %v3173
    %v3181 = vpack.c.bf16 %v3176, %v3175
    %v3182 = vld [vmem:[%s3] sm:$0xff]
    %v3183 = vld [vmem:[%s3 + $0x8] sm:$0xf]
    %v3184 = vld [vmem:[%s3 + $0xc] sm:$0xff]
    %v3185 = vld [vmem:[%s3 + $0x14] sm:$0xf]
    %v3186 = vld [vmem:[%s3 + $0x18] sm:$0xff]
    %v3187 = vld [vmem:[%s3 + $0x20] sm:$0xf]
    %v3188 = vld [vmem:[%s3 + $0x24] sm:$0xff]
    %v3189 = vld [vmem:[%s3 + $0x2c] sm:$0xf]
    %v3190 = vld [vmem:[%s3 + $0x30] sm:$0xff]
    %v3191 = vld [vmem:[%s3 + $0x38] sm:$0xf]
    %v3192 = vld [vmem:[%s3 + $0x3c] sm:$0xff]
    %v3193 = vld [vmem:[%s3 + $0x44] sm:$0xf]
    %v3194 = vld [vmem:[%s3 + $0x48] sm:$0xff]
    %v3195 = vld [vmem:[%s3 + $0x50] sm:$0xf]
    %v3196 = vld [vmem:[%s3 + $0x54] sm:$0xff]
    %v3197 = vld [vmem:[%s3 + $0x5c] sm:$0xf]
    %v3198 = vld [vmem:[%s3 + $0x60] sm:$0xff]
    %v3199 = vld [vmem:[%s3 + $0x68] sm:$0xf]
    %v3200 = vld [vmem:[%s3 + $0x6c] sm:$0xff]
    %v3201 = vld [vmem:[%s3 + $0x74] sm:$0xf]
    %v3202 = vld [vmem:[%s3 + $0x78] sm:$0xff]
    %v3203 = vld [vmem:[%s3 + $0x80] sm:$0xf]
    %v3204 = vld [vmem:[%s3 + $0x84] sm:$0xff]
    %v3205 = vld [vmem:[%s3 + $0x8c] sm:$0xf]
    %v3206 = vld [vmem:[%s3 + $0x90] sm:$0xff]
    %v3207 = vld [vmem:[%s3 + $0x98] sm:$0xf]
    %v3208 = vld [vmem:[%s3 + $0x9c] sm:$0xff]
    %v3209 = vld [vmem:[%s3 + $0xa4] sm:$0xf]
    %v3210 = vld [vmem:[%s3 + $0xa8] sm:$0xff]
    %v3211 = vld [vmem:[%s3 + $0xb0] sm:$0xf]
    %v3212 = vld [vmem:[%s3 + $0xb4] sm:$0xff]
    %v3213 = vld [vmem:[%s3 + $0xbc] sm:$0xf]
    %v3214 = vld [vmem:[%s3 + $0xc0] sm:$0xff]
    %v3215 = vld [vmem:[%s3 + $0xc8] sm:$0xf]
    %v3216 = vld [vmem:[%s3 + $0xcc] sm:$0xff]
    %v3217 = vld [vmem:[%s3 + $0xd4] sm:$0xf]
    %v3218 = vld [vmem:[%s3 + $0xd8] sm:$0xff]
    %v3219 = vld [vmem:[%s3 + $0xe0] sm:$0xf]
    %v3220 = vld [vmem:[%s3 + $0xe4] sm:$0xff]
    %v3221 = vld [vmem:[%s3 + $0xec] sm:$0xf]
    %v3222 = vld [vmem:[%s3 + $0xf0] sm:$0xff]
    %v3223 = vld [vmem:[%s3 + $0xf8] sm:$0xf]
    %v3224 = vld [vmem:[%s3 + $0xfc] sm:$0xff]
    %v3225 = vld [vmem:[%s3 + $0x104] sm:$0xf]
    %v3226 = vld [vmem:[%s3 + $0x108] sm:$0xff]
    %v3227 = vld [vmem:[%s3 + $0x110] sm:$0xf]
    %v3228 = vld [vmem:[%s3 + $0x114] sm:$0xff]
    %v3229 = vld [vmem:[%s3 + $0x11c] sm:$0xf]
    %v3230 = vld [vmem:[%s3 + $0x120] sm:$0xff]
    %v3231 = vld [vmem:[%s3 + $0x128] sm:$0xf]
    %v3232 = vld [vmem:[%s3 + $0x12c] sm:$0xff]
    %v3233 = vld [vmem:[%s3 + $0x134] sm:$0xf]
    %v3234 = vld [vmem:[%s3 + $0x138] sm:$0xff]
    %v3235 = vld [vmem:[%s3 + $0x140] sm:$0xf]
    %v3236 = vld [vmem:[%s3 + $0x144] sm:$0xff]
    %v3237 = vld [vmem:[%s3 + $0x14c] sm:$0xf]
    %v3238 = vld [vmem:[%s3 + $0x150] sm:$0xff]
    %v3239 = vld [vmem:[%s3 + $0x158] sm:$0xf]
    %v3240 = vld [vmem:[%s3 + $0x15c] sm:$0xff]
    %v3241 = vld [vmem:[%s3 + $0x164] sm:$0xf]
    %v3242 = vld [vmem:[%s3 + $0x168] sm:$0xff]
    %v3243 = vld [vmem:[%s3 + $0x170] sm:$0xf]
    %v3244 = vld [vmem:[%s3 + $0x174] sm:$0xff]
    %v3245 = vld [vmem:[%s3 + $0x17c] sm:$0xf]
    %v3246 = vld [vmem:[%s3 + $0x180] sm:$0xff]
    %v3247 = vld [vmem:[%s3 + $0x188] sm:$0xf]
    %v3248 = vld [vmem:[%s3 + $0x18c] sm:$0xff]
    %v3249 = vld [vmem:[%s3 + $0x194] sm:$0xf]
    %v3250 = vld [vmem:[%s3 + $0x198] sm:$0xff]
    %v3251 = vld [vmem:[%s3 + $0x1a0] sm:$0xf]
    %v3252 = vld [vmem:[%s3 + $0x1a4] sm:$0xff]
    %v3253 = vld [vmem:[%s3 + $0x1ac] sm:$0xf]
    %v3254 = vld [vmem:[%s3 + $0x1b0] sm:$0xff]
    %v3255 = vld [vmem:[%s3 + $0x1b8] sm:$0xf]
    %v3256 = vld [vmem:[%s3 + $0x1bc] sm:$0xff]
    %v3257 = vld [vmem:[%s3 + $0x1c4] sm:$0xf]
    %v3258 = vld [vmem:[%s3 + $0x1c8] sm:$0xff]
    %v3259 = vld [vmem:[%s3 + $0x1d0] sm:$0xf]
    %v3260 = vld [vmem:[%s3 + $0x1d4] sm:$0xff]
    %v3261 = vld [vmem:[%s3 + $0x1dc] sm:$0xf]
    %v3262 = vld [vmem:[%s3 + $0x1e0] sm:$0xff]
    %v3263 = vld [vmem:[%s3 + $0x1e8] sm:$0xf]
    %v3264 = vld [vmem:[%s3 + $0x1ec] sm:$0xff]
    %v3265 = vld [vmem:[%s3 + $0x1f4] sm:$0xf]
    %v3266 = vld [vmem:[%s3 + $0x1f8] sm:$0xff]
    %v3267 = vld [vmem:[%s3 + $0x200] sm:$0xf]
    %v3268 = vld [vmem:[%s3 + $0x204] sm:$0xff]
    %v3269 = vld [vmem:[%s3 + $0x20c] sm:$0xf]
    %v3270 = vld [vmem:[%s3 + $0x210] sm:$0xff]
    %v3271 = vld [vmem:[%s3 + $0x218] sm:$0xf]
    %v3272 = vld [vmem:[%s3 + $0x21c] sm:$0xff]
    %v3273 = vld [vmem:[%s3 + $0x224] sm:$0xf]
    %v3274 = vld [vmem:[%s3 + $0x228] sm:$0xff]
    %v3275 = vld [vmem:[%s3 + $0x230] sm:$0xf]
    %v3276 = vld [vmem:[%s3 + $0x234] sm:$0xff]
    %v3277 = vld [vmem:[%s3 + $0x23c] sm:$0xf]
    %v3278 = vld [vmem:[%s3 + $0x240] sm:$0xff]
    %v3279 = vld [vmem:[%s3 + $0x248] sm:$0xf]
    %v3280 = vld [vmem:[%s3 + $0x24c] sm:$0xff]
    %v3281 = vld [vmem:[%s3 + $0x254] sm:$0xf]
    %v3282 = vld [vmem:[%s3 + $0x258] sm:$0xff]
    %v3283 = vld [vmem:[%s3 + $0x260] sm:$0xf]
    %v3284 = vld [vmem:[%s3 + $0x264] sm:$0xff]
    %v3285 = vld [vmem:[%s3 + $0x26c] sm:$0xf]
    %v3286 = vld [vmem:[%s3 + $0x270] sm:$0xff]
    %v3287 = vld [vmem:[%s3 + $0x278] sm:$0xf]
    %v3288 = vld [vmem:[%s3 + $0x27c] sm:$0xff]
    %v3289 = vld [vmem:[%s3 + $0x284] sm:$0xf]
    %v3290 = vld [vmem:[%s3 + $0x288] sm:$0xff]
    %v3291 = vld [vmem:[%s3 + $0x290] sm:$0xf]
    %v3292 = vld [vmem:[%s3 + $0x294] sm:$0xff]
    %v3293 = vld [vmem:[%s3 + $0x29c] sm:$0xf]
    %v3294 = vld [vmem:[%s3 + $0x2a0] sm:$0xff]
    %v3295 = vld [vmem:[%s3 + $0x2a8] sm:$0xf]
    %v3296 = vld [vmem:[%s3 + $0x2ac] sm:$0xff]
    %v3297 = vld [vmem:[%s3 + $0x2b4] sm:$0xf]
    %v3298 = vld [vmem:[%s3 + $0x2b8] sm:$0xff]
    %v3299 = vld [vmem:[%s3 + $0x2c0] sm:$0xf]
    %v3300 = vld [vmem:[%s3 + $0x2c4] sm:$0xff]
    %v3301 = vld [vmem:[%s3 + $0x2cc] sm:$0xf]
    %v3302 = vld [vmem:[%s3 + $0x2d0] sm:$0xff]
    %v3303 = vld [vmem:[%s3 + $0x2d8] sm:$0xf]
    %v3304 = vld [vmem:[%s3 + $0x2dc] sm:$0xff]
    %v3305 = vld [vmem:[%s3 + $0x2e4] sm:$0xf]
    %v3306 = vld [vmem:[%s3 + $0x2e8] sm:$0xff]
    %v3307 = vld [vmem:[%s3 + $0x2f0] sm:$0xf]
    %v3308 = vld [vmem:[%s3 + $0x2f4] sm:$0xff]
    %v3309 = vld [vmem:[%s3 + $0x2fc] sm:$0xf]
    %v3310 = vld [vmem:[%s3 + $0x300] sm:$0xff]
    %v3311 = vld [vmem:[%s3 + $0x308] sm:$0xf]
    %v3312 = vld [vmem:[%s3 + $0x30c] sm:$0xff]
    %v3313 = vld [vmem:[%s3 + $0x314] sm:$0xf]
    %v3314 = vld [vmem:[%s3 + $0x318] sm:$0xff]
    %v3315 = vld [vmem:[%s3 + $0x320] sm:$0xf]
    %v3316 = vld [vmem:[%s3 + $0x324] sm:$0xff]
    %v3317 = vld [vmem:[%s3 + $0x32c] sm:$0xf]
    %v3318 = vld [vmem:[%s3 + $0x330] sm:$0xff]
    %v3319 = vld [vmem:[%s3 + $0x338] sm:$0xf]
    %v3320 = vld [vmem:[%s3 + $0x33c] sm:$0xff]
    %v3321 = vld [vmem:[%s3 + $0x344] sm:$0xf]
    %v3322 = vld [vmem:[%s3 + $0x348] sm:$0xff]
    %v3323 = vld [vmem:[%s3 + $0x350] sm:$0xf]
    %v3324 = vld [vmem:[%s3 + $0x354] sm:$0xff]
    %v3325 = vld [vmem:[%s3 + $0x35c] sm:$0xf]
    %v3326 = vld [vmem:[%s3 + $0x360] sm:$0xff]
    %v3327 = vld [vmem:[%s3 + $0x368] sm:$0xf]
    %v3328 = vld [vmem:[%s3 + $0x36c] sm:$0xff]
    %v3329 = vld [vmem:[%s3 + $0x374] sm:$0xf]
    %v3330 = vld [vmem:[%s3 + $0x378] sm:$0xff]
    %v3331 = vld [vmem:[%s3 + $0x380] sm:$0xf]
    %v3332 = vld [vmem:[%s3 + $0x384] sm:$0xff]
    %v3333 = vld [vmem:[%s3 + $0x38c] sm:$0xf]
    %v3334 = vld [vmem:[%s3 + $0x390] sm:$0xff]
    %v3335 = vld [vmem:[%s3 + $0x398] sm:$0xf]
    %v3336 = vld [vmem:[%s3 + $0x39c] sm:$0xff]
    %v3337 = vld [vmem:[%s3 + $0x3a4] sm:$0xf]
    %v3338 = vld [vmem:[%s3 + $0x3a8] sm:$0xff]
    %v3339 = vld [vmem:[%s3 + $0x3b0] sm:$0xf]
    %v3340 = vld [vmem:[%s3 + $0x3b4] sm:$0xff]
    %v3341 = vld [vmem:[%s3 + $0x3bc] sm:$0xf]
    %v3342 = vld [vmem:[%s4] sm:$0x7]
    %v3344 = vperm.slane %v3342, 0
    %v3345 = vperm.slane %v3342, 1
    %v3346 = vperm.slane %v3342, 2
    %v3353 = vunpack.c.l.b16 %v3177
    %v3354 = vunpack.c.h.b16 %v3177
    %v3355 = vunpack.c.l.b16 %v3178
    %v3356 = vunpack.c.h.b16 %v3178
    %v3357 = vunpack.c.l.b16 %v3179
    %v3358 = vpack.c.b16 %v3353, %v3353
    %v3359 = vpack.c.b16 %v3354, %v3354
    %v3360 = vpack.c.b16 %v3355, %v3355
    %v3361 = vpack.c.b16 %v3356, %v3356
    %v3362 = vpack.c.b16 %v3357, %v3357
    %v3528 = vunpack.c.l.b16 %v3182
    %v3529 = vunpack.c.h.b16 %v3182
    %v3530 = vunpack.c.l.b16 %v3183
    %v3531 = vunpack.c.l.b16 %v3184
    %v3532 = vunpack.c.h.b16 %v3184
    %v3533 = vunpack.c.l.b16 %v3185
    %v3534 = vunpack.c.l.b16 %v3186
    %v3535 = vunpack.c.h.b16 %v3186
    %v3536 = vunpack.c.l.b16 %v3187
    %v3537 = vunpack.c.l.b16 %v3188
    %v3538 = vunpack.c.h.b16 %v3188
    %v3539 = vunpack.c.l.b16 %v3189
    %v3540 = vunpack.c.l.b16 %v3190
    %v3541 = vunpack.c.h.b16 %v3190
    %v3542 = vunpack.c.l.b16 %v3191
    %v3543 = vunpack.c.l.b16 %v3192
    %v3544 = vunpack.c.h.b16 %v3192
    %v3545 = vunpack.c.l.b16 %v3193
    %v3546 = vunpack.c.l.b16 %v3194
    %v3547 = vunpack.c.h.b16 %v3194
    %v3548 = vunpack.c.l.b16 %v3195
    %v3549 = vunpack.c.l.b16 %v3196
    %v3550 = vunpack.c.h.b16 %v3196
    %v3551 = vunpack.c.l.b16 %v3197
    %v3552 = vunpack.c.l.b16 %v3198
    %v3553 = vunpack.c.h.b16 %v3198
    %v3554 = vunpack.c.l.b16 %v3199
    %v3555 = vunpack.c.l.b16 %v3200
    %v3556 = vunpack.c.h.b16 %v3200
    %v3557 = vunpack.c.l.b16 %v3201
    %v3558 = vunpack.c.l.b16 %v3202
    %v3559 = vunpack.c.h.b16 %v3202
    %v3560 = vunpack.c.l.b16 %v3203
    %v3561 = vunpack.c.l.b16 %v3204
    %v3562 = vunpack.c.h.b16 %v3204
    %v3563 = vunpack.c.l.b16 %v3205
    %v3564 = vunpack.c.l.b16 %v3206
    %v3565 = vunpack.c.h.b16 %v3206
    %v3566 = vunpack.c.l.b16 %v3207
    %v3567 = vunpack.c.l.b16 %v3208
    %v3568 = vunpack.c.h.b16 %v3208
    %v3569 = vunpack.c.l.b16 %v3209
    %v3570 = vunpack.c.l.b16 %v3210
    %v3571 = vunpack.c.h.b16 %v3210
    %v3572 = vunpack.c.l.b16 %v3211
    %v3573 = vunpack.c.l.b16 %v3212
    %v3574 = vunpack.c.h.b16 %v3212
    %v3575 = vunpack.c.l.b16 %v3213
    %v3576 = vunpack.c.l.b16 %v3214
    %v3577 = vunpack.c.h.b16 %v3214
    %v3578 = vunpack.c.l.b16 %v3215
    %v3579 = vunpack.c.l.b16 %v3216
    %v3580 = vunpack.c.h.b16 %v3216
    %v3581 = vunpack.c.l.b16 %v3217
    %v3582 = vunpack.c.l.b16 %v3218
    %v3583 = vunpack.c.h.b16 %v3218
    %v3584 = vunpack.c.l.b16 %v3219
    %v3585 = vunpack.c.l.b16 %v3220
    %v3586 = vunpack.c.h.b16 %v3220
    %v3587 = vunpack.c.l.b16 %v3221
    %v3588 = vunpack.c.l.b16 %v3222
    %v3589 = vunpack.c.h.b16 %v3222
    %v3590 = vunpack.c.l.b16 %v3223
    %v3591 = vunpack.c.l.b16 %v3224
    %v3592 = vunpack.c.h.b16 %v3224
    %v3593 = vunpack.c.l.b16 %v3225
    %v3594 = vunpack.c.l.b16 %v3226
    %v3595 = vunpack.c.h.b16 %v3226
    %v3596 = vunpack.c.l.b16 %v3227
    %v3597 = vunpack.c.l.b16 %v3228
    %v3598 = vunpack.c.h.b16 %v3228
    %v3599 = vunpack.c.l.b16 %v3229
    %v3600 = vunpack.c.l.b16 %v3230
    %v3601 = vunpack.c.h.b16 %v3230
    %v3602 = vunpack.c.l.b16 %v3231
    %v3603 = vunpack.c.l.b16 %v3232
    %v3604 = vunpack.c.h.b16 %v3232
    %v3605 = vunpack.c.l.b16 %v3233
    %v3606 = vunpack.c.l.b16 %v3234
    %v3607 = vunpack.c.h.b16 %v3234
    %v3608 = vunpack.c.l.b16 %v3235
    %v3609 = vunpack.c.l.b16 %v3236
    %v3610 = vunpack.c.h.b16 %v3236
    %v3611 = vunpack.c.l.b16 %v3237
    %v3612 = vunpack.c.l.b16 %v3238
    %v3613 = vunpack.c.h.b16 %v3238
    %v3614 = vunpack.c.l.b16 %v3239
    %v3615 = vunpack.c.l.b16 %v3240
    %v3616 = vunpack.c.h.b16 %v3240
    %v3617 = vunpack.c.l.b16 %v3241
    %v3618 = vunpack.c.l.b16 %v3242
    %v3619 = vunpack.c.h.b16 %v3242
    %v3620 = vunpack.c.l.b16 %v3243
    %v3621 = vunpack.c.l.b16 %v3244
    %v3622 = vunpack.c.h.b16 %v3244
    %v3623 = vunpack.c.l.b16 %v3245
    %v3624 = vunpack.c.l.b16 %v3246
    %v3625 = vunpack.c.h.b16 %v3246
    %v3626 = vunpack.c.l.b16 %v3247
    %v3627 = vunpack.c.l.b16 %v3248
    %v3628 = vunpack.c.h.b16 %v3248
    %v3629 = vunpack.c.l.b16 %v3249
    %v3630 = vunpack.c.l.b16 %v3250
    %v3631 = vunpack.c.h.b16 %v3250
    %v3632 = vunpack.c.l.b16 %v3251
    %v3633 = vunpack.c.l.b16 %v3252
    %v3634 = vunpack.c.h.b16 %v3252
    %v3635 = vunpack.c.l.b16 %v3253
    %v3636 = vunpack.c.l.b16 %v3254
    %v3637 = vunpack.c.h.b16 %v3254
    %v3638 = vunpack.c.l.b16 %v3255
    %v3639 = vunpack.c.l.b16 %v3256
    %v3640 = vunpack.c.h.b16 %v3256
    %v3641 = vunpack.c.l.b16 %v3257
    %v3642 = vunpack.c.l.b16 %v3258
    %v3643 = vunpack.c.h.b16 %v3258
    %v3644 = vunpack.c.l.b16 %v3259
    %v3645 = vunpack.c.l.b16 %v3260
    %v3646 = vunpack.c.h.b16 %v3260
    %v3647 = vunpack.c.l.b16 %v3261
    %v3648 = vunpack.c.l.b16 %v3262
    %v3649 = vunpack.c.h.b16 %v3262
    %v3650 = vunpack.c.l.b16 %v3263
    %v3651 = vunpack.c.l.b16 %v3264
    %v3652 = vunpack.c.h.b16 %v3264
    %v3653 = vunpack.c.l.b16 %v3265
    %v3654 = vunpack.c.l.b16 %v3266
    %v3655 = vunpack.c.h.b16 %v3266
    %v3656 = vunpack.c.l.b16 %v3267
    %v3657 = vunpack.c.l.b16 %v3268
    %v3658 = vunpack.c.h.b16 %v3268
    %v3659 = vunpack.c.l.b16 %v3269
    %v3660 = vunpack.c.l.b16 %v3270
    %v3661 = vunpack.c.h.b16 %v3270
    %v3662 = vunpack.c.l.b16 %v3271
    %v3663 = vunpack.c.l.b16 %v3272
    %v3664 = vunpack.c.h.b16 %v3272
    %v3665 = vunpack.c.l.b16 %v3273
    %v3666 = vunpack.c.l.b16 %v3274
    %v3667 = vunpack.c.h.b16 %v3274
    %v3668 = vunpack.c.l.b16 %v3275
    %v3669 = vunpack.c.l.b16 %v3276
    %v3670 = vunpack.c.h.b16 %v3276
    %v3671 = vunpack.c.l.b16 %v3277
    %v3672 = vunpack.c.l.b16 %v3278
    %v3673 = vunpack.c.h.b16 %v3278
    %v3674 = vunpack.c.l.b16 %v3279
    %v3675 = vunpack.c.l.b16 %v3280
    %v3676 = vunpack.c.h.b16 %v3280
    %v3677 = vunpack.c.l.b16 %v3281
    %v3678 = vunpack.c.l.b16 %v3282
    %v3679 = vunpack.c.h.b16 %v3282
    %v3680 = vunpack.c.l.b16 %v3283
    %v3681 = vunpack.c.l.b16 %v3284
    %v3682 = vunpack.c.h.b16 %v3284
    %v3683 = vunpack.c.l.b16 %v3285
    %v3684 = vunpack.c.l.b16 %v3286
    %v3685 = vunpack.c.h.b16 %v3286
    %v3686 = vunpack.c.l.b16 %v3287
    %v3687 = vunpack.c.l.b16 %v3288
    %v3688 = vunpack.c.h.b16 %v3288
    %v3689 = vunpack.c.l.b16 %v3289
    %v3690 = vunpack.c.l.b16 %v3290
    %v3691 = vunpack.c.h.b16 %v3290
    %v3692 = vunpack.c.l.b16 %v3291
    %v3693 = vunpack.c.l.b16 %v3292
    %v3694 = vunpack.c.h.b16 %v3292
    %v3695 = vunpack.c.l.b16 %v3293
    %v3696 = vunpack.c.l.b16 %v3294
    %v3697 = vunpack.c.h.b16 %v3294
    %v3698 = vunpack.c.l.b16 %v3295
    %v3699 = vunpack.c.l.b16 %v3296
    %v3700 = vunpack.c.h.b16 %v3296
    %v3701 = vunpack.c.l.b16 %v3297
    %v3702 = vunpack.c.l.b16 %v3298
    %v3703 = vunpack.c.h.b16 %v3298
    %v3704 = vunpack.c.l.b16 %v3299
    %v3705 = vunpack.c.l.b16 %v3300
    %v3706 = vunpack.c.h.b16 %v3300
    %v3707 = vunpack.c.l.b16 %v3301
    %v3708 = vunpack.c.l.b16 %v3302
    %v3709 = vunpack.c.h.b16 %v3302
    %v3710 = vunpack.c.l.b16 %v3303
    %v3711 = vunpack.c.l.b16 %v3304
    %v3712 = vunpack.c.h.b16 %v3304
    %v3713 = vunpack.c.l.b16 %v3305
    %v3714 = vunpack.c.l.b16 %v3306
    %v3715 = vunpack.c.h.b16 %v3306
    %v3716 = vunpack.c.l.b16 %v3307
    %v3717 = vunpack.c.l.b16 %v3308
    %v3718 = vunpack.c.h.b16 %v3308
    %v3719 = vunpack.c.l.b16 %v3309
    %v3720 = vunpack.c.l.b16 %v3310
    %v3721 = vunpack.c.h.b16 %v3310
    %v3722 = vunpack.c.l.b16 %v3311
    %v3723 = vunpack.c.l.b16 %v3312
    %v3724 = vunpack.c.h.b16 %v3312
    %v3725 = vunpack.c.l.b16 %v3313
    %v3726 = vunpack.c.l.b16 %v3314
    %v3727 = vunpack.c.h.b16 %v3314
    %v3728 = vunpack.c.l.b16 %v3315
    %v3729 = vunpack.c.l.b16 %v3316
    %v3730 = vunpack.c.h.b16 %v3316
    %v3731 = vunpack.c.l.b16 %v3317
    %v3732 = vunpack.c.l.b16 %v3318
    %v3733 = vunpack.c.h.b16 %v3318
    %v3734 = vunpack.c.l.b16 %v3319
    %v3735 = vunpack.c.l.b16 %v3320
    %v3736 = vunpack.c.h.b16 %v3320
    %v3737 = vunpack.c.l.b16 %v3321
    %v3738 = vunpack.c.l.b16 %v3322
    %v3739 = vunpack.c.h.b16 %v3322
    %v3740 = vunpack.c.l.b16 %v3323
    %v3741 = vunpack.c.l.b16 %v3324
    %v3742 = vunpack.c.h.b16 %v3324
    %v3743 = vunpack.c.l.b16 %v3325
    %v3744 = vunpack.c.l.b16 %v3326
    %v3745 = vunpack.c.h.b16 %v3326
    %v3746 = vunpack.c.l.b16 %v3327
    %v3747 = vunpack.c.l.b16 %v3328
    %v3748 = vunpack.c.h.b16 %v3328
    %v3749 = vunpack.c.l.b16 %v3329
    %v3750 = vunpack.c.l.b16 %v3330
    %v3751 = vunpack.c.h.b16 %v3330
    %v3752 = vunpack.c.l.b16 %v3331
    %v3753 = vunpack.c.l.b16 %v3332
    %v3754 = vunpack.c.h.b16 %v3332
    %v3755 = vunpack.c.l.b16 %v3333
    %v3756 = vunpack.c.l.b16 %v3334
    %v3757 = vunpack.c.h.b16 %v3334
    %v3758 = vunpack.c.l.b16 %v3335
    %v3759 = vunpack.c.l.b16 %v3336
    %v3760 = vunpack.c.h.b16 %v3336
    %v3761 = vunpack.c.l.b16 %v3337
    %v3762 = vunpack.c.l.b16 %v3338
    %v3763 = vunpack.c.h.b16 %v3338
    %v3764 = vunpack.c.l.b16 %v3339
    %v3765 = vunpack.c.l.b16 %v3340
    %v3766 = vunpack.c.h.b16 %v3340
    %v3767 = vunpack.c.l.b16 %v3341
    %v3768 = vpack.c.b16 %v3531, %v3528
    %v3769 = vpack.c.b16 %v3532, %v3529
    %v3770 = vpack.c.b16 %v3533, %v3530
    %v3771 = vpack.c.b16 %v3537, %v3534
    %v3772 = vpack.c.b16 %v3538, %v3535
    %v3773 = vpack.c.b16 %v3539, %v3536
    %v3774 = vpack.c.b16 %v3543, %v3540
    %v3775 = vpack.c.b16 %v3544, %v3541
    %v3776 = vpack.c.b16 %v3545, %v3542
    %v3777 = vpack.c.b16 %v3549, %v3546
    %v3778 = vpack.c.b16 %v3550, %v3547
    %v3779 = vpack.c.b16 %v3551, %v3548
    %v3780 = vpack.c.b16 %v3555, %v3552
    %v3781 = vpack.c.b16 %v3556, %v3553
    %v3782 = vpack.c.b16 %v3557, %v3554
    %v3783 = vpack.c.b16 %v3561, %v3558
    %v3784 = vpack.c.b16 %v3562, %v3559
    %v3785 = vpack.c.b16 %v3563, %v3560
    %v3786 = vpack.c.b16 %v3567, %v3564
    %v3787 = vpack.c.b16 %v3568, %v3565
    %v3788 = vpack.c.b16 %v3569, %v3566
    %v3789 = vpack.c.b16 %v3573, %v3570
    %v3790 = vpack.c.b16 %v3574, %v3571
    %v3791 = vpack.c.b16 %v3575, %v3572
    %v3792 = vpack.c.b16 %v3579, %v3576
    %v3793 = vpack.c.b16 %v3580, %v3577
    %v3794 = vpack.c.b16 %v3581, %v3578
    %v3795 = vpack.c.b16 %v3585, %v3582
    %v3796 = vpack.c.b16 %v3586, %v3583
    %v3797 = vpack.c.b16 %v3587, %v3584
    %v3798 = vpack.c.b16 %v3591, %v3588
    %v3799 = vpack.c.b16 %v3592, %v3589
    %v3800 = vpack.c.b16 %v3593, %v3590
    %v3801 = vpack.c.b16 %v3597, %v3594
    %v3802 = vpack.c.b16 %v3598, %v3595
    %v3803 = vpack.c.b16 %v3599, %v3596
    %v3804 = vpack.c.b16 %v3603, %v3600
    %v3805 = vpack.c.b16 %v3604, %v3601
    %v3806 = vpack.c.b16 %v3605, %v3602
    %v3807 = vpack.c.b16 %v3609, %v3606
    %v3808 = vpack.c.b16 %v3610, %v3607
    %v3809 = vpack.c.b16 %v3611, %v3608
    %v3810 = vpack.c.b16 %v3615, %v3612
    %v3811 = vpack.c.b16 %v3616, %v3613
    %v3812 = vpack.c.b16 %v3617, %v3614
    %v3813 = vpack.c.b16 %v3621, %v3618
    %v3814 = vpack.c.b16 %v3622, %v3619
    %v3815 = vpack.c.b16 %v3623, %v3620
    %v3816 = vpack.c.b16 %v3627, %v3624
    %v3817 = vpack.c.b16 %v3628, %v3625
    %v3818 = vpack.c.b16 %v3629, %v3626
    %v3819 = vpack.c.b16 %v3633, %v3630
    %v3820 = vpack.c.b16 %v3634, %v3631
    %v3821 = vpack.c.b16 %v3635, %v3632
    %v3822 = vpack.c.b16 %v3639, %v3636
    %v3823 = vpack.c.b16 %v3640, %v3637
    %v3824 = vpack.c.b16 %v3641, %v3638
    %v3825 = vpack.c.b16 %v3645, %v3642
    %v3826 = vpack.c.b16 %v3646, %v3643
    %v3827 = vpack.c.b16 %v3647, %v3644
    %v3828 = vpack.c.b16 %v3651, %v3648
    %v3829 = vpack.c.b16 %v3652, %v3649
    %v3830 = vpack.c.b16 %v3653, %v3650
    %v3831 = vpack.c.b16 %v3657, %v3654
    %v3832 = vpack.c.b16 %v3658, %v3655
    %v3833 = vpack.c.b16 %v3659, %v3656
    %v3834 = vpack.c.b16 %v3663, %v3660
    %v3835 = vpack.c.b16 %v3664, %v3661
    %v3836 = vpack.c.b16 %v3665, %v3662
    %v3837 = vpack.c.b16 %v3669, %v3666
    %v3838 = vpack.c.b16 %v3670, %v3667
    %v3839 = vpack.c.b16 %v3671, %v3668
    %v3840 = vpack.c.b16 %v3675, %v3672
    %v3841 = vpack.c.b16 %v3676, %v3673
    %v3842 = vpack.c.b16 %v3677, %v3674
    %v3843 = vpack.c.b16 %v3681, %v3678
    %v3844 = vpack.c.b16 %v3682, %v3679
    %v3845 = vpack.c.b16 %v3683, %v3680
    %v3846 = vpack.c.b16 %v3687, %v3684
    %v3847 = vpack.c.b16 %v3688, %v3685
    %v3848 = vpack.c.b16 %v3689, %v3686
    %v3849 = vpack.c.b16 %v3693, %v3690
    %v3850 = vpack.c.b16 %v3694, %v3691
    %v3851 = vpack.c.b16 %v3695, %v3692
    %v3852 = vpack.c.b16 %v3699, %v3696
    %v3853 = vpack.c.b16 %v3700, %v3697
    %v3854 = vpack.c.b16 %v3701, %v3698
    %v3855 = vpack.c.b16 %v3705, %v3702
    %v3856 = vpack.c.b16 %v3706, %v3703
    %v3857 = vpack.c.b16 %v3707, %v3704
    %v3858 = vpack.c.b16 %v3711, %v3708
    %v3859 = vpack.c.b16 %v3712, %v3709
    %v3860 = vpack.c.b16 %v3713, %v3710
    %v3861 = vpack.c.b16 %v3717, %v3714
    %v3862 = vpack.c.b16 %v3718, %v3715
    %v3863 = vpack.c.b16 %v3719, %v3716
    %v3864 = vpack.c.b16 %v3723, %v3720
    %v3865 = vpack.c.b16 %v3724, %v3721
    %v3866 = vpack.c.b16 %v3725, %v3722
    %v3867 = vpack.c.b16 %v3729, %v3726
    %v3868 = vpack.c.b16 %v3730, %v3727
    %v3869 = vpack.c.b16 %v3731, %v3728
    %v3870 = vpack.c.b16 %v3735, %v3732
    %v3871 = vpack.c.b16 %v3736, %v3733
    %v3872 = vpack.c.b16 %v3737, %v3734
    %v3873 = vpack.c.b16 %v3741, %v3738
    %v3874 = vpack.c.b16 %v3742, %v3739
    %v3875 = vpack.c.b16 %v3743, %v3740
    %v3876 = vpack.c.b16 %v3747, %v3744
    %v3877 = vpack.c.b16 %v3748, %v3745
    %v3878 = vpack.c.b16 %v3749, %v3746
    %v3879 = vpack.c.b16 %v3753, %v3750
    %v3880 = vpack.c.b16 %v3754, %v3751
    %v3881 = vpack.c.b16 %v3755, %v3752
    %v3882 = vpack.c.b16 %v3759, %v3756
    %v3883 = vpack.c.b16 %v3760, %v3757
    %v3884 = vpack.c.b16 %v3761, %v3758
    %v3885 = vpack.c.b16 %v3765, %v3762
    %v3886 = vpack.c.b16 %v3766, %v3763
    %v3887 = vpack.c.b16 %v3767, %v3764
    %4008 = vmatpush.bf16.msra.mxu0 %v3789
    %4009 = vmatpush.bf16.msra.mxu0 %v3786
    %4010 = vmatpush.bf16.msra.mxu0 %v3783
    %4011 = vmatpush.bf16.msra.mxu0 %v3780
    %4012 = vmatpush.bf16.msra.mxu0 %v3777
    %4013 = vmatpush.bf16.msra.mxu0 %v3774
    %4014 = vmatpush.bf16.msra.mxu0 %v3771
    %4015 = vmatpush.bf16.msra.mxu0 %v3768
    %4016 = vmatmul.bf16.gmra.mxu0 %v3358
    %v4017 = vpop.f32.mrf.mxu0
    %v4018 = vadd.f32 %v3344, %v4017
    %v4019 = vpop.f32.mrf.mxu0
    %4020 = vdwg.mxu0
    %4021 = vmatpush.bf16.msra.mxu0 %v3813
    %4022 = vmatpush.bf16.msra.mxu0 %v3810
    %4023 = vmatpush.bf16.msra.mxu0 %v3807
    %4024 = vmatpush.bf16.msra.mxu0 %v3804
    %4025 = vmatpush.bf16.msra.mxu0 %v3801
    %4026 = vmatpush.bf16.msra.mxu0 %v3798
    %4027 = vmatpush.bf16.msra.mxu0 %v3795
    %4028 = vmatpush.bf16.msra.mxu0 %v3792
    %4029 = vmatmul.bf16.gmra.mxu0 %v3359
    %v4030 = vpop.f32.mrf.mxu0
    %v4031 = vadd.f32 %v4018, %v4030
    %v4032 = vpop.f32.mrf.mxu0
    %4033 = vdwg.mxu0
    %4034 = vmatpush.bf16.msra.mxu0 %v3837
    %4035 = vmatpush.bf16.msra.mxu0 %v3834
    %4036 = vmatpush.bf16.msra.mxu0 %v3831
    %4037 = vmatpush.bf16.msra.mxu0 %v3828
    %4038 = vmatpush.bf16.msra.mxu0 %v3825
    %4039 = vmatpush.bf16.msra.mxu0 %v3822
    %4040 = vmatpush.bf16.msra.mxu0 %v3819
    %4041 = vmatpush.bf16.msra.mxu0 %v3816
    %4042 = vmatmul.bf16.gmra.mxu0 %v3360
    %v4043 = vpop.f32.mrf.mxu0
    %v4044 = vadd.f32 %v4031, %v4043
    %v4045 = vpop.f32.mrf.mxu0
    %4046 = vdwg.mxu0
    %4047 = vmatpush.bf16.msra.mxu0 %v3861
    %4048 = vmatpush.bf16.msra.mxu0 %v3858
    %4049 = vmatpush.bf16.msra.mxu0 %v3855
    %4050 = vmatpush.bf16.msra.mxu0 %v3852
    %4051 = vmatpush.bf16.msra.mxu0 %v3849
    %4052 = vmatpush.bf16.msra.mxu0 %v3846
    %4053 = vmatpush.bf16.msra.mxu0 %v3843
    %4054 = vmatpush.bf16.msra.mxu0 %v3840
    %4055 = vmatmul.bf16.gmra.mxu0 %v3361
    %v4056 = vpop.f32.mrf.mxu0
    %v4057 = vadd.f32 %v4044, %v4056
    %v4058 = vpop.f32.mrf.mxu0
    %4059 = vdwg.mxu0
    %4060 = vmatpush.bf16.msra.mxu0 %v3885
    %4061 = vmatpush.bf16.msra.mxu0 %v3882
    %4062 = vmatpush.bf16.msra.mxu0 %v3879
    %4063 = vmatpush.bf16.msra.mxu0 %v3876
    %4064 = vmatpush.bf16.msra.mxu0 %v3873
    %4065 = vmatpush.bf16.msra.mxu0 %v3870
    %4066 = vmatpush.bf16.msra.mxu0 %v3867
    %4067 = vmatpush.bf16.msra.mxu0 %v3864
    %4068 = vmatmul.bf16.gmra.mxu0 %v3362
    %v4069 = vpop.f32.mrf.mxu0
    %v4070 = vadd.f32 %v4057, %v4069
    %v4071 = vpop.f32.mrf.mxu0
    %4072 = vdwg.mxu0
    %4073 = vmatpush.bf16.msra.mxu0 %v3790
    %4074 = vmatpush.bf16.msra.mxu0 %v3787
    %4075 = vmatpush.bf16.msra.mxu0 %v3784
    %4076 = vmatpush.bf16.msra.mxu0 %v3781
    %4077 = vmatpush.bf16.msra.mxu0 %v3778
    %4078 = vmatpush.bf16.msra.mxu0 %v3775
    %4079 = vmatpush.bf16.msra.mxu0 %v3772
    %4080 = vmatpush.bf16.msra.mxu0 %v3769
    %4081 = vmatmul.bf16.gmra.mxu0 %v3358
    %v4082 = vpop.f32.mrf.mxu0
    %v4083 = vadd.f32 %v3345, %v4082
    %v4084 = vpop.f32.mrf.mxu0
    %4085 = vdwg.mxu0
    %4086 = vmatpush.bf16.msra.mxu0 %v3814
    %4087 = vmatpush.bf16.msra.mxu0 %v3811
    %4088 = vmatpush.bf16.msra.mxu0 %v3808
    %4089 = vmatpush.bf16.msra.mxu0 %v3805
    %4090 = vmatpush.bf16.msra.mxu0 %v3802
    %4091 = vmatpush.bf16.msra.mxu0 %v3799
    %4092 = vmatpush.bf16.msra.mxu0 %v3796
    %4093 = vmatpush.bf16.msra.mxu0 %v3793
    %4094 = vmatmul.bf16.gmra.mxu0 %v3359
    %v4095 = vpop.f32.mrf.mxu0
    %v4096 = vadd.f32 %v4083, %v4095
    %v4097 = vpop.f32.mrf.mxu0
    %4098 = vdwg.mxu0
    %4099 = vmatpush.bf16.msra.mxu0 %v3838
    %4100 = vmatpush.bf16.msra.mxu0 %v3835
    %4101 = vmatpush.bf16.msra.mxu0 %v3832
    %4102 = vmatpush.bf16.msra.mxu0 %v3829
    %4103 = vmatpush.bf16.msra.mxu0 %v3826
    %4104 = vmatpush.bf16.msra.mxu0 %v3823
    %4105 = vmatpush.bf16.msra.mxu0 %v3820
    %4106 = vmatpush.bf16.msra.mxu0 %v3817
    %4107 = vmatmul.bf16.gmra.mxu0 %v3360
    %v4108 = vpop.f32.mrf.mxu0
    %v4109 = vadd.f32 %v4096, %v4108
    %v4110 = vpop.f32.mrf.mxu0
    %4111 = vdwg.mxu0
    %4112 = vmatpush.bf16.msra.mxu0 %v3862
    %4113 = vmatpush.bf16.msra.mxu0 %v3859
    %4114 = vmatpush.bf16.msra.mxu0 %v3856
    %4115 = vmatpush.bf16.msra.mxu0 %v3853
    %4116 = vmatpush.bf16.msra.mxu0 %v3850
    %4117 = vmatpush.bf16.msra.mxu0 %v3847
    %4118 = vmatpush.bf16.msra.mxu0 %v3844
    %4119 = vmatpush.bf16.msra.mxu0 %v3841
    %4120 = vmatmul.bf16.gmra.mxu0 %v3361
    %v4121 = vpop.f32.mrf.mxu0
    %v4122 = vadd.f32 %v4109, %v4121
    %v4123 = vpop.f32.mrf.mxu0
    %4124 = vdwg.mxu0
    %4125 = vmatpush.bf16.msra.mxu0 %v3886
    %4126 = vmatpush.bf16.msra.mxu0 %v3883
    %4127 = vmatpush.bf16.msra.mxu0 %v3880
    %4128 = vmatpush.bf16.msra.mxu0 %v3877
    %4129 = vmatpush.bf16.msra.mxu0 %v3874
    %4130 = vmatpush.bf16.msra.mxu0 %v3871
    %4131 = vmatpush.bf16.msra.mxu0 %v3868
    %4132 = vmatpush.bf16.msra.mxu0 %v3865
    %4133 = vmatmul.bf16.gmra.mxu0 %v3362
    %v4134 = vpop.f32.mrf.mxu0
    %v4135 = vadd.f32 %v4122, %v4134
    %v4136 = vpop.f32.mrf.mxu0
    %4137 = vdwg.mxu0
    %4138 = vmatpush.bf16.msra.mxu0 %v3791
    %4139 = vmatpush.bf16.msra.mxu0 %v3788
    %4140 = vmatpush.bf16.msra.mxu0 %v3785
    %4141 = vmatpush.bf16.msra.mxu0 %v3782
    %4142 = vmatpush.bf16.msra.mxu0 %v3779
    %4143 = vmatpush.bf16.msra.mxu0 %v3776
    %4144 = vmatpush.bf16.msra.mxu0 %v3773
    %4145 = vmatpush.bf16.msra.mxu0 %v3770
    %4146 = vmatmul.bf16.gmra.mxu0 %v3358
    %v4147 = vpop.f32.mrf.mxu0
    %v4148 = vadd.f32 %v3346, %v4147
    %v4149 = vpop.f32.mrf.mxu0
    %4150 = vdwg.mxu0
    %4151 = vmatpush.bf16.msra.mxu0 %v3815
    %4152 = vmatpush.bf16.msra.mxu0 %v3812
    %4153 = vmatpush.bf16.msra.mxu0 %v3809
    %4154 = vmatpush.bf16.msra.mxu0 %v3806
    %4155 = vmatpush.bf16.msra.mxu0 %v3803
    %4156 = vmatpush.bf16.msra.mxu0 %v3800
    %4157 = vmatpush.bf16.msra.mxu0 %v3797
    %4158 = vmatpush.bf16.msra.mxu0 %v3794
    %4159 = vmatmul.bf16.gmra.mxu0 %v3359
    %v4160 = vpop.f32.mrf.mxu0
    %v4161 = vadd.f32 %v4148, %v4160
    %v4162 = vpop.f32.mrf.mxu0
    %4163 = vdwg.mxu0
    %4164 = vmatpush.bf16.msra.mxu0 %v3839
    %4165 = vmatpush.bf16.msra.mxu0 %v3836
    %4166 = vmatpush.bf16.msra.mxu0 %v3833
    %4167 = vmatpush.bf16.msra.mxu0 %v3830
    %4168 = vmatpush.bf16.msra.mxu0 %v3827
    %4169 = vmatpush.bf16.msra.mxu0 %v3824
    %4170 = vmatpush.bf16.msra.mxu0 %v3821
    %4171 = vmatpush.bf16.msra.mxu0 %v3818
    %4172 = vmatmul.bf16.gmra.mxu0 %v3360
    %v4173 = vpop.f32.mrf.mxu0
    %v4174 = vadd.f32 %v4161, %v4173
    %v4175 = vpop.f32.mrf.mxu0
    %4176 = vdwg.mxu0
    %4177 = vmatpush.bf16.msra.mxu0 %v3863
    %4178 = vmatpush.bf16.msra.mxu0 %v3860
    %4179 = vmatpush.bf16.msra.mxu0 %v3857
    %4180 = vmatpush.bf16.msra.mxu0 %v3854
    %4181 = vmatpush.bf16.msra.mxu0 %v3851
    %4182 = vmatpush.bf16.msra.mxu0 %v3848
    %4183 = vmatpush.bf16.msra.mxu0 %v3845
    %4184 = vmatpush.bf16.msra.mxu0 %v3842
    %4185 = vmatmul.bf16.gmra.mxu0 %v3361
    %v4186 = vpop.f32.mrf.mxu0
    %v4187 = vadd.f32 %v4174, %v4186
    %v4188 = vpop.f32.mrf.mxu0
    %4189 = vdwg.mxu0
    %4190 = vmatpush.bf16.msra.mxu0 %v3887
    %4191 = vmatpush.bf16.msra.mxu0 %v3884
    %4192 = vmatpush.bf16.msra.mxu0 %v3881
    %4193 = vmatpush.bf16.msra.mxu0 %v3878
    %4194 = vmatpush.bf16.msra.mxu0 %v3875
    %4195 = vmatpush.bf16.msra.mxu0 %v3872
    %4196 = vmatpush.bf16.msra.mxu0 %v3869
    %4197 = vmatpush.bf16.msra.mxu0 %v3866
    %4198 = vmatmul.bf16.gmra.mxu0 %v3362
    %v4199 = vpop.f32.mrf.mxu0
    %v4200 = vadd.f32 %v4187, %v4199
    %v4201 = vpop.f32.mrf.mxu0
    %4202 = vdwg.mxu0
    %vm4203 = vcmp.gt.f32.partialorder %v4070, 0.0
    %vm4204 = vcmp.gt.f32.partialorder %v4135, 0.0
    %vm4205 = vcmp.gt.f32.partialorder %v4200, 0.0
    %v4206 = vmul.f32 %v4070, 0.01
    %v4207 = vmul.f32 %v4135, 0.01
    %v4208 = vmul.f32 %v4200, 0.01
    %v4209 = vsel %vm4203, %v4070, %v4206
    %v4210 = vsel %vm4204, %v4135, %v4207
    %v4211 = vsel %vm4205, %v4200, %v4208
    %v4212 = vpack.c.bf16 %v4209, %v4209
    %v4213 = vpack.c.bf16 %v4210, %v4210
    %v4214 = vpack.c.bf16 %v4211, %v4211
    %v4215 = vld [vmem:[%s5] sm:$0xff]
    %v4216 = vld [vmem:[%s5 + $0x8] sm:$0xff]
    %v4217 = vld [vmem:[%s5 + $0x10] sm:$0xff]
    %v4218 = vld [vmem:[%s5 + $0x18] sm:$0xff]
    %v4219 = vld [vmem:[%s5 + $0x20] sm:$0xff]
    %v4220 = vld [vmem:[%s5 + $0x28] sm:$0xff]
    %v4221 = vld [vmem:[%s5 + $0x30] sm:$0xff]
    %v4222 = vld [vmem:[%s5 + $0x38] sm:$0xff]
    %v4223 = vld [vmem:[%s5 + $0x40] sm:$0xff]
    %v4224 = vld [vmem:[%s5 + $0x48] sm:$0xff]
    %v4225 = vld [vmem:[%s5 + $0x50] sm:$0xff]
    %v4226 = vld [vmem:[%s5 + $0x58] sm:$0xff]
    %v4227 = vld [vmem:[%s5 + $0x60] sm:$0xff]
    %v4228 = vld [vmem:[%s5 + $0x68] sm:$0xff]
    %v4229 = vld [vmem:[%s5 + $0x70] sm:$0xff]
    %v4230 = vld [vmem:[%s5 + $0x78] sm:$0xff]
    %v4231 = vld [vmem:[%s5 + $0x80] sm:$0xff]
    %v4232 = vld [vmem:[%s5 + $0x88] sm:$0xff]
    %v4233 = vld [vmem:[%s5 + $0x90] sm:$0xff]
    %v4234 = vld [vmem:[%s5 + $0x98] sm:$0xff]
    %v4235 = vld [vmem:[%s5 + $0xa0] sm:$0xff]
    %v4236 = vld [vmem:[%s5 + $0xa8] sm:$0xff]
    %v4237 = vld [vmem:[%s5 + $0xb0] sm:$0xff]
    %v4238 = vld [vmem:[%s5 + $0xb8] sm:$0xff]
    %v4239 = vld [vmem:[%s5 + $0xc0] sm:$0xff]
    %v4240 = vld [vmem:[%s5 + $0xc8] sm:$0xff]
    %v4241 = vld [vmem:[%s5 + $0xd0] sm:$0xff]
    %v4242 = vld [vmem:[%s5 + $0xd8] sm:$0xff]
    %v4243 = vld [vmem:[%s5 + $0xe0] sm:$0xff]
    %v4244 = vld [vmem:[%s5 + $0xe8] sm:$0xff]
    %v4245 = vld [vmem:[%s5 + $0xf0] sm:$0xff]
    %v4246 = vld [vmem:[%s5 + $0xf8] sm:$0xff]
    %v4247 = vld [vmem:[%s5 + $0x100] sm:$0xff]
    %v4248 = vld [vmem:[%s5 + $0x108] sm:$0xff]
    %v4249 = vld [vmem:[%s5 + $0x110] sm:$0xff]
    %v4250 = vld [vmem:[%s5 + $0x118] sm:$0xff]
    %v4251 = vld [vmem:[%s5 + $0x120] sm:$0xff]
    %v4252 = vld [vmem:[%s5 + $0x128] sm:$0xff]
    %v4253 = vld [vmem:[%s5 + $0x130] sm:$0xff]
    %v4254 = vld [vmem:[%s5 + $0x138] sm:$0xff]
    %v4255 = vld [vmem:[%s6] sm:$0x3]
    %v4257 = vperm.slane %v4255, 0
    %v4258 = vperm.slane %v4255, 1
    %v4301 = vunpack.c.l.b16 %v4215
    %v4302 = vunpack.c.h.b16 %v4215
    %v4303 = vunpack.c.l.b16 %v4216
    %v4304 = vunpack.c.h.b16 %v4216
    %v4305 = vunpack.c.l.b16 %v4217
    %v4306 = vunpack.c.h.b16 %v4217
    %v4307 = vunpack.c.l.b16 %v4218
    %v4308 = vunpack.c.h.b16 %v4218
    %v4309 = vunpack.c.l.b16 %v4219
    %v4310 = vunpack.c.h.b16 %v4219
    %v4311 = vunpack.c.l.b16 %v4220
    %v4312 = vunpack.c.h.b16 %v4220
    %v4313 = vunpack.c.l.b16 %v4221
    %v4314 = vunpack.c.h.b16 %v4221
    %v4315 = vunpack.c.l.b16 %v4222
    %v4316 = vunpack.c.h.b16 %v4222
    %v4317 = vunpack.c.l.b16 %v4223
    %v4318 = vunpack.c.h.b16 %v4223
    %v4319 = vunpack.c.l.b16 %v4224
    %v4320 = vunpack.c.h.b16 %v4224
    %v4321 = vunpack.c.l.b16 %v4225
    %v4322 = vunpack.c.h.b16 %v4225
    %v4323 = vunpack.c.l.b16 %v4226
    %v4324 = vunpack.c.h.b16 %v4226
    %v4325 = vunpack.c.l.b16 %v4227
    %v4326 = vunpack.c.h.b16 %v4227
    %v4327 = vunpack.c.l.b16 %v4228
    %v4328 = vunpack.c.h.b16 %v4228
    %v4329 = vunpack.c.l.b16 %v4229
    %v4330 = vunpack.c.h.b16 %v4229
    %v4331 = vunpack.c.l.b16 %v4230
    %v4332 = vunpack.c.h.b16 %v4230
    %v4333 = vunpack.c.l.b16 %v4231
    %v4334 = vunpack.c.h.b16 %v4231
    %v4335 = vunpack.c.l.b16 %v4232
    %v4336 = vunpack.c.h.b16 %v4232
    %v4337 = vunpack.c.l.b16 %v4233
    %v4338 = vunpack.c.h.b16 %v4233
    %v4339 = vunpack.c.l.b16 %v4234
    %v4340 = vunpack.c.h.b16 %v4234
    %v4341 = vunpack.c.l.b16 %v4235
    %v4342 = vunpack.c.h.b16 %v4235
    %v4343 = vunpack.c.l.b16 %v4236
    %v4344 = vunpack.c.h.b16 %v4236
    %v4345 = vunpack.c.l.b16 %v4237
    %v4346 = vunpack.c.h.b16 %v4237
    %v4347 = vunpack.c.l.b16 %v4238
    %v4348 = vunpack.c.h.b16 %v4238
    %v4349 = vunpack.c.l.b16 %v4239
    %v4350 = vunpack.c.h.b16 %v4239
    %v4351 = vunpack.c.l.b16 %v4240
    %v4352 = vunpack.c.h.b16 %v4240
    %v4353 = vunpack.c.l.b16 %v4241
    %v4354 = vunpack.c.h.b16 %v4241
    %v4355 = vunpack.c.l.b16 %v4242
    %v4356 = vunpack.c.h.b16 %v4242
    %v4357 = vunpack.c.l.b16 %v4243
    %v4358 = vunpack.c.h.b16 %v4243
    %v4359 = vunpack.c.l.b16 %v4244
    %v4360 = vunpack.c.h.b16 %v4244
    %v4361 = vunpack.c.l.b16 %v4245
    %v4362 = vunpack.c.h.b16 %v4245
    %v4363 = vunpack.c.l.b16 %v4246
    %v4364 = vunpack.c.h.b16 %v4246
    %v4365 = vunpack.c.l.b16 %v4247
    %v4366 = vunpack.c.h.b16 %v4247
    %v4367 = vunpack.c.l.b16 %v4248
    %v4368 = vunpack.c.h.b16 %v4248
    %v4369 = vunpack.c.l.b16 %v4249
    %v4370 = vunpack.c.h.b16 %v4249
    %v4371 = vunpack.c.l.b16 %v4250
    %v4372 = vunpack.c.h.b16 %v4250
    %v4373 = vunpack.c.l.b16 %v4251
    %v4374 = vunpack.c.h.b16 %v4251
    %v4375 = vunpack.c.l.b16 %v4252
    %v4376 = vunpack.c.h.b16 %v4252
    %v4377 = vunpack.c.l.b16 %v4253
    %v4378 = vunpack.c.h.b16 %v4253
    %v4379 = vunpack.c.l.b16 %v4254
    %v4380 = vunpack.c.h.b16 %v4254
    %v4381 = vpack.c.b16 %v4303, %v4301
    %v4382 = vpack.c.b16 %v4304, %v4302
    %v4383 = vpack.c.b16 %v4307, %v4305
    %v4384 = vpack.c.b16 %v4308, %v4306
    %v4385 = vpack.c.b16 %v4311, %v4309
    %v4386 = vpack.c.b16 %v4312, %v4310
    %v4387 = vpack.c.b16 %v4315, %v4313
    %v4388 = vpack.c.b16 %v4316, %v4314
    %v4389 = vpack.c.b16 %v4319, %v4317
    %v4390 = vpack.c.b16 %v4320, %v4318
    %v4391 = vpack.c.b16 %v4323, %v4321
    %v4392 = vpack.c.b16 %v4324, %v4322
    %v4393 = vpack.c.b16 %v4327, %v4325
    %v4394 = vpack.c.b16 %v4328, %v4326
    %v4395 = vpack.c.b16 %v4331, %v4329
    %v4396 = vpack.c.b16 %v4332, %v4330
    %v4397 = vpack.c.b16 %v4335, %v4333
    %v4398 = vpack.c.b16 %v4336, %v4334
    %v4399 = vpack.c.b16 %v4339, %v4337
    %v4400 = vpack.c.b16 %v4340, %v4338
    %v4401 = vpack.c.b16 %v4343, %v4341
    %v4402 = vpack.c.b16 %v4344, %v4342
    %v4403 = vpack.c.b16 %v4347, %v4345
    %v4404 = vpack.c.b16 %v4348, %v4346
    %v4405 = vpack.c.b16 %v4351, %v4349
    %v4406 = vpack.c.b16 %v4352, %v4350
    %v4407 = vpack.c.b16 %v4355, %v4353
    %v4408 = vpack.c.b16 %v4356, %v4354
    %v4409 = vpack.c.b16 %v4359, %v4357
    %v4410 = vpack.c.b16 %v4360, %v4358
    %v4411 = vpack.c.b16 %v4363, %v4361
    %v4412 = vpack.c.b16 %v4364, %v4362
    %v4413 = vpack.c.b16 %v4367, %v4365
    %v4414 = vpack.c.b16 %v4368, %v4366
    %v4415 = vpack.c.b16 %v4371, %v4369
    %v4416 = vpack.c.b16 %v4372, %v4370
    %v4417 = vpack.c.b16 %v4375, %v4373
    %v4418 = vpack.c.b16 %v4376, %v4374
    %v4419 = vpack.c.b16 %v4379, %v4377
    %v4420 = vpack.c.b16 %v4380, %v4378
    %vm4461 = vcmask 523264
    %v4463 = vsel %vm4461, %v4214, 0
    %4465 = vmatpush.bf16.msra.mxu0 %v4395
    %4466 = vmatpush.bf16.msra.mxu0 %v4393
    %4467 = vmatpush.bf16.msra.mxu0 %v4391
    %4468 = vmatpush.bf16.msra.mxu0 %v4389
    %4469 = vmatpush.bf16.msra.mxu0 %v4387
    %4470 = vmatpush.bf16.msra.mxu0 %v4385
    %4471 = vmatpush.bf16.msra.mxu0 %v4383
    %4472 = vmatpush.bf16.msra.mxu0 %v4381
    %4473 = vmatmul.bf16.gmra.mxu0 %v4212
    %v4474 = vpop.f32.mrf.mxu0
    %v4475 = vadd.f32 %v4257, %v4474
    %v4476 = vpop.f32.mrf.mxu0
    %4477 = vdwg.mxu0
    %4478 = vmatpush.bf16.msra.mxu0 %v4411
    %4479 = vmatpush.bf16.msra.mxu0 %v4409
    %4480 = vmatpush.bf16.msra.mxu0 %v4407
    %4481 = vmatpush.bf16.msra.mxu0 %v4405
    %4482 = vmatpush.bf16.msra.mxu0 %v4403
    %4483 = vmatpush.bf16.msra.mxu0 %v4401
    %4484 = vmatpush.bf16.msra.mxu0 %v4399
    %4485 = vmatpush.bf16.msra.mxu0 %v4397
    %4486 = vmatmul.bf16.gmra.mxu0 %v4213
    %v4487 = vpop.f32.mrf.mxu0
    %v4488 = vadd.f32 %v4475, %v4487
    %v4489 = vpop.f32.mrf.mxu0
    %4490 = vdwg.mxu0
    %4491 = vmatpush.bf16.msra.mxu0 0
    %4492 = vmatpush.bf16.msra.mxu0 0
    %4493 = vmatpush.bf16.msra.mxu0 0
    %4494 = vmatpush.bf16.msra.mxu0 0
    %4495 = vmatpush.bf16.msra.mxu0 %v4419
    %4496 = vmatpush.bf16.msra.mxu0 %v4417
    %4497 = vmatpush.bf16.msra.mxu0 %v4415
    %4498 = vmatpush.bf16.msra.mxu0 %v4413
    %4499 = vmatmul.bf16.gmra.mxu0 %v4463
    %v4500 = vpop.f32.mrf.mxu0
    %v4501 = vadd.f32 %v4488, %v4500
    %v4502 = vpop.f32.mrf.mxu0
    %4503 = vdwg.mxu0
    %4504 = vmatpush.bf16.msra.mxu0 %v4396
    %4505 = vmatpush.bf16.msra.mxu0 %v4394
    %4506 = vmatpush.bf16.msra.mxu0 %v4392
    %4507 = vmatpush.bf16.msra.mxu0 %v4390
    %4508 = vmatpush.bf16.msra.mxu0 %v4388
    %4509 = vmatpush.bf16.msra.mxu0 %v4386
    %4510 = vmatpush.bf16.msra.mxu0 %v4384
    %4511 = vmatpush.bf16.msra.mxu0 %v4382
    %4512 = vmatmul.bf16.gmra.mxu0 %v4212
    %v4513 = vpop.f32.mrf.mxu0
    %v4514 = vadd.f32 %v4258, %v4513
    %v4515 = vpop.f32.mrf.mxu0
    %4516 = vdwg.mxu0
    %4517 = vmatpush.bf16.msra.mxu0 %v4412
    %4518 = vmatpush.bf16.msra.mxu0 %v4410
    %4519 = vmatpush.bf16.msra.mxu0 %v4408
    %4520 = vmatpush.bf16.msra.mxu0 %v4406
    %4521 = vmatpush.bf16.msra.mxu0 %v4404
    %4522 = vmatpush.bf16.msra.mxu0 %v4402
    %4523 = vmatpush.bf16.msra.mxu0 %v4400
    %4524 = vmatpush.bf16.msra.mxu0 %v4398
    %4525 = vmatmul.bf16.gmra.mxu0 %v4213
    %v4526 = vpop.f32.mrf.mxu0
    %v4527 = vadd.f32 %v4514, %v4526
    %v4528 = vpop.f32.mrf.mxu0
    %4529 = vdwg.mxu0
    %4530 = vmatpush.bf16.msra.mxu0 0
    %4531 = vmatpush.bf16.msra.mxu0 0
    %4532 = vmatpush.bf16.msra.mxu0 0
    %4533 = vmatpush.bf16.msra.mxu0 0
    %4534 = vmatpush.bf16.msra.mxu0 %v4420
    %4535 = vmatpush.bf16.msra.mxu0 %v4418
    %4536 = vmatpush.bf16.msra.mxu0 %v4416
    %4537 = vmatpush.bf16.msra.mxu0 %v4414
    %4538 = vmatmul.bf16.gmra.mxu0 %v4463
    %v4539 = vpop.f32.mrf.mxu0
    %v4540 = vadd.f32 %v4527, %v4539
    %v4541 = vpop.f32.mrf.mxu0
    %4542 = vdwg.mxu0
    %vm4543 = vcmp.gt.f32.partialorder %v4501, 0.0
    %vm4544 = vcmp.gt.f32.partialorder %v4540, 0.0
    %v4545 = vmul.f32 %v4501, 0.01
    %v4546 = vmul.f32 %v4540, 0.01
    %v4547 = vsel %vm4543, %v4501, %v4545
    %v4548 = vsel %vm4544, %v4540, %v4546
    %v4549 = vpack.c.bf16 %v4547, %v4547
    %v4550 = vpack.c.bf16 %v4548, %v4548
    %v4551 = vld [vmem:[%s7] sm:$0xf]
    %v4552 = vld [vmem:[%s7 + $0x4] sm:$0xf]
    %v4553 = vld [vmem:[%s7 + $0x8] sm:$0xf]
    %v4554 = vld [vmem:[%s7 + $0xc] sm:$0xf]
    %v4555 = vld [vmem:[%s7 + $0x10] sm:$0xf]
    %v4556 = vld [vmem:[%s7 + $0x14] sm:$0xf]
    %v4557 = vld [vmem:[%s7 + $0x18] sm:$0xf]
    %v4558 = vld [vmem:[%s7 + $0x1c] sm:$0xf]
    %v4559 = vld [vmem:[%s7 + $0x20] sm:$0xf]
    %v4560 = vld [vmem:[%s7 + $0x24] sm:$0xf]
    %v4561 = vld [vmem:[%s7 + $0x28] sm:$0xf]
    %v4562 = vld [vmem:[%s7 + $0x2c] sm:$0xf]
    %v4563 = vld [vmem:[%s7 + $0x30] sm:$0xf]
    %v4564 = vld [vmem:[%s7 + $0x34] sm:$0xf]
    %v4565 = vld [vmem:[%s7 + $0x38] sm:$0xf]
    %v4566 = vld [vmem:[%s7 + $0x3c] sm:$0xf]
    %v4567 = vld [vmem:[%s7 + $0x40] sm:$0xf]
    %v4568 = vld [vmem:[%s7 + $0x44] sm:$0xf]
    %v4569 = vld [vmem:[%s7 + $0x48] sm:$0xf]
    %v4570 = vld [vmem:[%s7 + $0x4c] sm:$0xf]
    %v4571 = vld [vmem:[%s8] sm:$0x1]
    %v4573 = vperm.slane %v4571, 0
    %v4595 = vunpack.c.l.b16 %v4551
    %v4596 = vunpack.c.l.b16 %v4552
    %v4597 = vunpack.c.l.b16 %v4553
    %v4598 = vunpack.c.l.b16 %v4554
    %v4599 = vunpack.c.l.b16 %v4555
    %v4600 = vunpack.c.l.b16 %v4556
    %v4601 = vunpack.c.l.b16 %v4557
    %v4602 = vunpack.c.l.b16 %v4558
    %v4603 = vunpack.c.l.b16 %v4559
    %v4604 = vunpack.c.l.b16 %v4560
    %v4605 = vunpack.c.l.b16 %v4561
    %v4606 = vunpack.c.l.b16 %v4562
    %v4607 = vunpack.c.l.b16 %v4563
    %v4608 = vunpack.c.l.b16 %v4564
    %v4609 = vunpack.c.l.b16 %v4565
    %v4610 = vunpack.c.l.b16 %v4566
    %v4611 = vunpack.c.l.b16 %v4567
    %v4612 = vunpack.c.l.b16 %v4568
    %v4613 = vunpack.c.l.b16 %v4569
    %v4614 = vunpack.c.l.b16 %v4570
    %v4615 = vpack.c.b16 %v4596, %v4595
    %v4616 = vpack.c.b16 %v4598, %v4597
    %v4617 = vpack.c.b16 %v4600, %v4599
    %v4618 = vpack.c.b16 %v4602, %v4601
    %v4619 = vpack.c.b16 %v4604, %v4603
    %v4620 = vpack.c.b16 %v4606, %v4605
    %v4621 = vpack.c.b16 %v4608, %v4607
    %v4622 = vpack.c.b16 %v4610, %v4609
    %v4623 = vpack.c.b16 %v4612, %v4611
    %v4624 = vpack.c.b16 %v4614, %v4613
    %vm4635 = vcmask 261120
    %v4637 = vsel %vm4635, %v4550, 0
    %4639 = vmatpush.bf16.msra.mxu0 %v4622
    %4640 = vmatpush.bf16.msra.mxu0 %v4621
    %4641 = vmatpush.bf16.msra.mxu0 %v4620
    %4642 = vmatpush.bf16.msra.mxu0 %v4619
    %4643 = vmatpush.bf16.msra.mxu0 %v4618
    %4644 = vmatpush.bf16.msra.mxu0 %v4617
    %4645 = vmatpush.bf16.msra.mxu0 %v4616
    %4646 = vmatpush.bf16.msra.mxu0 %v4615
    %4647 = vmatmul.bf16.gmra.mxu0 %v4549
    %v4648 = vpop.f32.mrf.mxu0
    %v4649 = vadd.f32 %v4573, %v4648
    %v4650 = vpop.f32.mrf.mxu0
    %4651 = vdwg.mxu0
    %4652 = vmatpush.bf16.msra.mxu0 0
    %4653 = vmatpush.bf16.msra.mxu0 0
    %4654 = vmatpush.bf16.msra.mxu0 0
    %4655 = vmatpush.bf16.msra.mxu0 0
    %4656 = vmatpush.bf16.msra.mxu0 0
    %4657 = vmatpush.bf16.msra.mxu0 0
    %4658 = vmatpush.bf16.msra.mxu0 %v4624
    %4659 = vmatpush.bf16.msra.mxu0 %v4623
    %4660 = vmatmul.bf16.gmra.mxu0 %v4637
    %v4661 = vpop.f32.mrf.mxu0
    %v4662 = vadd.f32 %v4649, %v4661
    %v4663 = vpop.f32.mrf.mxu0
    %4664 = vdwg.mxu0
    %v4665 = vld [vmem:[%s9] sm:$0xff]
    %v4666 = vld [vmem:[%s9 + $0x8] sm:$0xf]
    %v4667 = vld [vmem:[%s9 + $0xc] sm:$0xff]
    %v4668 = vld [vmem:[%s9 + $0x14] sm:$0xf]
    %v4669 = vld [vmem:[%s9 + $0x18] sm:$0xff]
    %v4670 = vld [vmem:[%s9 + $0x20] sm:$0xf]
    %v4671 = vld [vmem:[%s9 + $0x24] sm:$0xff]
    %v4672 = vld [vmem:[%s9 + $0x2c] sm:$0xf]
    %v4673 = vld [vmem:[%s9 + $0x30] sm:$0xff]
    %v4674 = vld [vmem:[%s9 + $0x38] sm:$0xf]
    %v4675 = vld [vmem:[%s9 + $0x3c] sm:$0xff]
    %v4676 = vld [vmem:[%s9 + $0x44] sm:$0xf]
    %v4677 = vld [vmem:[%s9 + $0x48] sm:$0xff]
    %v4678 = vld [vmem:[%s9 + $0x50] sm:$0xf]
    %v4679 = vld [vmem:[%s9 + $0x54] sm:$0xff]
    %v4680 = vld [vmem:[%s9 + $0x5c] sm:$0xf]
    %v4681 = vld [vmem:[%s9 + $0x60] sm:$0xff]
    %v4682 = vld [vmem:[%s9 + $0x68] sm:$0xf]
    %v4683 = vld [vmem:[%s9 + $0x6c] sm:$0xff]
    %v4684 = vld [vmem:[%s9 + $0x74] sm:$0xf]
    %v4685 = vld [vmem:[%s9 + $0x78] sm:$0xff]
    %v4686 = vld [vmem:[%s9 + $0x80] sm:$0xf]
    %v4687 = vld [vmem:[%s9 + $0x84] sm:$0xff]
    %v4688 = vld [vmem:[%s9 + $0x8c] sm:$0xf]
    %v4689 = vld [vmem:[%s9 + $0x90] sm:$0xff]
    %v4690 = vld [vmem:[%s9 + $0x98] sm:$0xf]
    %v4691 = vld [vmem:[%s9 + $0x9c] sm:$0xff]
    %v4692 = vld [vmem:[%s9 + $0xa4] sm:$0xf]
    %v4693 = vld [vmem:[%s9 + $0xa8] sm:$0xff]
    %v4694 = vld [vmem:[%s9 + $0xb0] sm:$0xf]
    %v4695 = vld [vmem:[%s9 + $0xb4] sm:$0xff]
    %v4696 = vld [vmem:[%s9 + $0xbc] sm:$0xf]
    %v4697 = vld [vmem:[%s9 + $0xc0] sm:$0xff]
    %v4698 = vld [vmem:[%s9 + $0xc8] sm:$0xf]
    %v4699 = vld [vmem:[%s9 + $0xcc] sm:$0xff]
    %v4700 = vld [vmem:[%s9 + $0xd4] sm:$0xf]
    %v4701 = vld [vmem:[%s9 + $0xd8] sm:$0xff]
    %v4702 = vld [vmem:[%s9 + $0xe0] sm:$0xf]
    %v4703 = vld [vmem:[%s9 + $0xe4] sm:$0xff]
    %v4704 = vld [vmem:[%s9 + $0xec] sm:$0xf]
    %v4705 = vld [vmem:[%s9 + $0xf0] sm:$0xff]
    %v4706 = vld [vmem:[%s9 + $0xf8] sm:$0xf]
    %v4707 = vld [vmem:[%s9 + $0xfc] sm:$0xff]
    %v4708 = vld [vmem:[%s9 + $0x104] sm:$0xf]
    %v4709 = vld [vmem:[%s9 + $0x108] sm:$0xff]
    %v4710 = vld [vmem:[%s9 + $0x110] sm:$0xf]
    %v4711 = vld [vmem:[%s9 + $0x114] sm:$0xff]
    %v4712 = vld [vmem:[%s9 + $0x11c] sm:$0xf]
    %v4713 = vld [vmem:[%s9 + $0x120] sm:$0xff]
    %v4714 = vld [vmem:[%s9 + $0x128] sm:$0xf]
    %v4715 = vld [vmem:[%s9 + $0x12c] sm:$0xff]
    %v4716 = vld [vmem:[%s9 + $0x134] sm:$0xf]
    %v4717 = vld [vmem:[%s9 + $0x138] sm:$0xff]
    %v4718 = vld [vmem:[%s9 + $0x140] sm:$0xf]
    %v4719 = vld [vmem:[%s9 + $0x144] sm:$0xff]
    %v4720 = vld [vmem:[%s9 + $0x14c] sm:$0xf]
    %v4721 = vld [vmem:[%s9 + $0x150] sm:$0xff]
    %v4722 = vld [vmem:[%s9 + $0x158] sm:$0xf]
    %v4723 = vld [vmem:[%s9 + $0x15c] sm:$0xff]
    %v4724 = vld [vmem:[%s9 + $0x164] sm:$0xf]
    %v4725 = vld [vmem:[%s9 + $0x168] sm:$0xff]
    %v4726 = vld [vmem:[%s9 + $0x170] sm:$0xf]
    %v4727 = vld [vmem:[%s9 + $0x174] sm:$0xff]
    %v4728 = vld [vmem:[%s9 + $0x17c] sm:$0xf]
    %v4729 = vld [vmem:[%s9 + $0x180] sm:$0xff]
    %v4730 = vld [vmem:[%s9 + $0x188] sm:$0xf]
    %v4731 = vld [vmem:[%s9 + $0x18c] sm:$0xff]
    %v4732 = vld [vmem:[%s9 + $0x194] sm:$0xf]
    %v4733 = vld [vmem:[%s9 + $0x198] sm:$0xff]
    %v4734 = vld [vmem:[%s9 + $0x1a0] sm:$0xf]
    %v4735 = vld [vmem:[%s9 + $0x1a4] sm:$0xff]
    %v4736 = vld [vmem:[%s9 + $0x1ac] sm:$0xf]
    %v4737 = vld [vmem:[%s9 + $0x1b0] sm:$0xff]
    %v4738 = vld [vmem:[%s9 + $0x1b8] sm:$0xf]
    %v4739 = vld [vmem:[%s9 + $0x1bc] sm:$0xff]
    %v4740 = vld [vmem:[%s9 + $0x1c4] sm:$0xf]
    %v4741 = vld [vmem:[%s9 + $0x1c8] sm:$0xff]
    %v4742 = vld [vmem:[%s9 + $0x1d0] sm:$0xf]
    %v4743 = vld [vmem:[%s9 + $0x1d4] sm:$0xff]
    %v4744 = vld [vmem:[%s9 + $0x1dc] sm:$0xf]
    %v4745 = vld [vmem:[%s9 + $0x1e0] sm:$0xff]
    %v4746 = vld [vmem:[%s9 + $0x1e8] sm:$0xf]
    %v4747 = vld [vmem:[%s9 + $0x1ec] sm:$0xff]
    %v4748 = vld [vmem:[%s9 + $0x1f4] sm:$0xf]
    %v4749 = vld [vmem:[%s9 + $0x1f8] sm:$0xff]
    %v4750 = vld [vmem:[%s9 + $0x200] sm:$0xf]
    %v4751 = vld [vmem:[%s9 + $0x204] sm:$0xff]
    %v4752 = vld [vmem:[%s9 + $0x20c] sm:$0xf]
    %v4753 = vld [vmem:[%s9 + $0x210] sm:$0xff]
    %v4754 = vld [vmem:[%s9 + $0x218] sm:$0xf]
    %v4755 = vld [vmem:[%s9 + $0x21c] sm:$0xff]
    %v4756 = vld [vmem:[%s9 + $0x224] sm:$0xf]
    %v4757 = vld [vmem:[%s9 + $0x228] sm:$0xff]
    %v4758 = vld [vmem:[%s9 + $0x230] sm:$0xf]
    %v4759 = vld [vmem:[%s9 + $0x234] sm:$0xff]
    %v4760 = vld [vmem:[%s9 + $0x23c] sm:$0xf]
    %v4761 = vld [vmem:[%s9 + $0x240] sm:$0xff]
    %v4762 = vld [vmem:[%s9 + $0x248] sm:$0xf]
    %v4763 = vld [vmem:[%s9 + $0x24c] sm:$0xff]
    %v4764 = vld [vmem:[%s9 + $0x254] sm:$0xf]
    %v4765 = vld [vmem:[%s9 + $0x258] sm:$0xff]
    %v4766 = vld [vmem:[%s9 + $0x260] sm:$0xf]
    %v4767 = vld [vmem:[%s9 + $0x264] sm:$0xff]
    %v4768 = vld [vmem:[%s9 + $0x26c] sm:$0xf]
    %v4769 = vld [vmem:[%s9 + $0x270] sm:$0xff]
    %v4770 = vld [vmem:[%s9 + $0x278] sm:$0xf]
    %v4771 = vld [vmem:[%s9 + $0x27c] sm:$0xff]
    %v4772 = vld [vmem:[%s9 + $0x284] sm:$0xf]
    %v4773 = vld [vmem:[%s9 + $0x288] sm:$0xff]
    %v4774 = vld [vmem:[%s9 + $0x290] sm:$0xf]
    %v4775 = vld [vmem:[%s9 + $0x294] sm:$0xff]
    %v4776 = vld [vmem:[%s9 + $0x29c] sm:$0xf]
    %v4777 = vld [vmem:[%s9 + $0x2a0] sm:$0xff]
    %v4778 = vld [vmem:[%s9 + $0x2a8] sm:$0xf]
    %v4779 = vld [vmem:[%s9 + $0x2ac] sm:$0xff]
    %v4780 = vld [vmem:[%s9 + $0x2b4] sm:$0xf]
    %v4781 = vld [vmem:[%s9 + $0x2b8] sm:$0xff]
    %v4782 = vld [vmem:[%s9 + $0x2c0] sm:$0xf]
    %v4783 = vld [vmem:[%s9 + $0x2c4] sm:$0xff]
    %v4784 = vld [vmem:[%s9 + $0x2cc] sm:$0xf]
    %v4785 = vld [vmem:[%s9 + $0x2d0] sm:$0xff]
    %v4786 = vld [vmem:[%s9 + $0x2d8] sm:$0xf]
    %v4787 = vld [vmem:[%s9 + $0x2dc] sm:$0xff]
    %v4788 = vld [vmem:[%s9 + $0x2e4] sm:$0xf]
    %v4789 = vld [vmem:[%s9 + $0x2e8] sm:$0xff]
    %v4790 = vld [vmem:[%s9 + $0x2f0] sm:$0xf]
    %v4791 = vld [vmem:[%s9 + $0x2f4] sm:$0xff]
    %v4792 = vld [vmem:[%s9 + $0x2fc] sm:$0xf]
    %v4793 = vld [vmem:[%s9 + $0x300] sm:$0xff]
    %v4794 = vld [vmem:[%s9 + $0x308] sm:$0xf]
    %v4795 = vld [vmem:[%s9 + $0x30c] sm:$0xff]
    %v4796 = vld [vmem:[%s9 + $0x314] sm:$0xf]
    %v4797 = vld [vmem:[%s9 + $0x318] sm:$0xff]
    %v4798 = vld [vmem:[%s9 + $0x320] sm:$0xf]
    %v4799 = vld [vmem:[%s9 + $0x324] sm:$0xff]
    %v4800 = vld [vmem:[%s9 + $0x32c] sm:$0xf]
    %v4801 = vld [vmem:[%s9 + $0x330] sm:$0xff]
    %v4802 = vld [vmem:[%s9 + $0x338] sm:$0xf]
    %v4803 = vld [vmem:[%s9 + $0x33c] sm:$0xff]
    %v4804 = vld [vmem:[%s9 + $0x344] sm:$0xf]
    %v4805 = vld [vmem:[%s9 + $0x348] sm:$0xff]
    %v4806 = vld [vmem:[%s9 + $0x350] sm:$0xf]
    %v4807 = vld [vmem:[%s9 + $0x354] sm:$0xff]
    %v4808 = vld [vmem:[%s9 + $0x35c] sm:$0xf]
    %v4809 = vld [vmem:[%s9 + $0x360] sm:$0xff]
    %v4810 = vld [vmem:[%s9 + $0x368] sm:$0xf]
    %v4811 = vld [vmem:[%s9 + $0x36c] sm:$0xff]
    %v4812 = vld [vmem:[%s9 + $0x374] sm:$0xf]
    %v4813 = vld [vmem:[%s9 + $0x378] sm:$0xff]
    %v4814 = vld [vmem:[%s9 + $0x380] sm:$0xf]
    %v4815 = vld [vmem:[%s9 + $0x384] sm:$0xff]
    %v4816 = vld [vmem:[%s9 + $0x38c] sm:$0xf]
    %v4817 = vld [vmem:[%s9 + $0x390] sm:$0xff]
    %v4818 = vld [vmem:[%s9 + $0x398] sm:$0xf]
    %v4819 = vld [vmem:[%s9 + $0x39c] sm:$0xff]
    %v4820 = vld [vmem:[%s9 + $0x3a4] sm:$0xf]
    %v4821 = vld [vmem:[%s9 + $0x3a8] sm:$0xff]
    %v4822 = vld [vmem:[%s9 + $0x3b0] sm:$0xf]
    %v4823 = vld [vmem:[%s9 + $0x3b4] sm:$0xff]
    %v4824 = vld [vmem:[%s9 + $0x3bc] sm:$0xf]
    %v4825 = vld [vmem:[%s10] sm:$0x7]
    %v4827 = vperm.slane %v4825, 0
    %v4828 = vperm.slane %v4825, 1
    %v4829 = vperm.slane %v4825, 2
    %v4835 = vunpack.c.h.b16 %v3179
    %v4836 = vunpack.c.l.b16 %v3180
    %v4837 = vunpack.c.h.b16 %v3180
    %v4838 = vunpack.c.l.b16 %v3181
    %v4839 = vunpack.c.h.b16 %v3181
    %v4840 = vpack.c.b16 %v4835, %v4835
    %v4841 = vpack.c.b16 %v4836, %v4836
    %v4842 = vpack.c.b16 %v4837, %v4837
    %v4843 = vpack.c.b16 %v4838, %v4838
    %v4844 = vpack.c.b16 %v4839, %v4839
    %v5010 = vunpack.c.l.b16 %v4665
    %v5011 = vunpack.c.h.b16 %v4665
    %v5012 = vunpack.c.l.b16 %v4666
    %v5013 = vunpack.c.l.b16 %v4667
    %v5014 = vunpack.c.h.b16 %v4667
    %v5015 = vunpack.c.l.b16 %v4668
    %v5016 = vunpack.c.l.b16 %v4669
    %v5017 = vunpack.c.h.b16 %v4669
    %v5018 = vunpack.c.l.b16 %v4670
    %v5019 = vunpack.c.l.b16 %v4671
    %v5020 = vunpack.c.h.b16 %v4671
    %v5021 = vunpack.c.l.b16 %v4672
    %v5022 = vunpack.c.l.b16 %v4673
    %v5023 = vunpack.c.h.b16 %v4673
    %v5024 = vunpack.c.l.b16 %v4674
    %v5025 = vunpack.c.l.b16 %v4675
    %v5026 = vunpack.c.h.b16 %v4675
    %v5027 = vunpack.c.l.b16 %v4676
    %v5028 = vunpack.c.l.b16 %v4677
    %v5029 = vunpack.c.h.b16 %v4677
    %v5030 = vunpack.c.l.b16 %v4678
    %v5031 = vunpack.c.l.b16 %v4679
    %v5032 = vunpack.c.h.b16 %v4679
    %v5033 = vunpack.c.l.b16 %v4680
    %v5034 = vunpack.c.l.b16 %v4681
    %v5035 = vunpack.c.h.b16 %v4681
    %v5036 = vunpack.c.l.b16 %v4682
    %v5037 = vunpack.c.l.b16 %v4683
    %v5038 = vunpack.c.h.b16 %v4683
    %v5039 = vunpack.c.l.b16 %v4684
    %v5040 = vunpack.c.l.b16 %v4685
    %v5041 = vunpack.c.h.b16 %v4685
    %v5042 = vunpack.c.l.b16 %v4686
    %v5043 = vunpack.c.l.b16 %v4687
    %v5044 = vunpack.c.h.b16 %v4687
    %v5045 = vunpack.c.l.b16 %v4688
    %v5046 = vunpack.c.l.b16 %v4689
    %v5047 = vunpack.c.h.b16 %v4689
    %v5048 = vunpack.c.l.b16 %v4690
    %v5049 = vunpack.c.l.b16 %v4691
    %v5050 = vunpack.c.h.b16 %v4691
    %v5051 = vunpack.c.l.b16 %v4692
    %v5052 = vunpack.c.l.b16 %v4693
    %v5053 = vunpack.c.h.b16 %v4693
    %v5054 = vunpack.c.l.b16 %v4694
    %v5055 = vunpack.c.l.b16 %v4695
    %v5056 = vunpack.c.h.b16 %v4695
    %v5057 = vunpack.c.l.b16 %v4696
    %v5058 = vunpack.c.l.b16 %v4697
    %v5059 = vunpack.c.h.b16 %v4697
    %v5060 = vunpack.c.l.b16 %v4698
    %v5061 = vunpack.c.l.b16 %v4699
    %v5062 = vunpack.c.h.b16 %v4699
    %v5063 = vunpack.c.l.b16 %v4700
    %v5064 = vunpack.c.l.b16 %v4701
    %v5065 = vunpack.c.h.b16 %v4701
    %v5066 = vunpack.c.l.b16 %v4702
    %v5067 = vunpack.c.l.b16 %v4703
    %v5068 = vunpack.c.h.b16 %v4703
    %v5069 = vunpack.c.l.b16 %v4704
    %v5070 = vunpack.c.l.b16 %v4705
    %v5071 = vunpack.c.h.b16 %v4705
    %v5072 = vunpack.c.l.b16 %v4706
    %v5073 = vunpack.c.l.b16 %v4707
    %v5074 = vunpack.c.h.b16 %v4707
    %v5075 = vunpack.c.l.b16 %v4708
    %v5076 = vunpack.c.l.b16 %v4709
    %v5077 = vunpack.c.h.b16 %v4709
    %v5078 = vunpack.c.l.b16 %v4710
    %v5079 = vunpack.c.l.b16 %v4711
    %v5080 = vunpack.c.h.b16 %v4711
    %v5081 = vunpack.c.l.b16 %v4712
    %v5082 = vunpack.c.l.b16 %v4713
    %v5083 = vunpack.c.h.b16 %v4713
    %v5084 = vunpack.c.l.b16 %v4714
    %v5085 = vunpack.c.l.b16 %v4715
    %v5086 = vunpack.c.h.b16 %v4715
    %v5087 = vunpack.c.l.b16 %v4716
    %v5088 = vunpack.c.l.b16 %v4717
    %v5089 = vunpack.c.h.b16 %v4717
    %v5090 = vunpack.c.l.b16 %v4718
    %v5091 = vunpack.c.l.b16 %v4719
    %v5092 = vunpack.c.h.b16 %v4719
    %v5093 = vunpack.c.l.b16 %v4720
    %v5094 = vunpack.c.l.b16 %v4721
    %v5095 = vunpack.c.h.b16 %v4721
    %v5096 = vunpack.c.l.b16 %v4722
    %v5097 = vunpack.c.l.b16 %v4723
    %v5098 = vunpack.c.h.b16 %v4723
    %v5099 = vunpack.c.l.b16 %v4724
    %v5100 = vunpack.c.l.b16 %v4725
    %v5101 = vunpack.c.h.b16 %v4725
    %v5102 = vunpack.c.l.b16 %v4726
    %v5103 = vunpack.c.l.b16 %v4727
    %v5104 = vunpack.c.h.b16 %v4727
    %v5105 = vunpack.c.l.b16 %v4728
    %v5106 = vunpack.c.l.b16 %v4729
    %v5107 = vunpack.c.h.b16 %v4729
    %v5108 = vunpack.c.l.b16 %v4730
    %v5109 = vunpack.c.l.b16 %v4731
    %v5110 = vunpack.c.h.b16 %v4731
    %v5111 = vunpack.c.l.b16 %v4732
    %v5112 = vunpack.c.l.b16 %v4733
    %v5113 = vunpack.c.h.b16 %v4733
    %v5114 = vunpack.c.l.b16 %v4734
    %v5115 = vunpack.c.l.b16 %v4735
    %v5116 = vunpack.c.h.b16 %v4735
    %v5117 = vunpack.c.l.b16 %v4736
    %v5118 = vunpack.c.l.b16 %v4737
    %v5119 = vunpack.c.h.b16 %v4737
    %v5120 = vunpack.c.l.b16 %v4738
    %v5121 = vunpack.c.l.b16 %v4739
    %v5122 = vunpack.c.h.b16 %v4739
    %v5123 = vunpack.c.l.b16 %v4740
    %v5124 = vunpack.c.l.b16 %v4741
    %v5125 = vunpack.c.h.b16 %v4741
    %v5126 = vunpack.c.l.b16 %v4742
    %v5127 = vunpack.c.l.b16 %v4743
    %v5128 = vunpack.c.h.b16 %v4743
    %v5129 = vunpack.c.l.b16 %v4744
    %v5130 = vunpack.c.l.b16 %v4745
    %v5131 = vunpack.c.h.b16 %v4745
    %v5132 = vunpack.c.l.b16 %v4746
    %v5133 = vunpack.c.l.b16 %v4747
    %v5134 = vunpack.c.h.b16 %v4747
    %v5135 = vunpack.c.l.b16 %v4748
    %v5136 = vunpack.c.l.b16 %v4749
    %v5137 = vunpack.c.h.b16 %v4749
    %v5138 = vunpack.c.l.b16 %v4750
    %v5139 = vunpack.c.l.b16 %v4751
    %v5140 = vunpack.c.h.b16 %v4751
    %v5141 = vunpack.c.l.b16 %v4752
    %v5142 = vunpack.c.l.b16 %v4753
    %v5143 = vunpack.c.h.b16 %v4753
    %v5144 = vunpack.c.l.b16 %v4754
    %v5145 = vunpack.c.l.b16 %v4755
    %v5146 = vunpack.c.h.b16 %v4755
    %v5147 = vunpack.c.l.b16 %v4756
    %v5148 = vunpack.c.l.b16 %v4757
    %v5149 = vunpack.c.h.b16 %v4757
    %v5150 = vunpack.c.l.b16 %v4758
    %v5151 = vunpack.c.l.b16 %v4759
    %v5152 = vunpack.c.h.b16 %v4759
    %v5153 = vunpack.c.l.b16 %v4760
    %v5154 = vunpack.c.l.b16 %v4761
    %v5155 = vunpack.c.h.b16 %v4761
    %v5156 = vunpack.c.l.b16 %v4762
    %v5157 = vunpack.c.l.b16 %v4763
    %v5158 = vunpack.c.h.b16 %v4763
    %v5159 = vunpack.c.l.b16 %v4764
    %v5160 = vunpack.c.l.b16 %v4765
    %v5161 = vunpack.c.h.b16 %v4765
    %v5162 = vunpack.c.l.b16 %v4766
    %v5163 = vunpack.c.l.b16 %v4767
    %v5164 = vunpack.c.h.b16 %v4767
    %v5165 = vunpack.c.l.b16 %v4768
    %v5166 = vunpack.c.l.b16 %v4769
    %v5167 = vunpack.c.h.b16 %v4769
    %v5168 = vunpack.c.l.b16 %v4770
    %v5169 = vunpack.c.l.b16 %v4771
    %v5170 = vunpack.c.h.b16 %v4771
    %v5171 = vunpack.c.l.b16 %v4772
    %v5172 = vunpack.c.l.b16 %v4773
    %v5173 = vunpack.c.h.b16 %v4773
    %v5174 = vunpack.c.l.b16 %v4774
    %v5175 = vunpack.c.l.b16 %v4775
    %v5176 = vunpack.c.h.b16 %v4775
    %v5177 = vunpack.c.l.b16 %v4776
    %v5178 = vunpack.c.l.b16 %v4777
    %v5179 = vunpack.c.h.b16 %v4777
    %v5180 = vunpack.c.l.b16 %v4778
    %v5181 = vunpack.c.l.b16 %v4779
    %v5182 = vunpack.c.h.b16 %v4779
    %v5183 = vunpack.c.l.b16 %v4780
    %v5184 = vunpack.c.l.b16 %v4781
    %v5185 = vunpack.c.h.b16 %v4781
    %v5186 = vunpack.c.l.b16 %v4782
    %v5187 = vunpack.c.l.b16 %v4783
    %v5188 = vunpack.c.h.b16 %v4783
    %v5189 = vunpack.c.l.b16 %v4784
    %v5190 = vunpack.c.l.b16 %v4785
    %v5191 = vunpack.c.h.b16 %v4785
    %v5192 = vunpack.c.l.b16 %v4786
    %v5193 = vunpack.c.l.b16 %v4787
    %v5194 = vunpack.c.h.b16 %v4787
    %v5195 = vunpack.c.l.b16 %v4788
    %v5196 = vunpack.c.l.b16 %v4789
    %v5197 = vunpack.c.h.b16 %v4789
    %v5198 = vunpack.c.l.b16 %v4790
    %v5199 = vunpack.c.l.b16 %v4791
    %v5200 = vunpack.c.h.b16 %v4791
    %v5201 = vunpack.c.l.b16 %v4792
    %v5202 = vunpack.c.l.b16 %v4793
    %v5203 = vunpack.c.h.b16 %v4793
    %v5204 = vunpack.c.l.b16 %v4794
    %v5205 = vunpack.c.l.b16 %v4795
    %v5206 = vunpack.c.h.b16 %v4795
    %v5207 = vunpack.c.l.b16 %v4796
    %v5208 = vunpack.c.l.b16 %v4797
    %v5209 = vunpack.c.h.b16 %v4797
    %v5210 = vunpack.c.l.b16 %v4798
    %v5211 = vunpack.c.l.b16 %v4799
    %v5212 = vunpack.c.h.b16 %v4799
    %v5213 = vunpack.c.l.b16 %v4800
    %v5214 = vunpack.c.l.b16 %v4801
    %v5215 = vunpack.c.h.b16 %v4801
    %v5216 = vunpack.c.l.b16 %v4802
    %v5217 = vunpack.c.l.b16 %v4803
    %v5218 = vunpack.c.h.b16 %v4803
    %v5219 = vunpack.c.l.b16 %v4804
    %v5220 = vunpack.c.l.b16 %v4805
    %v5221 = vunpack.c.h.b16 %v4805
    %v5222 = vunpack.c.l.b16 %v4806
    %v5223 = vunpack.c.l.b16 %v4807
    %v5224 = vunpack.c.h.b16 %v4807
    %v5225 = vunpack.c.l.b16 %v4808
    %v5226 = vunpack.c.l.b16 %v4809
    %v5227 = vunpack.c.h.b16 %v4809
    %v5228 = vunpack.c.l.b16 %v4810
    %v5229 = vunpack.c.l.b16 %v4811
    %v5230 = vunpack.c.h.b16 %v4811
    %v5231 = vunpack.c.l.b16 %v4812
    %v5232 = vunpack.c.l.b16 %v4813
    %v5233 = vunpack.c.h.b16 %v4813
    %v5234 = vunpack.c.l.b16 %v4814
    %v5235 = vunpack.c.l.b16 %v4815
    %v5236 = vunpack.c.h.b16 %v4815
    %v5237 = vunpack.c.l.b16 %v4816
    %v5238 = vunpack.c.l.b16 %v4817
    %v5239 = vunpack.c.h.b16 %v4817
    %v5240 = vunpack.c.l.b16 %v4818
    %v5241 = vunpack.c.l.b16 %v4819
    %v5242 = vunpack.c.h.b16 %v4819
    %v5243 = vunpack.c.l.b16 %v4820
    %v5244 = vunpack.c.l.b16 %v4821
    %v5245 = vunpack.c.h.b16 %v4821
    %v5246 = vunpack.c.l.b16 %v4822
    %v5247 = vunpack.c.l.b16 %v4823
    %v5248 = vunpack.c.h.b16 %v4823
    %v5249 = vunpack.c.l.b16 %v4824
    %v5250 = vpack.c.b16 %v5013, %v5010
    %v5251 = vpack.c.b16 %v5014, %v5011
    %v5252 = vpack.c.b16 %v5015, %v5012
    %v5253 = vpack.c.b16 %v5019, %v5016
    %v5254 = vpack.c.b16 %v5020, %v5017
    %v5255 = vpack.c.b16 %v5021, %v5018
    %v5256 = vpack.c.b16 %v5025, %v5022
    %v5257 = vpack.c.b16 %v5026, %v5023
    %v5258 = vpack.c.b16 %v5027, %v5024
    %v5259 = vpack.c.b16 %v5031, %v5028
    %v5260 = vpack.c.b16 %v5032, %v5029
    %v5261 = vpack.c.b16 %v5033, %v5030
    %v5262 = vpack.c.b16 %v5037, %v5034
    %v5263 = vpack.c.b16 %v5038, %v5035
    %v5264 = vpack.c.b16 %v5039, %v5036
    %v5265 = vpack.c.b16 %v5043, %v5040
    %v5266 = vpack.c.b16 %v5044, %v5041
    %v5267 = vpack.c.b16 %v5045, %v5042
    %v5268 = vpack.c.b16 %v5049, %v5046
    %v5269 = vpack.c.b16 %v5050, %v5047
    %v5270 = vpack.c.b16 %v5051, %v5048
    %v5271 = vpack.c.b16 %v5055, %v5052
    %v5272 = vpack.c.b16 %v5056, %v5053
    %v5273 = vpack.c.b16 %v5057, %v5054
    %v5274 = vpack.c.b16 %v5061, %v5058
    %v5275 = vpack.c.b16 %v5062, %v5059
    %v5276 = vpack.c.b16 %v5063, %v5060
    %v5277 = vpack.c.b16 %v5067, %v5064
    %v5278 = vpack.c.b16 %v5068, %v5065
    %v5279 = vpack.c.b16 %v5069, %v5066
    %v5280 = vpack.c.b16 %v5073, %v5070
    %v5281 = vpack.c.b16 %v5074, %v5071
    %v5282 = vpack.c.b16 %v5075, %v5072
    %v5283 = vpack.c.b16 %v5079, %v5076
    %v5284 = vpack.c.b16 %v5080, %v5077
    %v5285 = vpack.c.b16 %v5081, %v5078
    %v5286 = vpack.c.b16 %v5085, %v5082
    %v5287 = vpack.c.b16 %v5086, %v5083
    %v5288 = vpack.c.b16 %v5087, %v5084
    %v5289 = vpack.c.b16 %v5091, %v5088
    %v5290 = vpack.c.b16 %v5092, %v5089
    %v5291 = vpack.c.b16 %v5093, %v5090
    %v5292 = vpack.c.b16 %v5097, %v5094
    %v5293 = vpack.c.b16 %v5098, %v5095
    %v5294 = vpack.c.b16 %v5099, %v5096
    %v5295 = vpack.c.b16 %v5103, %v5100
    %v5296 = vpack.c.b16 %v5104, %v5101
    %v5297 = vpack.c.b16 %v5105, %v5102
    %v5298 = vpack.c.b16 %v5109, %v5106
    %v5299 = vpack.c.b16 %v5110, %v5107
    %v5300 = vpack.c.b16 %v5111, %v5108
    %v5301 = vpack.c.b16 %v5115, %v5112
    %v5302 = vpack.c.b16 %v5116, %v5113
    %v5303 = vpack.c.b16 %v5117, %v5114
    %v5304 = vpack.c.b16 %v5121, %v5118
    %v5305 = vpack.c.b16 %v5122, %v5119
    %v5306 = vpack.c.b16 %v5123, %v5120
    %v5307 = vpack.c.b16 %v5127, %v5124
    %v5308 = vpack.c.b16 %v5128, %v5125
    %v5309 = vpack.c.b16 %v5129, %v5126
    %v5310 = vpack.c.b16 %v5133, %v5130
    %v5311 = vpack.c.b16 %v5134, %v5131
    %v5312 = vpack.c.b16 %v5135, %v5132
    %v5313 = vpack.c.b16 %v5139, %v5136
    %v5314 = vpack.c.b16 %v5140, %v5137
    %v5315 = vpack.c.b16 %v5141, %v5138
    %v5316 = vpack.c.b16 %v5145, %v5142
    %v5317 = vpack.c.b16 %v5146, %v5143
    %v5318 = vpack.c.b16 %v5147, %v5144
    %v5319 = vpack.c.b16 %v5151, %v5148
    %v5320 = vpack.c.b16 %v5152, %v5149
    %v5321 = vpack.c.b16 %v5153, %v5150
    %v5322 = vpack.c.b16 %v5157, %v5154
    %v5323 = vpack.c.b16 %v5158, %v5155
    %v5324 = vpack.c.b16 %v5159, %v5156
    %v5325 = vpack.c.b16 %v5163, %v5160
    %v5326 = vpack.c.b16 %v5164, %v5161
    %v5327 = vpack.c.b16 %v5165, %v5162
    %v5328 = vpack.c.b16 %v5169, %v5166
    %v5329 = vpack.c.b16 %v5170, %v5167
    %v5330 = vpack.c.b16 %v5171, %v5168
    %v5331 = vpack.c.b16 %v5175, %v5172
    %v5332 = vpack.c.b16 %v5176, %v5173
    %v5333 = vpack.c.b16 %v5177, %v5174
    %v5334 = vpack.c.b16 %v5181, %v5178
    %v5335 = vpack.c.b16 %v5182, %v5179
    %v5336 = vpack.c.b16 %v5183, %v5180
    %v5337 = vpack.c.b16 %v5187, %v5184
    %v5338 = vpack.c.b16 %v5188, %v5185
    %v5339 = vpack.c.b16 %v5189, %v5186
    %v5340 = vpack.c.b16 %v5193, %v5190
    %v5341 = vpack.c.b16 %v5194, %v5191
    %v5342 = vpack.c.b16 %v5195, %v5192
    %v5343 = vpack.c.b16 %v5199, %v5196
    %v5344 = vpack.c.b16 %v5200, %v5197
    %v5345 = vpack.c.b16 %v5201, %v5198
    %v5346 = vpack.c.b16 %v5205, %v5202
    %v5347 = vpack.c.b16 %v5206, %v5203
    %v5348 = vpack.c.b16 %v5207, %v5204
    %v5349 = vpack.c.b16 %v5211, %v5208
    %v5350 = vpack.c.b16 %v5212, %v5209
    %v5351 = vpack.c.b16 %v5213, %v5210
    %v5352 = vpack.c.b16 %v5217, %v5214
    %v5353 = vpack.c.b16 %v5218, %v5215
    %v5354 = vpack.c.b16 %v5219, %v5216
    %v5355 = vpack.c.b16 %v5223, %v5220
    %v5356 = vpack.c.b16 %v5224, %v5221
    %v5357 = vpack.c.b16 %v5225, %v5222
    %v5358 = vpack.c.b16 %v5229, %v5226
    %v5359 = vpack.c.b16 %v5230, %v5227
    %v5360 = vpack.c.b16 %v5231, %v5228
    %v5361 = vpack.c.b16 %v5235, %v5232
    %v5362 = vpack.c.b16 %v5236, %v5233
    %v5363 = vpack.c.b16 %v5237, %v5234
    %v5364 = vpack.c.b16 %v5241, %v5238
    %v5365 = vpack.c.b16 %v5242, %v5239
    %v5366 = vpack.c.b16 %v5243, %v5240
    %v5367 = vpack.c.b16 %v5247, %v5244
    %v5368 = vpack.c.b16 %v5248, %v5245
    %v5369 = vpack.c.b16 %v5249, %v5246
    %5490 = vmatpush.bf16.msra.mxu0 %v5271
    %5491 = vmatpush.bf16.msra.mxu0 %v5268
    %5492 = vmatpush.bf16.msra.mxu0 %v5265
    %5493 = vmatpush.bf16.msra.mxu0 %v5262
    %5494 = vmatpush.bf16.msra.mxu0 %v5259
    %5495 = vmatpush.bf16.msra.mxu0 %v5256
    %5496 = vmatpush.bf16.msra.mxu0 %v5253
    %5497 = vmatpush.bf16.msra.mxu0 %v5250
    %5498 = vmatmul.bf16.gmra.mxu0 %v4840
    %v5499 = vpop.f32.mrf.mxu0
    %v5500 = vadd.f32 %v4827, %v5499
    %v5501 = vpop.f32.mrf.mxu0
    %5502 = vdwg.mxu0
    %5503 = vmatpush.bf16.msra.mxu0 %v5295
    %5504 = vmatpush.bf16.msra.mxu0 %v5292
    %5505 = vmatpush.bf16.msra.mxu0 %v5289
    %5506 = vmatpush.bf16.msra.mxu0 %v5286
    %5507 = vmatpush.bf16.msra.mxu0 %v5283
    %5508 = vmatpush.bf16.msra.mxu0 %v5280
    %5509 = vmatpush.bf16.msra.mxu0 %v5277
    %5510 = vmatpush.bf16.msra.mxu0 %v5274
    %5511 = vmatmul.bf16.gmra.mxu0 %v4841
    %v5512 = vpop.f32.mrf.mxu0
    %v5513 = vadd.f32 %v5500, %v5512
    %v5514 = vpop.f32.mrf.mxu0
    %5515 = vdwg.mxu0
    %5516 = vmatpush.bf16.msra.mxu0 %v5319
    %5517 = vmatpush.bf16.msra.mxu0 %v5316
    %5518 = vmatpush.bf16.msra.mxu0 %v5313
    %5519 = vmatpush.bf16.msra.mxu0 %v5310
    %5520 = vmatpush.bf16.msra.mxu0 %v5307
    %5521 = vmatpush.bf16.msra.mxu0 %v5304
    %5522 = vmatpush.bf16.msra.mxu0 %v5301
    %5523 = vmatpush.bf16.msra.mxu0 %v5298
    %5524 = vmatmul.bf16.gmra.mxu0 %v4842
    %v5525 = vpop.f32.mrf.mxu0
    %v5526 = vadd.f32 %v5513, %v5525
    %v5527 = vpop.f32.mrf.mxu0
    %5528 = vdwg.mxu0
    %5529 = vmatpush.bf16.msra.mxu0 %v5343
    %5530 = vmatpush.bf16.msra.mxu0 %v5340
    %5531 = vmatpush.bf16.msra.mxu0 %v5337
    %5532 = vmatpush.bf16.msra.mxu0 %v5334
    %5533 = vmatpush.bf16.msra.mxu0 %v5331
    %5534 = vmatpush.bf16.msra.mxu0 %v5328
    %5535 = vmatpush.bf16.msra.mxu0 %v5325
    %5536 = vmatpush.bf16.msra.mxu0 %v5322
    %5537 = vmatmul.bf16.gmra.mxu0 %v4843
    %v5538 = vpop.f32.mrf.mxu0
    %v5539 = vadd.f32 %v5526, %v5538
    %v5540 = vpop.f32.mrf.mxu0
    %5541 = vdwg.mxu0
    %5542 = vmatpush.bf16.msra.mxu0 %v5367
    %5543 = vmatpush.bf16.msra.mxu0 %v5364
    %5544 = vmatpush.bf16.msra.mxu0 %v5361
    %5545 = vmatpush.bf16.msra.mxu0 %v5358
    %5546 = vmatpush.bf16.msra.mxu0 %v5355
    %5547 = vmatpush.bf16.msra.mxu0 %v5352
    %5548 = vmatpush.bf16.msra.mxu0 %v5349
    %5549 = vmatpush.bf16.msra.mxu0 %v5346
    %5550 = vmatmul.bf16.gmra.mxu0 %v4844
    %v5551 = vpop.f32.mrf.mxu0
    %v5552 = vadd.f32 %v5539, %v5551
    %v5553 = vpop.f32.mrf.mxu0
    %5554 = vdwg.mxu0
    %5555 = vmatpush.bf16.msra.mxu0 %v5272
    %5556 = vmatpush.bf16.msra.mxu0 %v5269
    %5557 = vmatpush.bf16.msra.mxu0 %v5266
    %5558 = vmatpush.bf16.msra.mxu0 %v5263
    %5559 = vmatpush.bf16.msra.mxu0 %v5260
    %5560 = vmatpush.bf16.msra.mxu0 %v5257
    %5561 = vmatpush.bf16.msra.mxu0 %v5254
    %5562 = vmatpush.bf16.msra.mxu0 %v5251
    %5563 = vmatmul.bf16.gmra.mxu0 %v4840
    %v5564 = vpop.f32.mrf.mxu0
    %v5565 = vadd.f32 %v4828, %v5564
    %v5566 = vpop.f32.mrf.mxu0
    %5567 = vdwg.mxu0
    %5568 = vmatpush.bf16.msra.mxu0 %v5296
    %5569 = vmatpush.bf16.msra.mxu0 %v5293
    %5570 = vmatpush.bf16.msra.mxu0 %v5290
    %5571 = vmatpush.bf16.msra.mxu0 %v5287
    %5572 = vmatpush.bf16.msra.mxu0 %v5284
    %5573 = vmatpush.bf16.msra.mxu0 %v5281
    %5574 = vmatpush.bf16.msra.mxu0 %v5278
    %5575 = vmatpush.bf16.msra.mxu0 %v5275
    %5576 = vmatmul.bf16.gmra.mxu0 %v4841
    %v5577 = vpop.f32.mrf.mxu0
    %v5578 = vadd.f32 %v5565, %v5577
    %v5579 = vpop.f32.mrf.mxu0
    %5580 = vdwg.mxu0
    %5581 = vmatpush.bf16.msra.mxu0 %v5320
    %5582 = vmatpush.bf16.msra.mxu0 %v5317
    %5583 = vmatpush.bf16.msra.mxu0 %v5314
    %5584 = vmatpush.bf16.msra.mxu0 %v5311
    %5585 = vmatpush.bf16.msra.mxu0 %v5308
    %5586 = vmatpush.bf16.msra.mxu0 %v5305
    %5587 = vmatpush.bf16.msra.mxu0 %v5302
    %5588 = vmatpush.bf16.msra.mxu0 %v5299
    %5589 = vmatmul.bf16.gmra.mxu0 %v4842
    %v5590 = vpop.f32.mrf.mxu0
    %v5591 = vadd.f32 %v5578, %v5590
    %v5592 = vpop.f32.mrf.mxu0
    %5593 = vdwg.mxu0
    %5594 = vmatpush.bf16.msra.mxu0 %v5344
    %5595 = vmatpush.bf16.msra.mxu0 %v5341
    %5596 = vmatpush.bf16.msra.mxu0 %v5338
    %5597 = vmatpush.bf16.msra.mxu0 %v5335
    %5598 = vmatpush.bf16.msra.mxu0 %v5332
    %5599 = vmatpush.bf16.msra.mxu0 %v5329
    %5600 = vmatpush.bf16.msra.mxu0 %v5326
    %5601 = vmatpush.bf16.msra.mxu0 %v5323
    %5602 = vmatmul.bf16.gmra.mxu0 %v4843
    %v5603 = vpop.f32.mrf.mxu0
    %v5604 = vadd.f32 %v5591, %v5603
    %v5605 = vpop.f32.mrf.mxu0
    %5606 = vdwg.mxu0
    %5607 = vmatpush.bf16.msra.mxu0 %v5368
    %5608 = vmatpush.bf16.msra.mxu0 %v5365
    %5609 = vmatpush.bf16.msra.mxu0 %v5362
    %5610 = vmatpush.bf16.msra.mxu0 %v5359
    %5611 = vmatpush.bf16.msra.mxu0 %v5356
    %5612 = vmatpush.bf16.msra.mxu0 %v5353
    %5613 = vmatpush.bf16.msra.mxu0 %v5350
    %5614 = vmatpush.bf16.msra.mxu0 %v5347
    %5615 = vmatmul.bf16.gmra.mxu0 %v4844
    %v5616 = vpop.f32.mrf.mxu0
    %v5617 = vadd.f32 %v5604, %v5616
    %v5618 = vpop.f32.mrf.mxu0
    %5619 = vdwg.mxu0
    %5620 = vmatpush.bf16.msra.mxu0 %v5273
    %5621 = vmatpush.bf16.msra.mxu0 %v5270
    %5622 = vmatpush.bf16.msra.mxu0 %v5267
    %5623 = vmatpush.bf16.msra.mxu0 %v5264
    %5624 = vmatpush.bf16.msra.mxu0 %v5261
    %5625 = vmatpush.bf16.msra.mxu0 %v5258
    %5626 = vmatpush.bf16.msra.mxu0 %v5255
    %5627 = vmatpush.bf16.msra.mxu0 %v5252
    %5628 = vmatmul.bf16.gmra.mxu0 %v4840
    %v5629 = vpop.f32.mrf.mxu0
    %v5630 = vadd.f32 %v4829, %v5629
    %v5631 = vpop.f32.mrf.mxu0
    %5632 = vdwg.mxu0
    %5633 = vmatpush.bf16.msra.mxu0 %v5297
    %5634 = vmatpush.bf16.msra.mxu0 %v5294
    %5635 = vmatpush.bf16.msra.mxu0 %v5291
    %5636 = vmatpush.bf16.msra.mxu0 %v5288
    %5637 = vmatpush.bf16.msra.mxu0 %v5285
    %5638 = vmatpush.bf16.msra.mxu0 %v5282
    %5639 = vmatpush.bf16.msra.mxu0 %v5279
    %5640 = vmatpush.bf16.msra.mxu0 %v5276
    %5641 = vmatmul.bf16.gmra.mxu0 %v4841
    %v5642 = vpop.f32.mrf.mxu0
    %v5643 = vadd.f32 %v5630, %v5642
    %v5644 = vpop.f32.mrf.mxu0
    %5645 = vdwg.mxu0
    %5646 = vmatpush.bf16.msra.mxu0 %v5321
    %5647 = vmatpush.bf16.msra.mxu0 %v5318
    %5648 = vmatpush.bf16.msra.mxu0 %v5315
    %5649 = vmatpush.bf16.msra.mxu0 %v5312
    %5650 = vmatpush.bf16.msra.mxu0 %v5309
    %5651 = vmatpush.bf16.msra.mxu0 %v5306
    %5652 = vmatpush.bf16.msra.mxu0 %v5303
    %5653 = vmatpush.bf16.msra.mxu0 %v5300
    %5654 = vmatmul.bf16.gmra.mxu0 %v4842
    %v5655 = vpop.f32.mrf.mxu0
    %v5656 = vadd.f32 %v5643, %v5655
    %v5657 = vpop.f32.mrf.mxu0
    %5658 = vdwg.mxu0
    %5659 = vmatpush.bf16.msra.mxu0 %v5345
    %5660 = vmatpush.bf16.msra.mxu0 %v5342
    %5661 = vmatpush.bf16.msra.mxu0 %v5339
    %5662 = vmatpush.bf16.msra.mxu0 %v5336
    %5663 = vmatpush.bf16.msra.mxu0 %v5333
    %5664 = vmatpush.bf16.msra.mxu0 %v5330
    %5665 = vmatpush.bf16.msra.mxu0 %v5327
    %5666 = vmatpush.bf16.msra.mxu0 %v5324
    %5667 = vmatmul.bf16.gmra.mxu0 %v4843
    %v5668 = vpop.f32.mrf.mxu0
    %v5669 = vadd.f32 %v5656, %v5668
    %v5670 = vpop.f32.mrf.mxu0
    %5671 = vdwg.mxu0
    %5672 = vmatpush.bf16.msra.mxu0 %v5369
    %5673 = vmatpush.bf16.msra.mxu0 %v5366
    %5674 = vmatpush.bf16.msra.mxu0 %v5363
    %5675 = vmatpush.bf16.msra.mxu0 %v5360
    %5676 = vmatpush.bf16.msra.mxu0 %v5357
    %5677 = vmatpush.bf16.msra.mxu0 %v5354
    %5678 = vmatpush.bf16.msra.mxu0 %v5351
    %5679 = vmatpush.bf16.msra.mxu0 %v5348
    %5680 = vmatmul.bf16.gmra.mxu0 %v4844
    %v5681 = vpop.f32.mrf.mxu0
    %v5682 = vadd.f32 %v5669, %v5681
    %v5683 = vpop.f32.mrf.mxu0
    %5684 = vdwg.mxu0
    %vm5685 = vcmp.gt.f32.partialorder %v5552, 0.0
    %vm5686 = vcmp.gt.f32.partialorder %v5617, 0.0
    %vm5687 = vcmp.gt.f32.partialorder %v5682, 0.0
    %v5688 = vmul.f32 %v5552, 0.01
    %v5689 = vmul.f32 %v5617, 0.01
    %v5690 = vmul.f32 %v5682, 0.01
    %v5691 = vsel %vm5685, %v5552, %v5688
    %v5692 = vsel %vm5686, %v5617, %v5689
    %v5693 = vsel %vm5687, %v5682, %v5690
    %v5694 = vpack.c.bf16 %v5691, %v5691
    %v5695 = vpack.c.bf16 %v5692, %v5692
    %v5696 = vpack.c.bf16 %v5693, %v5693
    %v5697 = vld [vmem:[%s11] sm:$0xff]
    %v5698 = vld [vmem:[%s11 + $0x8] sm:$0xff]
    %v5699 = vld [vmem:[%s11 + $0x10] sm:$0xff]
    %v5700 = vld [vmem:[%s11 + $0x18] sm:$0xff]
    %v5701 = vld [vmem:[%s11 + $0x20] sm:$0xff]
    %v5702 = vld [vmem:[%s11 + $0x28] sm:$0xff]
    %v5703 = vld [vmem:[%s11 + $0x30] sm:$0xff]
    %v5704 = vld [vmem:[%s11 + $0x38] sm:$0xff]
    %v5705 = vld [vmem:[%s11 + $0x40] sm:$0xff]
    %v5706 = vld [vmem:[%s11 + $0x48] sm:$0xff]
    %v5707 = vld [vmem:[%s11 + $0x50] sm:$0xff]
    %v5708 = vld [vmem:[%s11 + $0x58] sm:$0xff]
    %v5709 = vld [vmem:[%s11 + $0x60] sm:$0xff]
    %v5710 = vld [vmem:[%s11 + $0x68] sm:$0xff]
    %v5711 = vld [vmem:[%s11 + $0x70] sm:$0xff]
    %v5712 = vld [vmem:[%s11 + $0x78] sm:$0xff]
    %v5713 = vld [vmem:[%s11 + $0x80] sm:$0xff]
    %v5714 = vld [vmem:[%s11 + $0x88] sm:$0xff]
    %v5715 = vld [vmem:[%s11 + $0x90] sm:$0xff]
    %v5716 = vld [vmem:[%s11 + $0x98] sm:$0xff]
    %v5717 = vld [vmem:[%s11 + $0xa0] sm:$0xff]
    %v5718 = vld [vmem:[%s11 + $0xa8] sm:$0xff]
    %v5719 = vld [vmem:[%s11 + $0xb0] sm:$0xff]
    %v5720 = vld [vmem:[%s11 + $0xb8] sm:$0xff]
    %v5721 = vld [vmem:[%s11 + $0xc0] sm:$0xff]
    %v5722 = vld [vmem:[%s11 + $0xc8] sm:$0xff]
    %v5723 = vld [vmem:[%s11 + $0xd0] sm:$0xff]
    %v5724 = vld [vmem:[%s11 + $0xd8] sm:$0xff]
    %v5725 = vld [vmem:[%s11 + $0xe0] sm:$0xff]
    %v5726 = vld [vmem:[%s11 + $0xe8] sm:$0xff]
    %v5727 = vld [vmem:[%s11 + $0xf0] sm:$0xff]
    %v5728 = vld [vmem:[%s11 + $0xf8] sm:$0xff]
    %v5729 = vld [vmem:[%s11 + $0x100] sm:$0xff]
    %v5730 = vld [vmem:[%s11 + $0x108] sm:$0xff]
    %v5731 = vld [vmem:[%s11 + $0x110] sm:$0xff]
    %v5732 = vld [vmem:[%s11 + $0x118] sm:$0xff]
    %v5733 = vld [vmem:[%s11 + $0x120] sm:$0xff]
    %v5734 = vld [vmem:[%s11 + $0x128] sm:$0xff]
    %v5735 = vld [vmem:[%s11 + $0x130] sm:$0xff]
    %v5736 = vld [vmem:[%s11 + $0x138] sm:$0xff]
    %v5737 = vld [vmem:[%s12] sm:$0x3]
    %v5739 = vperm.slane %v5737, 0
    %v5740 = vperm.slane %v5737, 1
    %v5783 = vunpack.c.l.b16 %v5697
    %v5784 = vunpack.c.h.b16 %v5697
    %v5785 = vunpack.c.l.b16 %v5698
    %v5786 = vunpack.c.h.b16 %v5698
    %v5787 = vunpack.c.l.b16 %v5699
    %v5788 = vunpack.c.h.b16 %v5699
    %v5789 = vunpack.c.l.b16 %v5700
    %v5790 = vunpack.c.h.b16 %v5700
    %v5791 = vunpack.c.l.b16 %v5701
    %v5792 = vunpack.c.h.b16 %v5701
    %v5793 = vunpack.c.l.b16 %v5702
    %v5794 = vunpack.c.h.b16 %v5702
    %v5795 = vunpack.c.l.b16 %v5703
    %v5796 = vunpack.c.h.b16 %v5703
    %v5797 = vunpack.c.l.b16 %v5704
    %v5798 = vunpack.c.h.b16 %v5704
    %v5799 = vunpack.c.l.b16 %v5705
    %v5800 = vunpack.c.h.b16 %v5705
    %v5801 = vunpack.c.l.b16 %v5706
    %v5802 = vunpack.c.h.b16 %v5706
    %v5803 = vunpack.c.l.b16 %v5707
    %v5804 = vunpack.c.h.b16 %v5707
    %v5805 = vunpack.c.l.b16 %v5708
    %v5806 = vunpack.c.h.b16 %v5708
    %v5807 = vunpack.c.l.b16 %v5709
    %v5808 = vunpack.c.h.b16 %v5709
    %v5809 = vunpack.c.l.b16 %v5710
    %v5810 = vunpack.c.h.b16 %v5710
    %v5811 = vunpack.c.l.b16 %v5711
    %v5812 = vunpack.c.h.b16 %v5711
    %v5813 = vunpack.c.l.b16 %v5712
    %v5814 = vunpack.c.h.b16 %v5712
    %v5815 = vunpack.c.l.b16 %v5713
    %v5816 = vunpack.c.h.b16 %v5713
    %v5817 = vunpack.c.l.b16 %v5714
    %v5818 = vunpack.c.h.b16 %v5714
    %v5819 = vunpack.c.l.b16 %v5715
    %v5820 = vunpack.c.h.b16 %v5715
    %v5821 = vunpack.c.l.b16 %v5716
    %v5822 = vunpack.c.h.b16 %v5716
    %v5823 = vunpack.c.l.b16 %v5717
    %v5824 = vunpack.c.h.b16 %v5717
    %v5825 = vunpack.c.l.b16 %v5718
    %v5826 = vunpack.c.h.b16 %v5718
    %v5827 = vunpack.c.l.b16 %v5719
    %v5828 = vunpack.c.h.b16 %v5719
    %v5829 = vunpack.c.l.b16 %v5720
    %v5830 = vunpack.c.h.b16 %v5720
    %v5831 = vunpack.c.l.b16 %v5721
    %v5832 = vunpack.c.h.b16 %v5721
    %v5833 = vunpack.c.l.b16 %v5722
    %v5834 = vunpack.c.h.b16 %v5722
    %v5835 = vunpack.c.l.b16 %v5723
    %v5836 = vunpack.c.h.b16 %v5723
    %v5837 = vunpack.c.l.b16 %v5724
    %v5838 = vunpack.c.h.b16 %v5724
    %v5839 = vunpack.c.l.b16 %v5725
    %v5840 = vunpack.c.h.b16 %v5725
    %v5841 = vunpack.c.l.b16 %v5726
    %v5842 = vunpack.c.h.b16 %v5726
    %v5843 = vunpack.c.l.b16 %v5727
    %v5844 = vunpack.c.h.b16 %v5727
    %v5845 = vunpack.c.l.b16 %v5728
    %v5846 = vunpack.c.h.b16 %v5728
    %v5847 = vunpack.c.l.b16 %v5729
    %v5848 = vunpack.c.h.b16 %v5729
    %v5849 = vunpack.c.l.b16 %v5730
    %v5850 = vunpack.c.h.b16 %v5730
    %v5851 = vunpack.c.l.b16 %v5731
    %v5852 = vunpack.c.h.b16 %v5731
    %v5853 = vunpack.c.l.b16 %v5732
    %v5854 = vunpack.c.h.b16 %v5732
    %v5855 = vunpack.c.l.b16 %v5733
    %v5856 = vunpack.c.h.b16 %v5733
    %v5857 = vunpack.c.l.b16 %v5734
    %v5858 = vunpack.c.h.b16 %v5734
    %v5859 = vunpack.c.l.b16 %v5735
    %v5860 = vunpack.c.h.b16 %v5735
    %v5861 = vunpack.c.l.b16 %v5736
    %v5862 = vunpack.c.h.b16 %v5736
    %v5863 = vpack.c.b16 %v5785, %v5783
    %v5864 = vpack.c.b16 %v5786, %v5784
    %v5865 = vpack.c.b16 %v5789, %v5787
    %v5866 = vpack.c.b16 %v5790, %v5788
    %v5867 = vpack.c.b16 %v5793, %v5791
    %v5868 = vpack.c.b16 %v5794, %v5792
    %v5869 = vpack.c.b16 %v5797, %v5795
    %v5870 = vpack.c.b16 %v5798, %v5796
    %v5871 = vpack.c.b16 %v5801, %v5799
    %v5872 = vpack.c.b16 %v5802, %v5800
    %v5873 = vpack.c.b16 %v5805, %v5803
    %v5874 = vpack.c.b16 %v5806, %v5804
    %v5875 = vpack.c.b16 %v5809, %v5807
    %v5876 = vpack.c.b16 %v5810, %v5808
    %v5877 = vpack.c.b16 %v5813, %v5811
    %v5878 = vpack.c.b16 %v5814, %v5812
    %v5879 = vpack.c.b16 %v5817, %v5815
    %v5880 = vpack.c.b16 %v5818, %v5816
    %v5881 = vpack.c.b16 %v5821, %v5819
    %v5882 = vpack.c.b16 %v5822, %v5820
    %v5883 = vpack.c.b16 %v5825, %v5823
    %v5884 = vpack.c.b16 %v5826, %v5824
    %v5885 = vpack.c.b16 %v5829, %v5827
    %v5886 = vpack.c.b16 %v5830, %v5828
    %v5887 = vpack.c.b16 %v5833, %v5831
    %v5888 = vpack.c.b16 %v5834, %v5832
    %v5889 = vpack.c.b16 %v5837, %v5835
    %v5890 = vpack.c.b16 %v5838, %v5836
    %v5891 = vpack.c.b16 %v5841, %v5839
    %v5892 = vpack.c.b16 %v5842, %v5840
    %v5893 = vpack.c.b16 %v5845, %v5843
    %v5894 = vpack.c.b16 %v5846, %v5844
    %v5895 = vpack.c.b16 %v5849, %v5847
    %v5896 = vpack.c.b16 %v5850, %v5848
    %v5897 = vpack.c.b16 %v5853, %v5851
    %v5898 = vpack.c.b16 %v5854, %v5852
    %v5899 = vpack.c.b16 %v5857, %v5855
    %v5900 = vpack.c.b16 %v5858, %v5856
    %v5901 = vpack.c.b16 %v5861, %v5859
    %v5902 = vpack.c.b16 %v5862, %v5860
    %v5944 = vsel %vm4461, %v5696, 0
    %5946 = vmatpush.bf16.msra.mxu0 %v5877
    %5947 = vmatpush.bf16.msra.mxu0 %v5875
    %5948 = vmatpush.bf16.msra.mxu0 %v5873
    %5949 = vmatpush.bf16.msra.mxu0 %v5871
    %5950 = vmatpush.bf16.msra.mxu0 %v5869
    %5951 = vmatpush.bf16.msra.mxu0 %v5867
    %5952 = vmatpush.bf16.msra.mxu0 %v5865
    %5953 = vmatpush.bf16.msra.mxu0 %v5863
    %5954 = vmatmul.bf16.gmra.mxu0 %v5694
    %v5955 = vpop.f32.mrf.mxu0
    %v5956 = vadd.f32 %v5739, %v5955
    %v5957 = vpop.f32.mrf.mxu0
    %5958 = vdwg.mxu0
    %5959 = vmatpush.bf16.msra.mxu0 %v5893
    %5960 = vmatpush.bf16.msra.mxu0 %v5891
    %5961 = vmatpush.bf16.msra.mxu0 %v5889
    %5962 = vmatpush.bf16.msra.mxu0 %v5887
    %5963 = vmatpush.bf16.msra.mxu0 %v5885
    %5964 = vmatpush.bf16.msra.mxu0 %v5883
    %5965 = vmatpush.bf16.msra.mxu0 %v5881
    %5966 = vmatpush.bf16.msra.mxu0 %v5879
    %5967 = vmatmul.bf16.gmra.mxu0 %v5695
    %v5968 = vpop.f32.mrf.mxu0
    %v5969 = vadd.f32 %v5956, %v5968
    %v5970 = vpop.f32.mrf.mxu0
    %5971 = vdwg.mxu0
    %5972 = vmatpush.bf16.msra.mxu0 0
    %5973 = vmatpush.bf16.msra.mxu0 0
    %5974 = vmatpush.bf16.msra.mxu0 0
    %5975 = vmatpush.bf16.msra.mxu0 0
    %5976 = vmatpush.bf16.msra.mxu0 %v5901
    %5977 = vmatpush.bf16.msra.mxu0 %v5899
    %5978 = vmatpush.bf16.msra.mxu0 %v5897
    %5979 = vmatpush.bf16.msra.mxu0 %v5895
    %5980 = vmatmul.bf16.gmra.mxu0 %v5944
    %v5981 = vpop.f32.mrf.mxu0
    %v5982 = vadd.f32 %v5969, %v5981
    %v5983 = vpop.f32.mrf.mxu0
    %5984 = vdwg.mxu0
    %5985 = vmatpush.bf16.msra.mxu0 %v5878
    %5986 = vmatpush.bf16.msra.mxu0 %v5876
    %5987 = vmatpush.bf16.msra.mxu0 %v5874
    %5988 = vmatpush.bf16.msra.mxu0 %v5872
    %5989 = vmatpush.bf16.msra.mxu0 %v5870
    %5990 = vmatpush.bf16.msra.mxu0 %v5868
    %5991 = vmatpush.bf16.msra.mxu0 %v5866
    %5992 = vmatpush.bf16.msra.mxu0 %v5864
    %5993 = vmatmul.bf16.gmra.mxu0 %v5694
    %v5994 = vpop.f32.mrf.mxu0
    %v5995 = vadd.f32 %v5740, %v5994
    %v5996 = vpop.f32.mrf.mxu0
    %5997 = vdwg.mxu0
    %5998 = vmatpush.bf16.msra.mxu0 %v5894
    %5999 = vmatpush.bf16.msra.mxu0 %v5892
    %6000 = vmatpush.bf16.msra.mxu0 %v5890
    %6001 = vmatpush.bf16.msra.mxu0 %v5888
    %6002 = vmatpush.bf16.msra.mxu0 %v5886
    %6003 = vmatpush.bf16.msra.mxu0 %v5884
    %6004 = vmatpush.bf16.msra.mxu0 %v5882
    %6005 = vmatpush.bf16.msra.mxu0 %v5880
    %6006 = vmatmul.bf16.gmra.mxu0 %v5695
    %v6007 = vpop.f32.mrf.mxu0
    %v6008 = vadd.f32 %v5995, %v6007
    %v6009 = vpop.f32.mrf.mxu0
    %6010 = vdwg.mxu0
    %6011 = vmatpush.bf16.msra.mxu0 0
    %6012 = vmatpush.bf16.msra.mxu0 0
    %6013 = vmatpush.bf16.msra.mxu0 0
    %6014 = vmatpush.bf16.msra.mxu0 0
    %6015 = vmatpush.bf16.msra.mxu0 %v5902
    %6016 = vmatpush.bf16.msra.mxu0 %v5900
    %6017 = vmatpush.bf16.msra.mxu0 %v5898
    %6018 = vmatpush.bf16.msra.mxu0 %v5896
    %6019 = vmatmul.bf16.gmra.mxu0 %v5944
    %v6020 = vpop.f32.mrf.mxu0
    %v6021 = vadd.f32 %v6008, %v6020
    %v6022 = vpop.f32.mrf.mxu0
    %6023 = vdwg.mxu0
    %vm6024 = vcmp.gt.f32.partialorder %v5982, 0.0
    %vm6025 = vcmp.gt.f32.partialorder %v6021, 0.0
    %v6026 = vmul.f32 %v5982, 0.01
    %v6027 = vmul.f32 %v6021, 0.01
    %v6028 = vsel %vm6024, %v5982, %v6026
    %v6029 = vsel %vm6025, %v6021, %v6027
    %v6030 = vpack.c.bf16 %v6028, %v6028
    %v6031 = vpack.c.bf16 %v6029, %v6029
    %v6032 = vld [vmem:[%s13] sm:$0xf]
    %v6033 = vld [vmem:[%s13 + $0x4] sm:$0xf]
    %v6034 = vld [vmem:[%s13 + $0x8] sm:$0xf]
    %v6035 = vld [vmem:[%s13 + $0xc] sm:$0xf]
    %v6036 = vld [vmem:[%s13 + $0x10] sm:$0xf]
    %v6037 = vld [vmem:[%s13 + $0x14] sm:$0xf]
    %v6038 = vld [vmem:[%s13 + $0x18] sm:$0xf]
    %v6039 = vld [vmem:[%s13 + $0x1c] sm:$0xf]
    %v6040 = vld [vmem:[%s13 + $0x20] sm:$0xf]
    %v6041 = vld [vmem:[%s13 + $0x24] sm:$0xf]
    %v6042 = vld [vmem:[%s13 + $0x28] sm:$0xf]
    %v6043 = vld [vmem:[%s13 + $0x2c] sm:$0xf]
    %v6044 = vld [vmem:[%s13 + $0x30] sm:$0xf]
    %v6045 = vld [vmem:[%s13 + $0x34] sm:$0xf]
    %v6046 = vld [vmem:[%s13 + $0x38] sm:$0xf]
    %v6047 = vld [vmem:[%s13 + $0x3c] sm:$0xf]
    %v6048 = vld [vmem:[%s13 + $0x40] sm:$0xf]
    %v6049 = vld [vmem:[%s13 + $0x44] sm:$0xf]
    %v6050 = vld [vmem:[%s13 + $0x48] sm:$0xf]
    %v6051 = vld [vmem:[%s13 + $0x4c] sm:$0xf]
    %v6052 = vld [vmem:[%s14] sm:$0x1]
    %v6054 = vperm.slane %v6052, 0
    %v6076 = vunpack.c.l.b16 %v6032
    %v6077 = vunpack.c.l.b16 %v6033
    %v6078 = vunpack.c.l.b16 %v6034
    %v6079 = vunpack.c.l.b16 %v6035
    %v6080 = vunpack.c.l.b16 %v6036
    %v6081 = vunpack.c.l.b16 %v6037
    %v6082 = vunpack.c.l.b16 %v6038
    %v6083 = vunpack.c.l.b16 %v6039
    %v6084 = vunpack.c.l.b16 %v6040
    %v6085 = vunpack.c.l.b16 %v6041
    %v6086 = vunpack.c.l.b16 %v6042
    %v6087 = vunpack.c.l.b16 %v6043
    %v6088 = vunpack.c.l.b16 %v6044
    %v6089 = vunpack.c.l.b16 %v6045
    %v6090 = vunpack.c.l.b16 %v6046
    %v6091 = vunpack.c.l.b16 %v6047
    %v6092 = vunpack.c.l.b16 %v6048
    %v6093 = vunpack.c.l.b16 %v6049
    %v6094 = vunpack.c.l.b16 %v6050
    %v6095 = vunpack.c.l.b16 %v6051
    %v6096 = vpack.c.b16 %v6077, %v6076
    %v6097 = vpack.c.b16 %v6079, %v6078
    %v6098 = vpack.c.b16 %v6081, %v6080
    %v6099 = vpack.c.b16 %v6083, %v6082
    %v6100 = vpack.c.b16 %v6085, %v6084
    %v6101 = vpack.c.b16 %v6087, %v6086
    %v6102 = vpack.c.b16 %v6089, %v6088
    %v6103 = vpack.c.b16 %v6091, %v6090
    %v6104 = vpack.c.b16 %v6093, %v6092
    %v6105 = vpack.c.b16 %v6095, %v6094
    %v6117 = vsel %vm4635, %v6031, 0
    %6119 = vmatpush.bf16.msra.mxu0 %v6103
    %6120 = vmatpush.bf16.msra.mxu0 %v6102
    %6121 = vmatpush.bf16.msra.mxu0 %v6101
    %6122 = vmatpush.bf16.msra.mxu0 %v6100
    %6123 = vmatpush.bf16.msra.mxu0 %v6099
    %6124 = vmatpush.bf16.msra.mxu0 %v6098
    %6125 = vmatpush.bf16.msra.mxu0 %v6097
    %6126 = vmatpush.bf16.msra.mxu0 %v6096
    %6127 = vmatmul.bf16.gmra.mxu0 %v6030
    %v6128 = vpop.f32.mrf.mxu0
    %v6129 = vadd.f32 %v6054, %v6128
    %v6130 = vpop.f32.mrf.mxu0
    %6131 = vdwg.mxu0
    %6132 = vmatpush.bf16.msra.mxu0 0
    %6133 = vmatpush.bf16.msra.mxu0 0
    %6134 = vmatpush.bf16.msra.mxu0 0
    %6135 = vmatpush.bf16.msra.mxu0 0
    %6136 = vmatpush.bf16.msra.mxu0 0
    %6137 = vmatpush.bf16.msra.mxu0 0
    %6138 = vmatpush.bf16.msra.mxu0 %v6105
    %6139 = vmatpush.bf16.msra.mxu0 %v6104
    %6140 = vmatmul.bf16.gmra.mxu0 %v6117
    %v6141 = vpop.f32.mrf.mxu0
    %v6142 = vadd.f32 %v6129, %v6141
    %v6143 = vpop.f32.mrf.mxu0
    %6144 = vdwg.mxu0
    %v6145 = vadd.f32 %v4662, %v6142
    %6146 = vst [vmem:[#allocation2] sm:$0xff] %v6145
    // Predicated region
    $region62: #{tpu_custom_call.1} parent=1 // pred_check
      _
    $region63: #{tpu_custom_call.1} parent=1 // pred_check_branch
      %6148 = sbr.rel (0) target = $region65
    $region64: #{tpu_custom_call.1} parent=1 // pred_region
      %6150 = vsyncadd [#allocation3], 0
      %s6152 = sshll.u32 [#allocation2], 4
      %s6153 = int_to_ptr.vmem [resolvable:$true] %s6152
      %s6154 = sshll.u32 %s15, 4
      %s6155 = int_to_ptr.hbm [resolvable:$true] %s6154
      %6157 = dma.vmem_to_hbm [thread:$0]  %s6153, 128, %s6155, [#allocation3]
    $region65: #{tpu_custom_call.1} parent=1 // pred_fallthru
      _
    // Predicated region
    $region66: #{tpu_custom_call.1} parent=1 // pred_check
      _
    $region67: #{tpu_custom_call.1} parent=1 // pred_check_branch
      %6159 = sbr.rel (0) target = $region69
    $region68: #{tpu_custom_call.1} parent=1 // pred_region
      %6161 = dma.done [#allocation3], 128
    $region69: #{tpu_custom_call.1} parent=1 // pred_fallthru
      _
    %6162 = vsyncpa [#allocation3], 1

</llo_original>
